<compile_context>
chip_gen: v7x
topology: tpu7x:2x2x1
jax: 0.10.0
libtpu: 0.0.40
codegen_flags: <defaults>
</compile_context>

<pallas_src>
import numpy as np

import jax
import jax.numpy as jnp
from jax import lax
from jax.experimental import pallas as pl
from jax.experimental.pallas import tpu as pltpu


# ----------------------------------------------------------------------------
# helpers
# ----------------------------------------------------------------------------
def _round_up(x, m):
    return ((x + m - 1) // m) * m


def _vmem_budget():
    """Scoped-VMEM budget derived from the chip (falls back to a safe 48 MiB)."""
    try:
        cap = int(pltpu.get_tpu_info().vmem_capacity_bytes)
    except Exception:
        cap = 64 * 1024 * 1024
    return min((cap * 3) // 4, 100 * 1024 * 1024)


def _row_tile_candidates(h, cap, mult8):
    """Divisors of h (<= cap), largest first; optionally restricted to
    multiples of 8 (or the full extent) for blocks whose 2nd-minor dim is t_h."""
    cands = [d for d in range(min(h, cap), 0, -1) if h % d == 0]
    if mult8:
        c8 = [d for d in cands if d % 8 == 0 or d == h]
        cands = c8 if c8 else [h]
    return cands if cands else [h]


def _vmem_estimate(t_h, w, cins, co_pad):
    """Rough per-step VMEM footprint (bytes) for tile-size selection."""
    ci_sum = sum(cins)
    m = t_h * w
    b = 0
    b += 2 * 2 * t_h * w * ci_sum            # center blocks (bf16, double buffered)
    b += 2 * 2 * 2 * w * ci_sum              # top+bottom halo rows
    b += (t_h + 2) * (w + 2) * ci_sum * 2    # assembled halo scratch (bf16)
    b += m * co_pad * 4                      # f32 accumulator scratch
    b += 2 * 2 * 9 * ci_sum * co_pad         # resident weights (bf16, x2 buffers)
    b += 2 * 2 * m * co_pad                  # output block (x2 buffers)
    b += 4 * 2 * m * max(cins)               # live tap-operand temps (rough)
    return b


# ----------------------------------------------------------------------------
# Pallas kernel factory: 3x3 conv (+bias, +ReLU) over >=1 fused inputs
# (the UNet skip-concat), optional fused 1x1 epilogue (the UNet16 `final`).
# ----------------------------------------------------------------------------
def _make_conv_kernel(n_in, cins, t_h, w_out, n_h, relu, cout, n_cls):
    K = 3
    fuse_final = n_cls is not None

    def kernel(*refs):
        p = 0
        mids = refs[p:p + n_in]; p += n_in      # (1, t_h, W, ci)   center rows
        tops = refs[p:p + n_in]; p += n_in      # (1, 1,  W, ci)    row above tile
        bots = refs[p:p + n_in]; p += n_in      # (1, 1,  W, ci)    row below tile
        ws = refs[p:p + n_in]; p += n_in        # (9*ci, co_pad)    bf16, resident
        b_ref = refs[p]; p += 1                 # (1, co_pad)       f32, resident
        if fuse_final:
            wf_ref = refs[p]; bf_ref = refs[p + 1]; p += 2
        o_ref = refs[p]; p += 1
        halos = refs[p:p + n_in]; p += n_in     # VMEM scratch (t_h+2, W+2, ci)
        acc_ref = refs[p]                       # VMEM scratch (t_h*W, co_pad) f32

        i = pl.program_id(1)
        acc_ref[...] = jnp.zeros_like(acc_ref)

        for mid, top, bot, w_ref, x_s, ci in zip(mids, tops, bots, ws, halos, cins):
            # ---- assemble the zero-padded halo tile in VMEM ------------------
            zero_col = jnp.zeros((t_h + 2, 1, ci), jnp.bfloat16)
            zero_row = jnp.zeros((1, w_out, ci), jnp.bfloat16)
            x_s[:, 0:1, :] = zero_col
            x_s[:, w_out + 1:w_out + 2, :] = zero_col
            x_s[1:t_h + 1, 1:w_out + 1, :] = mid[0]

            @pl.when(i > 0)
            def _():
                x_s[0:1, 1:w_out + 1, :] = top[0]

            @pl.when(i == 0)
            def _():
                x_s[0:1, 1:w_out + 1, :] = zero_row

            @pl.when(i < n_h - 1)
            def _():
                x_s[t_h + 1:t_h + 2, 1:w_out + 1, :] = bot[0]

            @pl.when(i == n_h - 1)
            def _():
                x_s[t_h + 1:t_h + 2, 1:w_out + 1, :] = zero_row

            # ---- 9 taps, bf16 MXU matmuls accumulated in f32 -----------------
            # TODO(synk): fold taps into the contraction for small ci (MXU depth).
            for dy in range(K):
                for dx in range(K):
                    a = x_s[dy:dy + t_h, dx:dx + w_out, :].reshape(t_h * w_out, ci)
                    wk = w_ref[(dy * K + dx) * ci:(dy * K + dx + 1) * ci, :]
                    acc_ref[...] += jnp.dot(a, wk, preferred_element_type=jnp.float32)

        y = acc_ref[...] + b_ref[...]
        if relu:
            y = jnp.maximum(y, 0.0)

        if fuse_final and n_cls == 1:
            # final 1x1 conv as a VPU channel reduction -> lane-dense (t_h, W) store
            co_pad = acc_ref.shape[-1]
            y3 = y.reshape(t_h, w_out, co_pad)
            yf = jnp.sum(y3 * wf_ref[...], axis=-1) + bf_ref[...]
            o_ref[0] = yf
        elif fuse_final:
            yf = jnp.dot(y.astype(jnp.bfloat16), wf_ref[...],
                         preferred_element_type=jnp.float32) + bf_ref[...]
            o_ref[0] = yf.reshape(t_h, w_out, n_cls)
        else:
            o_ref[0] = y[:, :cout].reshape(t_h, w_out, cout).astype(o_ref.dtype)

    return kernel


def conv_pallas(xs, w, b, *, relu=True, final_wb=None, out_dtype=jnp.bfloat16):
    """Stride-1 3x3 conv + bias (+ReLU) over the channel-concat of `xs`.

    xs: list of NHWC arrays with identical (N, H, W); channel counts sum to
        w.shape[2] (fuses the UNet skip-connection concat into the conv).
    w: (3, 3, Cin_total, Cout), b: (Cout,)
    final_wb: optional (wf: (Cout, n_cls), bf: (n_cls,)) fused 1x1 epilogue;
        when given, the result is returned in NCHW layout (N, n_cls, H, W).
    """
    K = int(w.shape[0])
    assert K == 3, "conv_pallas implements 3x3 convs only"
    N, H, W, _ = (int(s) for s in xs[0].shape)
    cins = [int(x.shape[-1]) for x in xs]
    assert sum(cins) == int(w.shape[2])
    Cout = int(w.shape[-1])
    co_pad = _round_up(Cout, 128)               # MXU-friendly lane width
    fuse_final = final_wb is not None
    n_cls = int(final_wb[0].shape[-1]) if fuse_final else None

    budget = _vmem_budget()
    cap = 32 if budget >= 80 * 1024 * 1024 else 16
    need8 = fuse_final and n_cls == 1           # final out block has t_h as 2nd-minor dim
    cands = _row_tile_candidates(H, cap, need8)
    t_h = cands[-1]
    for d in cands:
        if _vmem_estimate(d, W, cins, co_pad) <= 0.6 * budget:
            t_h = d
            break
    n_h = H // t_h

    x16 = [x.astype(jnp.bfloat16) for x in xs]

    # weights split along Cin per fused input, (9*ci, Cout) -> padded Cout
    wb16 = w.astype(jnp.bfloat16)
    w_parts, off = [], 0
    for ci in cins:
        wi = wb16[:, :, off:off + ci, :].reshape(K * K * ci, Cout)
        w_parts.append(jnp.pad(wi, ((0, 0), (0, co_pad - Cout))))
        off += ci
    b2 = jnp.pad(b.astype(jnp.float32).reshape(1, Cout), ((0, 0), (0, co_pad - Cout)))

    # activation specs: center rows + 1-row top/bottom halos of the same array
    mid_specs = [pl.BlockSpec((1, t_h, W, ci), lambda n, i: (n, i, 0, 0))
                 for ci in cins]
    top_specs = [pl.BlockSpec((1, 1, W, ci),
                              lambda n, i: (n, jnp.maximum(i * t_h - 1, 0), 0, 0))
                 for ci in cins]
    bot_specs = [pl.BlockSpec((1, 1, W, ci),
                              lambda n, i: (n, jnp.minimum(i * t_h + t_h, H - 1), 0, 0))
                 for ci in cins]
    w_specs = [pl.BlockSpec((K * K * ci, co_pad), lambda n, i: (0, 0)) for ci in cins]
    b_spec = pl.BlockSpec((1, co_pad), lambda n, i: (0, 0))

    inputs = x16 + x16 + x16 + w_parts + [b2]
    in_specs = mid_specs + top_specs + bot_specs + w_specs + [b_spec]

    if fuse_final:
        wf, bf = final_wb
        if n_cls == 1:
            wf2 = jnp.pad(wf.astype(jnp.float32).T, ((0, 0), (0, co_pad - Cout)))
            bf2 = bf.astype(jnp.float32).reshape(1, 1)
            inputs += [wf2, bf2]
            in_specs += [pl.BlockSpec((1, co_pad), lambda n, i: (0, 0)),
                         pl.BlockSpec((1, 1), lambda n, i: (0, 0))]
            out_shape = jax.ShapeDtypeStruct((N, H, W), jnp.float32)
            out_spec = pl.BlockSpec((1, t_h, W), lambda n, i: (n, i, 0))
        else:
            wf2 = jnp.pad(wf.astype(jnp.bfloat16), ((0, co_pad - Cout), (0, 0)))
            bf2 = bf.astype(jnp.float32).reshape(1, n_cls)
            inputs += [wf2, bf2]
            in_specs += [pl.BlockSpec((co_pad, n_cls), lambda n, i: (0, 0)),
                         pl.BlockSpec((1, n_cls), lambda n, i: (0, 0))]
            out_shape = jax.ShapeDtypeStruct((N, H, W, n_cls), jnp.float32)
            out_spec = pl.BlockSpec((1, t_h, W, n_cls), lambda n, i: (n, i, 0, 0))
    else:
        out_shape = jax.ShapeDtypeStruct((N, H, W, Cout), out_dtype)
        out_spec = pl.BlockSpec((1, t_h, W, Cout), lambda n, i: (n, i, 0, 0))

    scratch = [pltpu.VMEM((t_h + 2, W + 2, ci), jnp.bfloat16) for ci in cins]
    scratch += [pltpu.VMEM((t_h * W, co_pad), jnp.float32)]

    kernel = _make_conv_kernel(len(xs), cins, t_h, W, n_h, relu, Cout, n_cls)

    out = pl.pallas_call(
        kernel,
        out_shape=out_shape,
        grid_spec=pltpu.PrefetchScalarGridSpec(
            num_scalar_prefetch=0,
            grid=(N, n_h),
            in_specs=in_specs,
            out_specs=out_spec,
            scratch_shapes=scratch),
        compiler_params=pltpu.CompilerParams(
            dimension_semantics=("parallel", "parallel"),
            vmem_limit_bytes=int(budget)),
    )(*inputs)

    if fuse_final:
        if n_cls == 1:
            return out[:, None, :, :]                  # (N, 1, H, W)
        return jnp.transpose(out, (0, 3, 1, 2))        # (N, n_cls, H, W)
    return out


# ----------------------------------------------------------------------------
# Plain-JAX glue (memory-bound reshuffles, no matmul hot path)
# TODO(synk): maxpool / bilinear upsample could be fused into the adjacent
# conv kernels to save one HBM round-trip per encoder/decoder stage.
# ----------------------------------------------------------------------------
def maxpool2x2(x):  # NHWC, kernel 2 stride 2
    n, h, w, c = x.shape
    return jnp.max(x.reshape(n, h // 2, 2, w // 2, 2, c), axis=(2, 4))


def _upsample_idx(size):
    # PyTorch nn.Upsample(scale_factor=2, mode='bilinear', align_corners=False)
    o = np.arange(2 * size, dtype=np.float64)
    src = np.clip((o + 0.5) / 2.0 - 0.5, 0.0, size - 1)
    i0 = np.floor(src).astype(np.int32)
    i1 = np.minimum(i0 + 1, size - 1).astype(np.int32)
    frac = (src - i0).astype(np.float32)
    return jnp.asarray(i0), jnp.asarray(i1), jnp.asarray(frac)


def upsample_bilinear_2x(x):  # NHWC
    n, h, w, c = x.shape
    i0, i1, fh = _upsample_idx(h)
    fh = fh.astype(x.dtype)
    x = x[:, i0] * (1 - fh)[None, :, None, None] + x[:, i1] * fh[None, :, None, None]
    j0, j1, fw = _upsample_idx(w)
    fw = fw.astype(x.dtype)
    x = (x[:, :, j0] * (1 - fw)[None, None, :, None]
         + x[:, :, j1] * fw[None, None, :, None])
    return x


# ----------------------------------------------------------------------------
# Parameters (deterministic synthetic init; shapes follow UNet16.__init__)
# ----------------------------------------------------------------------------
def _init_conv(key, cin, cout, k):
    kw, kb = jax.random.split(key)
    w = jax.random.normal(kw, (k, k, cin, cout), jnp.float32) / np.sqrt(k * k * cin)
    b = 0.01 * jax.random.normal(kb, (cout,), jnp.float32)
    return w, b


def init_unet16_params(key, num_filters=32, num_classes=1):
    nf = num_filters
    specs = {
        # VGG16 `features` conv layers
        'enc0': (3, 64), 'enc2': (64, 64),
        'enc5': (64, 128), 'enc7': (128, 128),
        'enc10': (128, 256), 'enc12': (256, 256), 'enc14': (256, 256),
        'enc17': (256, 512), 'enc19': (512, 512), 'enc21': (512, 512),
        'enc24': (512, 512), 'enc26': (512, 512), 'enc28': (512, 512),
        # decoder (is_deconv=False): Upsample(2x bilinear) + ConvRelu + ConvRelu
        'center_1': (512, nf * 16), 'center_2': (nf * 16, nf * 8),
        'dec5_1': (512 + nf * 8, nf * 16), 'dec5_2': (nf * 16, nf * 8),
        'dec4_1': (512 + nf * 8, nf * 16), 'dec4_2': (nf * 16, nf * 8),
        'dec3_1': (256 + nf * 8, nf * 8), 'dec3_2': (nf * 8, nf * 2),
        'dec2_1': (128 + nf * 2, nf * 4), 'dec2_2': (nf * 4, nf),
        'dec1': (64 + nf, nf),
    }
    params = {}
    keys = jax.random.split(key, len(specs) + 1)
    for (name, (cin, cout)), k_ in zip(specs.items(), keys[:-1]):
        params[name] = _init_conv(k_, cin, cout, 3)
    params['final'] = _init_conv(keys[-1], nf, num_classes, 1)  # 1x1 conv
    return params


# ----------------------------------------------------------------------------
# Forward pass (mirrors UNet16.forward; skip-concats fused into conv kernels)
# ----------------------------------------------------------------------------
def _conv_relu(xs, p):
    return conv_pallas(xs, p[0], p[1], relu=True)


def _decoder_block(xs, p1, p2):
    xs = [upsample_bilinear_2x(x) for x in xs]   # upsample(cat) == cat(upsample)
    y = _conv_relu(xs, p1)
    return _conv_relu([y], p2)


def unet16_forward(params, x_nchw):
    x = jnp.transpose(x_nchw, (0, 2, 3, 1))      # NCHW -> NHWC
    conv1 = _conv_relu([_conv_relu([x], params['enc0'])], params['enc2'])
    conv2 = _conv_relu([_conv_relu([maxpool2x2(conv1)], params['enc5'])],
                       params['enc7'])
    conv3 = _conv_relu([_conv_relu([_conv_relu([maxpool2x2(conv2)],
                                               params['enc10'])],
                                   params['enc12'])], params['enc14'])
    conv4 = _conv_relu([_conv_relu([_conv_relu([maxpool2x2(conv3)],
                                               params['enc17'])],
                                   params['enc19'])], params['enc21'])
    conv5 = _conv_relu([_conv_relu([_conv_relu([maxpool2x2(conv4)],
                                               params['enc24'])],
                                   params['enc26'])], params['enc28'])

    center = _decoder_block([maxpool2x2(conv5)], params['center_1'], params['center_2'])
    dec5 = _decoder_block([center, conv5], params['dec5_1'], params['dec5_2'])
    dec4 = _decoder_block([dec5, conv4], params['dec4_1'], params['dec4_2'])
    dec3 = _decoder_block([dec4, conv3], params['dec3_1'], params['dec3_2'])
    dec2 = _decoder_block([dec3, conv2], params['dec2_1'], params['dec2_2'])

    # dec1 (ConvRelu) with the final 1x1 conv fused into its epilogue -> NCHW out.
    fw, fb = params['final']
    wf = fw[0, 0]                                # (nf, num_classes)
    out = conv_pallas([dec2, conv1], params['dec1'][0], params['dec1'][1],
                      relu=True, final_wb=(wf, fb))
    if int(fb.shape[0]) > 1:
        out = jax.nn.log_softmax(out, axis=1)    # channel axis (NCHW)
    return out


# ----------------------------------------------------------------------------
if __name__ == "__main__":
    key = jax.random.PRNGKey(0)
    pkey, xkey, t1, t2 = jax.random.split(key, 4)

    # --- check 1: single-input 3x3 conv + bias + ReLU vs lax.conv ------------
    k1, k2, k3 = jax.random.split(t1, 3)
    tx = jax.random.normal(k1, (2, 8, 16, 24), jnp.float32)
    tw = jax.random.normal(k2, (3, 3, 24, 40), jnp.float32) / np.sqrt(9 * 24)
    tb = 0.1 * jax.random.normal(k3, (40,), jnp.float32)
    got = conv_pallas([tx], tw, tb, relu=True, out_dtype=jnp.float32)
    txr = tx.astype(jnp.bfloat16).astype(jnp.float32)
    twr = tw.astype(jnp.bfloat16).astype(jnp.float32)
    ref = lax.conv_general_dilated(txr, twr, (1, 1), 'SAME',
                                   dimension_numbers=('NHWC', 'HWIO', 'NHWC'),
                                   precision=lax.Precision.HIGHEST)
    ref = jnp.maximum(ref + tb, 0.0)
    np.testing.assert_allclose(np.asarray(got), np.asarray(ref), rtol=2e-2, atol=2e-2)

    # --- check 2: fused 2-input conv (skip-concat) + fused 1x1 epilogue ------
    k1, k2, k3, k4, k5, k6 = jax.random.split(t2, 6)
    ta = jax.random.normal(k1, (2, 8, 16, 12), jnp.float32)
    tbx = jax.random.normal(k2, (2, 8, 16, 20), jnp.float32)
    tw2 = jax.random.normal(k3, (3, 3, 32, 24), jnp.float32) / np.sqrt(9 * 32)
    tb2 = 0.1 * jax.random.normal(k4, (24,), jnp.float32)
    wf = 0.2 * jax.random.normal(k5, (24, 3), jnp.float32)
    bfin = 0.1 * jax.random.normal(k6, (3,), jnp.float32)
    got2 = conv_pallas([ta, tbx], tw2, tb2, relu=True, final_wb=(wf, bfin))
    car = jnp.concatenate([ta, tbx], axis=-1).astype(jnp.bfloat16).astype(jnp.float32)
    tw2r = tw2.astype(jnp.bfloat16).astype(jnp.float32)
    ref2 = lax.conv_general_dilated(car, tw2r, (1, 1), 'SAME',
                                    dimension_numbers=('NHWC', 'HWIO', 'NHWC'),
                                    precision=lax.Precision.HIGHEST)
    ref2 = jnp.maximum(ref2 + tb2, 0.0).astype(jnp.bfloat16).astype(jnp.float32)
    wfr = wf.astype(jnp.bfloat16).astype(jnp.float32)
    ref2 = jnp.einsum('nhwc,cd->nhwd', ref2, wfr,
                      precision=lax.Precision.HIGHEST) + bfin
    ref2 = jnp.transpose(ref2, (0, 3, 1, 2))    # conv_pallas returns NCHW here
    np.testing.assert_allclose(np.asarray(got2), np.asarray(ref2), rtol=2e-2, atol=2e-2)

    # --- full UNet16 forward (spatial must be a multiple of 32) --------------
    params = init_unet16_params(pkey, num_filters=32, num_classes=1)
    x = jax.random.normal(xkey, (2, 3, 32, 32), jnp.float32)  # NCHW like PyTorch
    out = jax.jit(unet16_forward)(params, x)
    out = jax.block_until_ready(out)
    assert out.shape == (2, 1, 32, 32), out.shape
    assert out.dtype == jnp.float32
    print("KERNEL_OK")
</pallas_src>

<mosaic_0001>
module attributes {stable_mosaic.version = 11 : i64} {
  func.func @kernel(%arg0: i32, %arg1: i32, %arg2: memref<1x8x16x24xbf16, #tpu.memory_space<vmem>>, %arg3: memref<1x1x16x24xbf16, #tpu.memory_space<vmem>>, %arg4: memref<1x1x16x24xbf16, #tpu.memory_space<vmem>>, %arg5: memref<216x128xbf16, #tpu.memory_space<vmem>>, %arg6: memref<1x128xf32, #tpu.memory_space<vmem>>, %arg7: memref<1x8x16x40xf32, #tpu.memory_space<vmem>>, %arg8: memref<10x18x24xbf16, #tpu.memory_space<vmem>>, %arg9: memref<128x128xf32, #tpu.memory_space<vmem>>) attributes {dimension_semantics = [#tpu.dimension_semantics<parallel>, #tpu.dimension_semantics<parallel>], iteration_bounds = array<i64: 2, 1>, scalar_prefetch = 0 : i64, scratch_operands = 2 : i64, tpu.core_type = #tpu.core_type<tc>, window_params = [{transform_indices = @transform_0, window_bounds = array<i64: 1, 8, 16, 24>}, {transform_indices = @transform_1, window_bounds = array<i64: 1, 1, 16, 24>}, {transform_indices = @transform_2, window_bounds = array<i64: 1, 1, 16, 24>}, {pipeline_mode = #tpu.pipeline_mode<synchronous>, transform_indices = @transform_3, window_bounds = array<i64: 216, 128>}, {pipeline_mode = #tpu.pipeline_mode<synchronous>, transform_indices = @transform_4, window_bounds = array<i64: 1, 128>}, {transform_indices = @transform_5, window_bounds = array<i64: 1, 8, 16, 40>}]} {
    %cst = arith.constant 0.000000e+00 : f32
    %0 = vector.broadcast %cst : f32 to vector<128x128xf32>
    %c0 = arith.constant 0 : index
    %c0_0 = arith.constant 0 : index
    %1 = vector.load %arg9[%c0, %c0_0] : memref<128x128xf32, #tpu.memory_space<vmem>>, vector<128x128xf32>
    tpu.vector_store %arg9[%c0, %c0_0], %0 {strides = array<i32>} : memref<128x128xf32, #tpu.memory_space<vmem>>, vector<128x128xf32>,
    %cst_1 = arith.constant 0.000000e+00 : bf16
    %2 = vector.broadcast %cst_1 : bf16 to vector<10x1x24xbf16>
    %cst_2 = arith.constant 0.000000e+00 : bf16
    %3 = vector.broadcast %cst_2 : bf16 to vector<1x16x24xbf16>
    %c0_3 = arith.constant 0 : index
    %c0_4 = arith.constant 0 : index
    %c0_5 = arith.constant 0 : index
    %4 = vector.load %arg8[%c0_3, %c0_4, %c0_5] : memref<10x18x24xbf16, #tpu.memory_space<vmem>>, vector<10x1x24xbf16>
    tpu.vector_store %arg8[%c0_3, %c0_4, %c0_5], %2 {strides = array<i32>} : memref<10x18x24xbf16, #tpu.memory_space<vmem>>, vector<10x1x24xbf16>,
    %c0_6 = arith.constant 0 : index
    %c17 = arith.constant 17 : index
    %c0_7 = arith.constant 0 : index
    %5 = vector.load %arg8[%c0_6, %c17, %c0_7] : memref<10x18x24xbf16, #tpu.memory_space<vmem>>, vector<10x1x24xbf16>
    tpu.vector_store %arg8[%c0_6, %c17, %c0_7], %2 {strides = array<i32>} : memref<10x18x24xbf16, #tpu.memory_space<vmem>>, vector<10x1x24xbf16>,
    %c0_8 = arith.constant 0 : index
    %c0_9 = arith.constant 0 : index
    %c0_10 = arith.constant 0 : index
    %c0_11 = arith.constant 0 : index
    %6 = vector.load %arg2[%c0_8, %c0_9, %c0_10, %c0_11] : memref<1x8x16x24xbf16, #tpu.memory_space<vmem>>, vector<1x8x16x24xbf16>
    %7 = vector.shape_cast %6 : vector<1x8x16x24xbf16> to vector<8x16x24xbf16>
    %c1 = arith.constant 1 : index
    %c1_12 = arith.constant 1 : index
    %c0_13 = arith.constant 0 : index
    %8 = vector.load %arg8[%c1, %c1_12, %c0_13] : memref<10x18x24xbf16, #tpu.memory_space<vmem>>, vector<8x16x24xbf16>
    tpu.vector_store %arg8[%c1, %c1_12, %c0_13], %7 {strides = array<i32>} : memref<10x18x24xbf16, #tpu.memory_space<vmem>>, vector<8x16x24xbf16>,
    %c0_i32 = arith.constant 0 : i32
    %9 = arith.cmpi sgt, %arg1, %c0_i32 : i32
    %10 = arith.extui %9 : i1 to i32
    %c0_i32_14 = arith.constant 0 : i32
    %11 = arith.cmpi ne, %10, %c0_i32_14 : i32
    scf.if %11 {
      %c0_111 = arith.constant 0 : index
      %c0_112 = arith.constant 0 : index
      %c0_113 = arith.constant 0 : index
      %c0_114 = arith.constant 0 : index
      %95 = vector.load %arg3[%c0_111, %c0_112, %c0_113, %c0_114] : memref<1x1x16x24xbf16, #tpu.memory_space<vmem>>, vector<1x1x16x24xbf16>
      %96 = vector.shape_cast %95 : vector<1x1x16x24xbf16> to vector<1x16x24xbf16>
      %c0_115 = arith.constant 0 : index
      %c1_116 = arith.constant 1 : index
      %c0_117 = arith.constant 0 : index
      %97 = vector.load %arg8[%c0_115, %c1_116, %c0_117] : memref<10x18x24xbf16, #tpu.memory_space<vmem>>, vector<1x16x24xbf16>
      tpu.vector_store %arg8[%c0_115, %c1_116, %c0_117], %96 {strides = array<i32>} : memref<10x18x24xbf16, #tpu.memory_space<vmem>>, vector<1x16x24xbf16>,
    } else {
    }
    %c0_i32_15 = arith.constant 0 : i32
    %12 = arith.cmpi eq, %arg1, %c0_i32_15 : i32
    %13 = arith.extui %12 : i1 to i32
    %c0_i32_16 = arith.constant 0 : i32
    %14 = arith.cmpi ne, %13, %c0_i32_16 : i32
    scf.if %14 {
      %c0_111 = arith.constant 0 : index
      %c1_112 = arith.constant 1 : index
      %c0_113 = arith.constant 0 : index
      %95 = vector.load %arg8[%c0_111, %c1_112, %c0_113] : memref<10x18x24xbf16, #tpu.memory_space<vmem>>, vector<1x16x24xbf16>
      tpu.vector_store %arg8[%c0_111, %c1_112, %c0_113], %3 {strides = array<i32>} : memref<10x18x24xbf16, #tpu.memory_space<vmem>>, vector<1x16x24xbf16>,
    } else {
    }
    %c0_i32_17 = arith.constant 0 : i32
    %15 = arith.cmpi slt, %arg1, %c0_i32_17 : i32
    %16 = arith.extui %15 : i1 to i32
    %c0_i32_18 = arith.constant 0 : i32
    %17 = arith.cmpi ne, %16, %c0_i32_18 : i32
    scf.if %17 {
      %c0_111 = arith.constant 0 : index
      %c0_112 = arith.constant 0 : index
      %c0_113 = arith.constant 0 : index
      %c0_114 = arith.constant 0 : index
      %95 = vector.load %arg4[%c0_111, %c0_112, %c0_113, %c0_114] : memref<1x1x16x24xbf16, #tpu.memory_space<vmem>>, vector<1x1x16x24xbf16>
      %96 = vector.shape_cast %95 : vector<1x1x16x24xbf16> to vector<1x16x24xbf16>
      %c9 = arith.constant 9 : index
      %c1_115 = arith.constant 1 : index
      %c0_116 = arith.constant 0 : index
      %97 = vector.load %arg8[%c9, %c1_115, %c0_116] : memref<10x18x24xbf16, #tpu.memory_space<vmem>>, vector<1x16x24xbf16>
      tpu.vector_store %arg8[%c9, %c1_115, %c0_116], %96 {strides = array<i32>} : memref<10x18x24xbf16, #tpu.memory_space<vmem>>, vector<1x16x24xbf16>,
    } else {
    }
    %c0_i32_19 = arith.constant 0 : i32
    %18 = arith.cmpi eq, %arg1, %c0_i32_19 : i32
    %19 = arith.extui %18 : i1 to i32
    %c0_i32_20 = arith.constant 0 : i32
    %20 = arith.cmpi ne, %19, %c0_i32_20 : i32
    scf.if %20 {
      %c9 = arith.constant 9 : index
      %c1_111 = arith.constant 1 : index
      %c0_112 = arith.constant 0 : index
      %95 = vector.load %arg8[%c9, %c1_111, %c0_112] : memref<10x18x24xbf16, #tpu.memory_space<vmem>>, vector<1x16x24xbf16>
      tpu.vector_store %arg8[%c9, %c1_111, %c0_112], %3 {strides = array<i32>} : memref<10x18x24xbf16, #tpu.memory_space<vmem>>, vector<1x16x24xbf16>,
    } else {
    }
    %c0_21 = arith.constant 0 : index
    %c0_22 = arith.constant 0 : index
    %c0_23 = arith.constant 0 : index
    %21 = vector.load %arg8[%c0_21, %c0_22, %c0_23] : memref<10x18x24xbf16, #tpu.memory_space<vmem>>, vector<8x16x24xbf16>
    %22 = vector.shape_cast %21 : vector<8x16x24xbf16> to vector<128x24xbf16>
    %c0_24 = arith.constant 0 : index
    %c0_25 = arith.constant 0 : index
    %23 = vector.load %arg5[%c0_24, %c0_25] : memref<216x128xbf16, #tpu.memory_space<vmem>>, vector<24x128xbf16>
    %c0_26 = arith.constant 0 : index
    %c0_27 = arith.constant 0 : index
    %24 = vector.load %arg9[%c0_26, %c0_27] : memref<128x128xf32, #tpu.memory_space<vmem>>, vector<128x128xf32>
    %cst_28 = arith.constant dense<0.000000e+00> : vector<128x128xf32>
    %25 = tpu.matmul %22, %23, %cst_28 {dimension_numbers = #tpu.dot_dimension_numbers<[1], [0], [0], [1], [0, 0, 1, 1], [], []>} : vector<128x24xbf16>, vector<24x128xbf16>, vector<128x128xf32> -> vector<128x128xf32>
    %26 = arith.addf %24, %25 : vector<128x128xf32>
    %c0_29 = arith.constant 0 : index
    %c0_30 = arith.constant 0 : index
    %27 = vector.load %arg9[%c0_29, %c0_30] : memref<128x128xf32, #tpu.memory_space<vmem>>, vector<128x128xf32>
    tpu.vector_store %arg9[%c0_29, %c0_30], %26 {strides = array<i32>} : memref<128x128xf32, #tpu.memory_space<vmem>>, vector<128x128xf32>,
    %c0_31 = arith.constant 0 : index
    %c1_32 = arith.constant 1 : index
    %c0_33 = arith.constant 0 : index
    %28 = vector.load %arg8[%c0_31, %c1_32, %c0_33] : memref<10x18x24xbf16, #tpu.memory_space<vmem>>, vector<8x16x24xbf16>
    %29 = vector.shape_cast %28 : vector<8x16x24xbf16> to vector<128x24xbf16>
    %c24 = arith.constant 24 : index
    %c0_34 = arith.constant 0 : index
    %30 = vector.load %arg5[%c24, %c0_34] : memref<216x128xbf16, #tpu.memory_space<vmem>>, vector<24x128xbf16>
    %c0_35 = arith.constant 0 : index
    %c0_36 = arith.constant 0 : index
    %31 = vector.load %arg9[%c0_35, %c0_36] : memref<128x128xf32, #tpu.memory_space<vmem>>, vector<128x128xf32>
    %cst_37 = arith.constant dense<0.000000e+00> : vector<128x128xf32>
    %32 = tpu.matmul %29, %30, %cst_37 {dimension_numbers = #tpu.dot_dimension_numbers<[1], [0], [0], [1], [0, 0, 1, 1], [], []>} : vector<128x24xbf16>, vector<24x128xbf16>, vector<128x128xf32> -> vector<128x128xf32>
    %33 = arith.addf %31, %32 : vector<128x128xf32>
    %c0_38 = arith.constant 0 : index
    %c0_39 = arith.constant 0 : index
    %34 = vector.load %arg9[%c0_38, %c0_39] : memref<128x128xf32, #tpu.memory_space<vmem>>, vector<128x128xf32>
    tpu.vector_store %arg9[%c0_38, %c0_39], %33 {strides = array<i32>} : memref<128x128xf32, #tpu.memory_space<vmem>>, vector<128x128xf32>,
    %c0_40 = arith.constant 0 : index
    %c2 = arith.constant 2 : index
    %c0_41 = arith.constant 0 : index
    %35 = vector.load %arg8[%c0_40, %c2, %c0_41] : memref<10x18x24xbf16, #tpu.memory_space<vmem>>, vector<8x16x24xbf16>
    %36 = vector.shape_cast %35 : vector<8x16x24xbf16> to vector<128x24xbf16>
    %c48 = arith.constant 48 : index
    %c0_42 = arith.constant 0 : index
    %37 = vector.load %arg5[%c48, %c0_42] : memref<216x128xbf16, #tpu.memory_space<vmem>>, vector<24x128xbf16>
    %c0_43 = arith.constant 0 : index
    %c0_44 = arith.constant 0 : index
    %38 = vector.load %arg9[%c0_43, %c0_44] : memref<128x128xf32, #tpu.memory_space<vmem>>, vector<128x128xf32>
    %cst_45 = arith.constant dense<0.000000e+00> : vector<128x128xf32>
    %39 = tpu.matmul %36, %37, %cst_45 {dimension_numbers = #tpu.dot_dimension_numbers<[1], [0], [0], [1], [0, 0, 1, 1], [], []>} : vector<128x24xbf16>, vector<24x128xbf16>, vector<128x128xf32> -> vector<128x128xf32>
    %40 = arith.addf %38, %39 : vector<128x128xf32>
    %c0_46 = arith.constant 0 : index
    %c0_47 = arith.constant 0 : index
    %41 = vector.load %arg9[%c0_46, %c0_47] : memref<128x128xf32, #tpu.memory_space<vmem>>, vector<128x128xf32>
    tpu.vector_store %arg9[%c0_46, %c0_47], %40 {strides = array<i32>} : memref<128x128xf32, #tpu.memory_space<vmem>>, vector<128x128xf32>,
    %c1_48 = arith.constant 1 : index
    %c0_49 = arith.constant 0 : index
    %c0_50 = arith.constant 0 : index
    %42 = vector.load %arg8[%c1_48, %c0_49, %c0_50] : memref<10x18x24xbf16, #tpu.memory_space<vmem>>, vector<8x16x24xbf16>
    %43 = vector.shape_cast %42 : vector<8x16x24xbf16> to vector<128x24xbf16>
    %c72 = arith.constant 72 : index
    %c0_51 = arith.constant 0 : index
    %44 = vector.load %arg5[%c72, %c0_51] : memref<216x128xbf16, #tpu.memory_space<vmem>>, vector<24x128xbf16>
    %c0_52 = arith.constant 0 : index
    %c0_53 = arith.constant 0 : index
    %45 = vector.load %arg9[%c0_52, %c0_53] : memref<128x128xf32, #tpu.memory_space<vmem>>, vector<128x128xf32>
    %cst_54 = arith.constant dense<0.000000e+00> : vector<128x128xf32>
    %46 = tpu.matmul %43, %44, %cst_54 {dimension_numbers = #tpu.dot_dimension_numbers<[1], [0], [0], [1], [0, 0, 1, 1], [], []>} : vector<128x24xbf16>, vector<24x128xbf16>, vector<128x128xf32> -> vector<128x128xf32>
    %47 = arith.addf %45, %46 : vector<128x128xf32>
    %c0_55 = arith.constant 0 : index
    %c0_56 = arith.constant 0 : index
    %48 = vector.load %arg9[%c0_55, %c0_56] : memref<128x128xf32, #tpu.memory_space<vmem>>, vector<128x128xf32>
    tpu.vector_store %arg9[%c0_55, %c0_56], %47 {strides = array<i32>} : memref<128x128xf32, #tpu.memory_space<vmem>>, vector<128x128xf32>,
    %c1_57 = arith.constant 1 : index
    %c1_58 = arith.constant 1 : index
    %c0_59 = arith.constant 0 : index
    %49 = vector.load %arg8[%c1_57, %c1_58, %c0_59] : memref<10x18x24xbf16, #tpu.memory_space<vmem>>, vector<8x16x24xbf16>
    %50 = vector.shape_cast %49 : vector<8x16x24xbf16> to vector<128x24xbf16>
    %c96 = arith.constant 96 : index
    %c0_60 = arith.constant 0 : index
    %51 = vector.load %arg5[%c96, %c0_60] : memref<216x128xbf16, #tpu.memory_space<vmem>>, vector<24x128xbf16>
    %c0_61 = arith.constant 0 : index
    %c0_62 = arith.constant 0 : index
    %52 = vector.load %arg9[%c0_61, %c0_62] : memref<128x128xf32, #tpu.memory_space<vmem>>, vector<128x128xf32>
    %cst_63 = arith.constant dense<0.000000e+00> : vector<128x128xf32>
    %53 = tpu.matmul %50, %51, %cst_63 {dimension_numbers = #tpu.dot_dimension_numbers<[1], [0], [0], [1], [0, 0, 1, 1], [], []>} : vector<128x24xbf16>, vector<24x128xbf16>, vector<128x128xf32> -> vector<128x128xf32>
    %54 = arith.addf %52, %53 : vector<128x128xf32>
    %c0_64 = arith.constant 0 : index
    %c0_65 = arith.constant 0 : index
    %55 = vector.load %arg9[%c0_64, %c0_65] : memref<128x128xf32, #tpu.memory_space<vmem>>, vector<128x128xf32>
    tpu.vector_store %arg9[%c0_64, %c0_65], %54 {strides = array<i32>} : memref<128x128xf32, #tpu.memory_space<vmem>>, vector<128x128xf32>,
    %c1_66 = arith.constant 1 : index
    %c2_67 = arith.constant 2 : index
    %c0_68 = arith.constant 0 : index
    %56 = vector.load %arg8[%c1_66, %c2_67, %c0_68] : memref<10x18x24xbf16, #tpu.memory_space<vmem>>, vector<8x16x24xbf16>
    %57 = vector.shape_cast %56 : vector<8x16x24xbf16> to vector<128x24xbf16>
    %c120 = arith.constant 120 : index
    %c0_69 = arith.constant 0 : index
    %58 = vector.load %arg5[%c120, %c0_69] : memref<216x128xbf16, #tpu.memory_space<vmem>>, vector<24x128xbf16>
    %c0_70 = arith.constant 0 : index
    %c0_71 = arith.constant 0 : index
    %59 = vector.load %arg9[%c0_70, %c0_71] : memref<128x128xf32, #tpu.memory_space<vmem>>, vector<128x128xf32>
    %cst_72 = arith.constant dense<0.000000e+00> : vector<128x128xf32>
    %60 = tpu.matmul %57, %58, %cst_72 {dimension_numbers = #tpu.dot_dimension_numbers<[1], [0], [0], [1], [0, 0, 1, 1], [], []>} : vector<128x24xbf16>, vector<24x128xbf16>, vector<128x128xf32> -> vector<128x128xf32>
    %61 = arith.addf %59, %60 : vector<128x128xf32>
    %c0_73 = arith.constant 0 : index
    %c0_74 = arith.constant 0 : index
    %62 = vector.load %arg9[%c0_73, %c0_74] : memref<128x128xf32, #tpu.memory_space<vmem>>, vector<128x128xf32>
    tpu.vector_store %arg9[%c0_73, %c0_74], %61 {strides = array<i32>} : memref<128x128xf32, #tpu.memory_space<vmem>>, vector<128x128xf32>,
    %c2_75 = arith.constant 2 : index
    %c0_76 = arith.constant 0 : index
    %c0_77 = arith.constant 0 : index
    %63 = vector.load %arg8[%c2_75, %c0_76, %c0_77] : memref<10x18x24xbf16, #tpu.memory_space<vmem>>, vector<8x16x24xbf16>
    %64 = vector.shape_cast %63 : vector<8x16x24xbf16> to vector<128x24xbf16>
    %c144 = arith.constant 144 : index
    %c0_78 = arith.constant 0 : index
    %65 = vector.load %arg5[%c144, %c0_78] : memref<216x128xbf16, #tpu.memory_space<vmem>>, vector<24x128xbf16>
    %c0_79 = arith.constant 0 : index
    %c0_80 = arith.constant 0 : index
    %66 = vector.load %arg9[%c0_79, %c0_80] : memref<128x128xf32, #tpu.memory_space<vmem>>, vector<128x128xf32>
    %cst_81 = arith.constant dense<0.000000e+00> : vector<128x128xf32>
    %67 = tpu.matmul %64, %65, %cst_81 {dimension_numbers = #tpu.dot_dimension_numbers<[1], [0], [0], [1], [0, 0, 1, 1], [], []>} : vector<128x24xbf16>, vector<24x128xbf16>, vector<128x128xf32> -> vector<128x128xf32>
    %68 = arith.addf %66, %67 : vector<128x128xf32>
    %c0_82 = arith.constant 0 : index
    %c0_83 = arith.constant 0 : index
    %69 = vector.load %arg9[%c0_82, %c0_83] : memref<128x128xf32, #tpu.memory_space<vmem>>, vector<128x128xf32>
    tpu.vector_store %arg9[%c0_82, %c0_83], %68 {strides = array<i32>} : memref<128x128xf32, #tpu.memory_space<vmem>>, vector<128x128xf32>,
    %c2_84 = arith.constant 2 : index
    %c1_85 = arith.constant 1 : index
    %c0_86 = arith.constant 0 : index
    %70 = vector.load %arg8[%c2_84, %c1_85, %c0_86] : memref<10x18x24xbf16, #tpu.memory_space<vmem>>, vector<8x16x24xbf16>
    %71 = vector.shape_cast %70 : vector<8x16x24xbf16> to vector<128x24xbf16>
    %c168 = arith.constant 168 : index
    %c0_87 = arith.constant 0 : index
    %72 = vector.load %arg5[%c168, %c0_87] : memref<216x128xbf16, #tpu.memory_space<vmem>>, vector<24x128xbf16>
    %c0_88 = arith.constant 0 : index
    %c0_89 = arith.constant 0 : index
    %73 = vector.load %arg9[%c0_88, %c0_89] : memref<128x128xf32, #tpu.memory_space<vmem>>, vector<128x128xf32>
    %cst_90 = arith.constant dense<0.000000e+00> : vector<128x128xf32>
    %74 = tpu.matmul %71, %72, %cst_90 {dimension_numbers = #tpu.dot_dimension_numbers<[1], [0], [0], [1], [0, 0, 1, 1], [], []>} : vector<128x24xbf16>, vector<24x128xbf16>, vector<128x128xf32> -> vector<128x128xf32>
    %75 = arith.addf %73, %74 : vector<128x128xf32>
    %c0_91 = arith.constant 0 : index
    %c0_92 = arith.constant 0 : index
    %76 = vector.load %arg9[%c0_91, %c0_92] : memref<128x128xf32, #tpu.memory_space<vmem>>, vector<128x128xf32>
    tpu.vector_store %arg9[%c0_91, %c0_92], %75 {strides = array<i32>} : memref<128x128xf32, #tpu.memory_space<vmem>>, vector<128x128xf32>,
    %c2_93 = arith.constant 2 : index
    %c2_94 = arith.constant 2 : index
    %c0_95 = arith.constant 0 : index
    %77 = vector.load %arg8[%c2_93, %c2_94, %c0_95] : memref<10x18x24xbf16, #tpu.memory_space<vmem>>, vector<8x16x24xbf16>
    %78 = vector.shape_cast %77 : vector<8x16x24xbf16> to vector<128x24xbf16>
    %c192 = arith.constant 192 : index
    %c0_96 = arith.constant 0 : index
    %79 = vector.load %arg5[%c192, %c0_96] : memref<216x128xbf16, #tpu.memory_space<vmem>>, vector<24x128xbf16>
    %c0_97 = arith.constant 0 : index
    %c0_98 = arith.constant 0 : index
    %80 = vector.load %arg9[%c0_97, %c0_98] : memref<128x128xf32, #tpu.memory_space<vmem>>, vector<128x128xf32>
    %cst_99 = arith.constant dense<0.000000e+00> : vector<128x128xf32>
    %81 = tpu.matmul %78, %79, %cst_99 {dimension_numbers = #tpu.dot_dimension_numbers<[1], [0], [0], [1], [0, 0, 1, 1], [], []>} : vector<128x24xbf16>, vector<24x128xbf16>, vector<128x128xf32> -> vector<128x128xf32>
    %82 = arith.addf %80, %81 : vector<128x128xf32>
    %c0_100 = arith.constant 0 : index
    %c0_101 = arith.constant 0 : index
    %83 = vector.load %arg9[%c0_100, %c0_101] : memref<128x128xf32, #tpu.memory_space<vmem>>, vector<128x128xf32>
    tpu.vector_store %arg9[%c0_100, %c0_101], %82 {strides = array<i32>} : memref<128x128xf32, #tpu.memory_space<vmem>>, vector<128x128xf32>,
    %c0_102 = arith.constant 0 : index
    %c0_103 = arith.constant 0 : index
    %84 = vector.load %arg9[%c0_102, %c0_103] : memref<128x128xf32, #tpu.memory_space<vmem>>, vector<128x128xf32>
    %c0_104 = arith.constant 0 : index
    %c0_105 = arith.constant 0 : index
    %85 = vector.load %arg6[%c0_104, %c0_105] : memref<1x128xf32, #tpu.memory_space<vmem>>, vector<1x128xf32>
    %86 = vector.broadcast %85 : vector<1x128xf32> to vector<128x128xf32>
    %87 = arith.addf %84, %86 : vector<128x128xf32>
    %cst_106 = arith.constant 0.000000e+00 : f32
    %88 = vector.broadcast %cst_106 : f32 to vector<128x128xf32>
    %89 = arith.maximumf %87, %88 : vector<128x128xf32>
    %90 = vector.extract_strided_slice %89 {offsets = [0, 0], sizes = [128, 40], strides = [1, 1]} : vector<128x128xf32> to vector<128x40xf32>
    %91 = vector.shape_cast %90 : vector<128x40xf32> to vector<8x16x40xf32>
    %c0_107 = arith.constant 0 : index
    %c0_108 = arith.constant 0 : index
    %c0_109 = arith.constant 0 : index
    %c0_110 = arith.constant 0 : index
    %92 = vector.load %arg7[%c0_107, %c0_108, %c0_109, %c0_110] : memref<1x8x16x40xf32, #tpu.memory_space<vmem>>, vector<1x8x16x40xf32>
    %93 = vector.shape_cast %92 : vector<1x8x16x40xf32> to vector<8x16x40xf32>
    %94 = vector.shape_cast %91 : vector<8x16x40xf32> to vector<1x8x16x40xf32>
    tpu.vector_store %arg7[%c0_107, %c0_108, %c0_109, %c0_110], %94 {strides = array<i32>} : memref<1x8x16x40xf32, #tpu.memory_space<vmem>>, vector<1x8x16x40xf32>,
    return
  }
  func.func @transform_0(%arg0: i32, %arg1: i32) -> (i32, i32, i32, i32) {
    %c0_i32 = arith.constant 0 : i32
    %c0_i32_0 = arith.constant 0 : i32
    %c0_i32_1 = arith.constant 0 : i32
    return %arg0, %arg1, %c0_i32, %c0_i32_0 : i32, i32, i32, i32
  }
  func.func @transform_1(%arg0: i32, %arg1: i32) -> (i32, i32, i32, i32) {
    %c8_i32 = arith.constant 8 : i32
    %0 = arith.muli %arg1, %c8_i32 : i32
    %c1_i32 = arith.constant 1 : i32
    %1 = arith.subi %0, %c1_i32 : i32
    %c0_i32 = arith.constant 0 : i32
    %2 = arith.maxsi %1, %c0_i32 : i32
    %c0_i32_0 = arith.constant 0 : i32
    %c0_i32_1 = arith.constant 0 : i32
    %c0_i32_2 = arith.constant 0 : i32
    return %arg0, %2, %c0_i32_0, %c0_i32_1 : i32, i32, i32, i32
  }
  func.func @transform_2(%arg0: i32, %arg1: i32) -> (i32, i32, i32, i32) {
    %c8_i32 = arith.constant 8 : i32
    %0 = arith.muli %arg1, %c8_i32 : i32
    %c8_i32_0 = arith.constant 8 : i32
    %1 = arith.addi %0, %c8_i32_0 : i32
    %c7_i32 = arith.constant 7 : i32
    %2 = arith.minsi %1, %c7_i32 : i32
    %c0_i32 = arith.constant 0 : i32
    %c0_i32_1 = arith.constant 0 : i32
    %c0_i32_2 = arith.constant 0 : i32
    return %arg0, %2, %c0_i32, %c0_i32_1 : i32, i32, i32, i32
  }
  func.func @transform_3(%arg0: i32, %arg1: i32) -> (i32, i32) {
    %c0_i32 = arith.constant 0 : i32
    %c0_i32_0 = arith.constant 0 : i32
    %c0_i32_1 = arith.constant 0 : i32
    return %c0_i32, %c0_i32_0 : i32, i32
  }
  func.func @transform_4(%arg0: i32, %arg1: i32) -> (i32, i32) {
    %c0_i32 = arith.constant 0 : i32
    %c0_i32_0 = arith.constant 0 : i32
    %c0_i32_1 = arith.constant 0 : i32
    return %c0_i32, %c0_i32_0 : i32, i32
  }
  func.func @transform_5(%arg0: i32, %arg1: i32) -> (i32, i32, i32, i32) {
    %c0_i32 = arith.constant 0 : i32
    %c0_i32_0 = arith.constant 0 : i32
    %c0_i32_1 = arith.constant 0 : i32
    return %arg0, %arg1, %c0_i32, %c0_i32_0 : i32, i32, i32, i32
  }
}

</mosaic_0001>

<llo_original>
// kernel: tpu_custom_call.1
$region0: #{tpu_custom_call.1}
  #allocation0 [shape = 'u32[]', space=smem, size = 0x4, offset = 0x4, fixed_abs, tag = 'smem constant byte address 0x4 - core index']
  #allocation1 [shape = 'u32[144,128]{1,0:T(1,128)}', space=vmem, size = 0x12000, scoped, tag = 'internal scratch']
  #allocation2 [shape = 'bf16[10,18,24]{2,1,0:T(8,128)(2,1)}', space=vmem, size = 0xf000, scoped, tag = 'scratch operand']
  #allocation3 [shape = 'f32[128,128]{1,0:T(8,128)}', space=vmem, size = 0x10000, scoped, tag = 'scratch operand']
  %s0 = inlined_call_operand.hbm [shape: bf16[2,8,16,24], index: 0, kind: input, shape index: {}]
  %s1 = inlined_call_operand.hbm [shape: bf16[2,8,16,24], index: 1, kind: input, shape index: {}]
  %s2 = inlined_call_operand.hbm [shape: bf16[2,8,16,24], index: 2, kind: input, shape index: {}]
  %s3 = inlined_call_operand.hbm [shape: bf16[216,128], index: 3, kind: input, shape index: {}]
  %s4 = inlined_call_operand.vmem [shape: f32[1,128], index: 4, kind: input, shape index: {}]
  %s5 = inlined_call_operand.hbm [shape: f32[2,8,16,40], index: 5, kind: output, shape index: {}]
  %s6 = sld [smem:[#allocation0]]
  $region85: #{tpu_custom_call.1} parent=0
    _
  %s8 = ssub.s32 1, %s6
  %s9 = scalar_select 0, %s8, %s6
  $region1: #{tpu_custom_call.1} parent=0
    #allocation4 [shape = 'u8[65536]{0}', space=vmem, size = 0x10000, scoped, tag = 'input window, operand 0']
    #allocation5 [shape = 's32[2]{0}', space=sflag, size = 0x8, scoped, tag = 'scoped memory for tpu_custom_call.1']
    #allocation6 [shape = 's32[2]{0}', space=sflag, size = 0x8, scoped, tag = 'scoped memory for tpu_custom_call.1']
    #allocation7 [shape = 'u8[8192]{0}', space=vmem, size = 0x2000, scoped, tag = 'input window, operand 1']
    #allocation8 [shape = 's32[2]{0}', space=sflag, size = 0x8, scoped, tag = 'scoped memory for tpu_custom_call.1']
    #allocation9 [shape = 'u8[8192]{0}', space=vmem, size = 0x2000, scoped, tag = 'input window, operand 2']
    #allocation10 [shape = 'u8[55296]{0}', space=vmem, size = 0xd800, scoped, tag = 'input window, operand 3, single buffered']
    #allocation11 [shape = 's32[1]{0}', space=sflag, size = 0x4, scoped, tag = 'scoped memory for tpu_custom_call.1']
    #allocation12 [shape = 'u8[131072]{0}', space=vmem, size = 0x20000, scoped, tag = 'output window, operand 0']
    %10 = vsyncpa [#allocation5], 0
    %s11 = scalar_lea.sflag [#allocation5], 1
    %12 = vsyncpa %s11, 0
    %13 = vsyncpa [#allocation8], 0
    %s14 = scalar_lea.sflag [#allocation8], 1
    %15 = vsyncpa %s14, 0
    %16 = vsyncpa [#allocation11], 0
    %17 = vsyncpa [#allocation6], 0
    %s18 = scalar_lea.sflag [#allocation6], 1
    %19 = vsyncpa %s18, 0
    loop: start=0, step=1, limit=4
    $region2: #{tpu_custom_call.1} parent=1 // loop_pre_header
      _
    $region3: #{tpu_custom_call.1} parent=1 // loop_header
      %s21 = sphi 0, %s25
      %p22 = scmp.ge.s32.totalorder %s21, 4
      %s28 = sphi 0, %s40
      %s29 = sphi 0, %s36
      %s30 = sphi 0, %s28
      %s31 = sphi 0, %s29
      %s32 = sphi 0, %s30
      %s33 = sphi 0, %s31
      %s45 = sphi 0, %s47
      %s48 = sphi 0, %s45
      %s49 = sphi 0, %s48
      %s65 = sphi 0, %s49
      %s81 = sphi 0, %s83
      %s84 = sphi 0, %s81
      %s85 = sphi 0, %s84
      %s101 = sphi 0, %s85
      %s117 = sphi 0, %s119
      %s120 = sphi 0, %s117
      %s121 = sphi 0, %s120
      %s137 = sphi 0, %s121
      %s141 = sphi 0, %s141
      %s143 = sphi 0, %s141
      %s144 = sphi 0, %s143
      %s158 = sphi 0, %s144
      %s162 = sphi 0, %s162
      %s164 = sphi 0, %s162
      %s165 = sphi 0, %s164
      %s179 = sphi 0, %s165
      %s187 = sphi 0, %s189
      %s190 = sphi 0, %s187
      %s191 = sphi 0, %s190
      %s207 = sphi 0, %s191
    $region4: #{tpu_custom_call.1} parent=1 // loop_header_branch
      %24 = sbr.rel (%p22) target = $region8
    $region5: #{tpu_custom_call.1} parent=1 // loop_body
      %s26 = ssub.s32 %s21, 1
      %s27 = ssub.s32 %s21, 2
      %s34 = sadd.s32 1, %s29
      %p35 = scmp.ge.s32.totalorder %s34, 1
      %s36 = scalar_select %p35, 0, %s34
      %s37 = sadd.s32 1, %s28
      %s38 = scalar_select %p35, %s37, %s28
      %p39 = scmp.ge.s32.totalorder %s38, 2
      %s40 = scalar_select %p39, 0, %s38
      %s41 = ssub.s32 %s28, %s40
      %s42 = ssub.s32 %s29, %s36
      %s43 = sor.u32 %s41, %s42
      %p44 = scmp.eq.s32.totalorder %s43, 0
      %s46 = sadd.s32 %s45, 1
      %s47 = scalar_select %p44, %s45, %s46
      %p50 = pneg %p44
      %p51 = scmp.eq.s32.totalorder %s21, 1
      %p52 = por %p50, %p51
      %p53 = scmp.ne.s32.totalorder %s45, %s48
      %p54 = scmp.eq.s32.totalorder %s21, 0
      %p55 = por %p53, %p54
      %p56 = scmp.ne.s32.totalorder %s45, %s48
      %p57 = scmp.eq.s32.totalorder %s26, 1
      %p58 = por %p56, %p57
      %p59 = scmp.ne.s32.totalorder %s48, %s49
      %p60 = scmp.eq.s32.totalorder %s26, 0
      %p61 = por %p59, %p60
      %p62 = scmp.ne.s32.totalorder %s48, %s49
      %p63 = scmp.eq.s32.totalorder %s27, 1
      %p64 = por %p62, %p63
      %p66 = scmp.ne.s32.totalorder %s49, %s65
      %p67 = scmp.eq.s32.totalorder %s27, 0
      %p68 = por %p66, %p67
      %s69 = smul.u32 %s29, 8
      %s70 = ssub.s32 %s69, 1
      %p71 = scmp.gt.s32.totalorder %s70, 0
      %s72 = scalar_select %p71, %s70, 0
      %s73 = smul.u32 %s36, 8
      %s74 = ssub.s32 %s73, 1
      %p75 = scmp.gt.s32.totalorder %s74, 0
      %s76 = scalar_select %p75, %s74, 0
      %s77 = ssub.s32 %s28, %s40
      %s78 = ssub.s32 %s72, %s76
      %s79 = sor.u32 %s77, %s78
      %p80 = scmp.eq.s32.totalorder %s79, 0
      %s82 = sadd.s32 %s81, 1
      %s83 = scalar_select %p80, %s81, %s82
      %p86 = pneg %p80
      %p87 = scmp.eq.s32.totalorder %s21, 1
      %p88 = por %p86, %p87
      %p89 = scmp.ne.s32.totalorder %s81, %s84
      %p90 = scmp.eq.s32.totalorder %s21, 0
      %p91 = por %p89, %p90
      %p92 = scmp.ne.s32.totalorder %s81, %s84
      %p93 = scmp.eq.s32.totalorder %s26, 1
      %p94 = por %p92, %p93
      %p95 = scmp.ne.s32.totalorder %s84, %s85
      %p96 = scmp.eq.s32.totalorder %s26, 0
      %p97 = por %p95, %p96
      %p98 = scmp.ne.s32.totalorder %s84, %s85
      %p99 = scmp.eq.s32.totalorder %s27, 1
      %p100 = por %p98, %p99
      %p102 = scmp.ne.s32.totalorder %s85, %s101
      %p103 = scmp.eq.s32.totalorder %s27, 0
      %p104 = por %p102, %p103
      %s105 = smul.u32 %s29, 8
      %s106 = sadd.s32 %s105, 8
      %p107 = scmp.lt.s32.totalorder %s106, 7
      %s108 = scalar_select %p107, %s106, 7
      %s109 = smul.u32 %s36, 8
      %s110 = sadd.s32 %s109, 8
      %p111 = scmp.lt.s32.totalorder %s110, 7
      %s112 = scalar_select %p111, %s110, 7
      %s113 = ssub.s32 %s28, %s40
      %s114 = ssub.s32 %s108, %s112
      %s115 = sor.u32 %s113, %s114
      %p116 = scmp.eq.s32.totalorder %s115, 0
      %s118 = sadd.s32 %s117, 1
      %s119 = scalar_select %p116, %s117, %s118
      %p122 = pneg %p116
      %p123 = scmp.eq.s32.totalorder %s21, 1
      %p124 = por %p122, %p123
      %p125 = scmp.ne.s32.totalorder %s117, %s120
      %p126 = scmp.eq.s32.totalorder %s21, 0
      %p127 = por %p125, %p126
      %p128 = scmp.ne.s32.totalorder %s117, %s120
      %p129 = scmp.eq.s32.totalorder %s26, 1
      %p130 = por %p128, %p129
      %p131 = scmp.ne.s32.totalorder %s120, %s121
      %p132 = scmp.eq.s32.totalorder %s26, 0
      %p133 = por %p131, %p132
      %p134 = scmp.ne.s32.totalorder %s120, %s121
      %p135 = scmp.eq.s32.totalorder %s27, 1
      %p136 = por %p134, %p135
      %p138 = scmp.ne.s32.totalorder %s121, %s137
      %p139 = scmp.eq.s32.totalorder %s27, 0
      %p140 = por %p138, %p139
      %s142 = sadd.s32 %s141, 1
      %p145 = scmp.eq.s32.totalorder %s21, 1
      %p146 = scmp.ne.s32.totalorder %s141, %s143
      %p147 = scmp.eq.s32.totalorder %s21, 0
      %p148 = por %p146, %p147
      %p149 = scmp.ne.s32.totalorder %s141, %s143
      %p150 = scmp.eq.s32.totalorder %s26, 1
      %p151 = por %p149, %p150
      %p152 = scmp.ne.s32.totalorder %s143, %s144
      %p153 = scmp.eq.s32.totalorder %s26, 0
      %p154 = por %p152, %p153
      %p155 = scmp.ne.s32.totalorder %s143, %s144
      %p156 = scmp.eq.s32.totalorder %s27, 1
      %p157 = por %p155, %p156
      %p159 = scmp.ne.s32.totalorder %s144, %s158
      %p160 = scmp.eq.s32.totalorder %s27, 0
      %p161 = por %p159, %p160
      %s163 = sadd.s32 %s162, 1
      %p166 = scmp.eq.s32.totalorder %s21, 1
      %p167 = scmp.ne.s32.totalorder %s162, %s164
      %p168 = scmp.eq.s32.totalorder %s21, 0
      %p169 = por %p167, %p168
      %p170 = scmp.ne.s32.totalorder %s162, %s164
      %p171 = scmp.eq.s32.totalorder %s26, 1
      %p172 = por %p170, %p171
      %p173 = scmp.ne.s32.totalorder %s164, %s165
      %p174 = scmp.eq.s32.totalorder %s26, 0
      %p175 = por %p173, %p174
      %p176 = scmp.ne.s32.totalorder %s164, %s165
      %p177 = scmp.eq.s32.totalorder %s27, 1
      %p178 = por %p176, %p177
      %p180 = scmp.ne.s32.totalorder %s165, %s179
      %p181 = scmp.eq.s32.totalorder %s27, 0
      %p182 = por %p180, %p181
      %s183 = ssub.s32 %s28, %s40
      %s184 = ssub.s32 %s29, %s36
      %s185 = sor.u32 %s183, %s184
      %p186 = scmp.eq.s32.totalorder %s185, 0
      %s188 = sadd.s32 %s187, 1
      %s189 = scalar_select %p186, %s187, %s188
      %p192 = pneg %p186
      %p193 = scmp.eq.s32.totalorder %s21, 1
      %p194 = por %p192, %p193
      %p195 = scmp.ne.s32.totalorder %s187, %s190
      %p196 = scmp.eq.s32.totalorder %s21, 0
      %p197 = por %p195, %p196
      %p198 = scmp.ne.s32.totalorder %s187, %s190
      %p199 = scmp.eq.s32.totalorder %s26, 1
      %p200 = por %p198, %p199
      %p201 = scmp.ne.s32.totalorder %s190, %s191
      %p202 = scmp.eq.s32.totalorder %s26, 0
      %p203 = por %p201, %p202
      %p204 = scmp.ne.s32.totalorder %s190, %s191
      %p205 = scmp.eq.s32.totalorder %s27, 1
      %p206 = por %p204, %p205
      %p208 = scmp.ne.s32.totalorder %s191, %s207
      %p209 = scmp.eq.s32.totalorder %s27, 0
      %p210 = por %p208, %p209
      %p211 = scmp.le.s32.totalorder 1, %s21
      %p212 = scmp.lt.s32.totalorder %s21, 3
      %p213 = pnand %p211, %p212
      %p214 = pneg %p213
      // Predicated region
      $region9: #{tpu_custom_call.1} parent=5 // pred_check
        _
      $region10: #{tpu_custom_call.1} parent=5 // pred_check_branch
        %216 = sbr.rel (%p213) target = $region12
      $region11: #{tpu_custom_call.1} parent=5 // pred_region
        %s217 = ssub.s32 %s21, 1
        // Predicated region
        $region13: #{tpu_custom_call.1} parent=11 // pred_check
          %p218 = pneg %p154
        $region14: #{tpu_custom_call.1} parent=11 // pred_check_branch
          %220 = sbr.rel (%p218) target = $region16
        $region15: #{tpu_custom_call.1} parent=11 // pred_region
          %s222 = ssub.s32 1728, 1728
          %223 = vsyncadd [#allocation11], %s222
          %s224 = sshll.u32 [#allocation10], 4
          %s225 = int_to_ptr.vmem [resolvable:$true] %s224
          %230 = dma.hbm_to_vmem [thread:$0]  %s3, 1728, %s225, [#allocation11], 64, 64, 4
        $region16: #{tpu_custom_call.1} parent=11 // pred_fallthru
          _
        // Predicated region
        $region17: #{tpu_custom_call.1} parent=11 // pred_check
          %p231 = pneg %p175
        $region18: #{tpu_custom_call.1} parent=11 // pred_check_branch
          %233 = sbr.rel (%p231) target = $region20
        $region19: #{tpu_custom_call.1} parent=11 // pred_region
          _
        $region20: #{tpu_custom_call.1} parent=11 // pred_fallthru
          _
      $region12: #{tpu_custom_call.1} parent=5 // pred_fallthru
        _
      %p234 = scmp.lt.s32.totalorder %s21, 2
      // Predicated region
      $region21: #{tpu_custom_call.1} parent=5 // pred_check
        %p235 = pneg %p234
      $region22: #{tpu_custom_call.1} parent=5 // pred_check_branch
        %237 = sbr.rel (%p235) target = $region24
      $region23: #{tpu_custom_call.1} parent=5 // pred_region
        // Predicated region
        $region25: #{tpu_custom_call.1} parent=23 // pred_check
          %p238 = pneg %p55
        $region26: #{tpu_custom_call.1} parent=23 // pred_check_branch
          %240 = sbr.rel (%p238) target = $region28
        $region27: #{tpu_custom_call.1} parent=23 // pred_region
          %s241 = sand.u32 %s45, 1
          %s242 = scalar_lea.sflag [#allocation5], %s241
          %s243 = sand.u32 %s45, 1
          %s244 = smul.addr %s243, 64
          %s245 = scalar_lea.vmem [#allocation4], %s244
          %s246 = smul.u32 8, %s29
          %s248 = ssub.s32 1024, 1024
          %249 = vsyncadd %s242, %s248
          %s250 = smul.addr %s246, 2
          %s251 = smul.addr %s28, 16
          %s252 = sadd.s32 %s250, %s251
          %s253 = smul.addr %s252, 64
          %s254 = scalar_lea.hbm %s0, %s253
          %s255 = sshll.u32 %s245, 4
          %s256 = int_to_ptr.vmem [resolvable:$true] %s255
          %261 = dma.hbm_to_vmem [thread:$0]  %s254, 1024, %s256, %s242, 64, 64, 4
        $region28: #{tpu_custom_call.1} parent=23 // pred_fallthru
          _
        // Predicated region
        $region29: #{tpu_custom_call.1} parent=23 // pred_check
          %p262 = pneg %p91
        $region30: #{tpu_custom_call.1} parent=23 // pred_check_branch
          %264 = sbr.rel (%p262) target = $region32
        $region31: #{tpu_custom_call.1} parent=23 // pred_region
          %s265 = sand.u32 %s21, 1
          %s266 = scalar_lea.sflag [#allocation8], %s265
          %s267 = sand.u32 %s81, 1
          %s268 = smul.addr %s267, 8
          %s269 = scalar_lea.vmem [#allocation7], %s268
          %s270 = smul.u32 %s29, 8
          %s271 = ssub.s32 %s270, 1
          %p272 = scmp.gt.s32.totalorder %s271, 0
          %s273 = scalar_select %p272, %s271, 0
          %s275 = ssub.s32 128, 128
          %276 = vsyncadd %s266, %s275
          %s277 = smul.addr %s273, 2
          %s278 = smul.addr %s28, 16
          %s279 = sadd.s32 %s277, %s278
          %s280 = smul.addr %s279, 64
          %s281 = scalar_lea.hbm %s1, %s280
          %s282 = sshll.u32 %s269, 4
          %s283 = int_to_ptr.vmem [resolvable:$true] %s282
          %288 = dma.hbm_to_vmem [thread:$0]  %s281, 128, %s283, %s266, 64, 64, 4
        $region32: #{tpu_custom_call.1} parent=23 // pred_fallthru
          _
        // Predicated region
        $region33: #{tpu_custom_call.1} parent=23 // pred_check
          %p289 = pneg %p127
        $region34: #{tpu_custom_call.1} parent=23 // pred_check_branch
          %291 = sbr.rel (%p289) target = $region36
        $region35: #{tpu_custom_call.1} parent=23 // pred_region
          %s292 = sand.u32 %s21, 1
          %s293 = scalar_lea.sflag [#allocation8], %s292
          %s294 = sand.u32 %s117, 1
          %s295 = smul.addr %s294, 8
          %s296 = scalar_lea.vmem [#allocation9], %s295
          %s297 = smul.u32 %s29, 8
          %s298 = sadd.s32 %s297, 8
          %p299 = scmp.lt.s32.totalorder %s298, 7
          %s300 = scalar_select %p299, %s298, 7
          %s302 = ssub.s32 128, 128
          %303 = vsyncadd %s293, %s302
          %s304 = smul.addr %s300, 2
          %s305 = smul.addr %s28, 16
          %s306 = sadd.s32 %s304, %s305
          %s307 = smul.addr %s306, 64
          %s308 = scalar_lea.hbm %s2, %s307
          %s309 = sshll.u32 %s296, 4
          %s310 = int_to_ptr.vmem [resolvable:$true] %s309
          %315 = dma.hbm_to_vmem [thread:$0]  %s308, 128, %s310, %s293, 64, 64, 4
        $region36: #{tpu_custom_call.1} parent=23 // pred_fallthru
          _
      $region24: #{tpu_custom_call.1} parent=5 // pred_fallthru
        _
      %p316 = scmp.le.s32.totalorder 1, %s21
      %p317 = scmp.lt.s32.totalorder %s21, 3
      %p318 = pnand %p316, %p317
      %p319 = pneg %p318
      // Predicated region
      $region37: #{tpu_custom_call.1} parent=5 // pred_check
        _
      $region38: #{tpu_custom_call.1} parent=5 // pred_check_branch
        %321 = sbr.rel (%p318) target = $region40
      $region39: #{tpu_custom_call.1} parent=5 // pred_region
        %s322 = ssub.s32 %s21, 1
        %s323 = sand.u32 %s48, 1
        %s324 = scalar_lea.sflag [#allocation5], %s323
        %s325 = sand.u32 %s48, 1
        %s326 = smul.addr %s325, 64
        %s327 = scalar_lea.vmem [#allocation4], %s326
        // Predicated region
        $region41: #{tpu_custom_call.1} parent=39 // pred_check
          %p328 = pneg %p61
        $region42: #{tpu_custom_call.1} parent=39 // pred_check_branch
          %330 = sbr.rel (%p328) target = $region44
        $region43: #{tpu_custom_call.1} parent=39 // pred_region
          %331 = dma.done %s324, 1024
        $region44: #{tpu_custom_call.1} parent=39 // pred_fallthru
          _
        %s332 = sand.u32 %s26, 1
        %s333 = scalar_lea.sflag [#allocation8], %s332
        %s334 = sand.u32 %s84, 1
        %s335 = smul.addr %s334, 8
        %s336 = scalar_lea.vmem [#allocation7], %s335
        // Predicated region
        $region45: #{tpu_custom_call.1} parent=39 // pred_check
          %p337 = pneg %p97
        $region46: #{tpu_custom_call.1} parent=39 // pred_check_branch
          %339 = sbr.rel (%p337) target = $region48
        $region47: #{tpu_custom_call.1} parent=39 // pred_region
          %340 = dma.done %s333, 128
        $region48: #{tpu_custom_call.1} parent=39 // pred_fallthru
          _
        %s341 = sand.u32 %s26, 1
        %s342 = scalar_lea.sflag [#allocation8], %s341
        %s343 = sand.u32 %s120, 1
        %s344 = smul.addr %s343, 8
        %s345 = scalar_lea.vmem [#allocation9], %s344
        // Predicated region
        $region49: #{tpu_custom_call.1} parent=39 // pred_check
          %p346 = pneg %p133
        $region50: #{tpu_custom_call.1} parent=39 // pred_check_branch
          %348 = sbr.rel (%p346) target = $region52
        $region51: #{tpu_custom_call.1} parent=39 // pred_region
          %349 = dma.done %s342, 128
        $region52: #{tpu_custom_call.1} parent=39 // pred_fallthru
          _
        // Predicated region
        $region53: #{tpu_custom_call.1} parent=39 // pred_check
          %p350 = pneg %p154
        $region54: #{tpu_custom_call.1} parent=39 // pred_check_branch
          %352 = sbr.rel (%p350) target = $region56
        $region55: #{tpu_custom_call.1} parent=39 // pred_region
          %353 = dma.done [#allocation11], 1728
        $region56: #{tpu_custom_call.1} parent=39 // pred_fallthru
          _
        %s354 = sand.u32 %s48, 1
        %s355 = scalar_lea.sflag [#allocation5], %s354
        %s356 = sand.u32 %s48, 1
        %s357 = smul.addr %s356, 64
        %s358 = scalar_lea.vmem [#allocation4], %s357
        %p359 = pneg %p61
        %p360 = pneg %p58
        %s361 = sand.u32 %s26, 1
        %s362 = scalar_lea.sflag [#allocation8], %s361
        %s363 = sand.u32 %s84, 1
        %s364 = smul.addr %s363, 8
        %s365 = scalar_lea.vmem [#allocation7], %s364
        %p366 = pneg %p97
        %p367 = pneg %p94
        %s368 = sand.u32 %s26, 1
        %s369 = scalar_lea.sflag [#allocation8], %s368
        %s370 = sand.u32 %s120, 1
        %s371 = smul.addr %s370, 8
        %s372 = scalar_lea.vmem [#allocation9], %s371
        %p373 = pneg %p133
        %p374 = pneg %p130
        %p375 = pneg %p154
        %p376 = pneg %p151
        %p377 = pneg %p175
        %p378 = pneg %p172
        %p379 = pneg %p203
        %p380 = pneg %p200
        %s381 = sand.u32 %s190, 1
        %s382 = scalar_lea.sflag [#allocation6], %s381
        %s383 = sand.u32 %s190, 1
        %s384 = smul.addr %s383, 128
        %s385 = scalar_lea.vmem [#allocation12], %s384
        %s386 = smul.u32 8, %s31
        %s387 = smul.u32 %s31, 8
        %s388 = ssub.s32 %s387, 1
        %p389 = scmp.gt.s32.totalorder %s388, 0
        %s390 = scalar_select %p389, %s388, 0
        %s391 = smul.u32 %s31, 8
        %s392 = sadd.s32 %s391, 8
        %p393 = scmp.lt.s32.totalorder %s392, 7
        %s394 = scalar_select %p393, %s392, 7
        %s395 = smul.u32 8, %s31
        %397 = vst [vmem:[#allocation3] sm:$0xff] 0.0
        %398 = vst [vmem:[#allocation3 + $0x8] sm:$0xff] 0.0
        %399 = vst [vmem:[#allocation3 + $0x10] sm:$0xff] 0.0
        %400 = vst [vmem:[#allocation3 + $0x18] sm:$0xff] 0.0
        %401 = vst [vmem:[#allocation3 + $0x20] sm:$0xff] 0.0
        %402 = vst [vmem:[#allocation3 + $0x28] sm:$0xff] 0.0
        %403 = vst [vmem:[#allocation3 + $0x30] sm:$0xff] 0.0
        %404 = vst [vmem:[#allocation3 + $0x38] sm:$0xff] 0.0
        %405 = vst [vmem:[#allocation3 + $0x40] sm:$0xff] 0.0
        %406 = vst [vmem:[#allocation3 + $0x48] sm:$0xff] 0.0
        %407 = vst [vmem:[#allocation3 + $0x50] sm:$0xff] 0.0
        %408 = vst [vmem:[#allocation3 + $0x58] sm:$0xff] 0.0
        %409 = vst [vmem:[#allocation3 + $0x60] sm:$0xff] 0.0
        %410 = vst [vmem:[#allocation3 + $0x68] sm:$0xff] 0.0
        %411 = vst [vmem:[#allocation3 + $0x70] sm:$0xff] 0.0
        %412 = vst [vmem:[#allocation3 + $0x78] sm:$0xff] 0.0
        %vm413 = vcmask 188416
        %vm414 = vsmask.f32 256
        %vm415 = vmand %vm413, %vm414
        %v416 = vld [vmem:[#allocation2] sm:$0x1]
        %v417 = vsel %vm415, 0, %v416
        %418 = vst [vmem:[#allocation2] sm:$0x1] %v417
        %v419 = vld [vmem:[#allocation2 + $0xc] sm:$0x1]
        %v420 = vsel %vm415, 0, %v419
        %421 = vst [vmem:[#allocation2 + $0xc] sm:$0x1] %v420
        %v422 = vld [vmem:[#allocation2 + $0x18] sm:$0x1]
        %v423 = vsel %vm415, 0, %v422
        %424 = vst [vmem:[#allocation2 + $0x18] sm:$0x1] %v423
        %v425 = vld [vmem:[#allocation2 + $0x24] sm:$0x1]
        %v426 = vsel %vm415, 0, %v425
        %427 = vst [vmem:[#allocation2 + $0x24] sm:$0x1] %v426
        %v428 = vld [vmem:[#allocation2 + $0x30] sm:$0x1]
        %v429 = vsel %vm415, 0, %v428
        %430 = vst [vmem:[#allocation2 + $0x30] sm:$0x1] %v429
        %v431 = vld [vmem:[#allocation2 + $0x3c] sm:$0x1]
        %v432 = vsel %vm415, 0, %v431
        %433 = vst [vmem:[#allocation2 + $0x3c] sm:$0x1] %v432
        %v434 = vld [vmem:[#allocation2 + $0x48] sm:$0x1]
        %v435 = vsel %vm415, 0, %v434
        %436 = vst [vmem:[#allocation2 + $0x48] sm:$0x1] %v435
        %v437 = vld [vmem:[#allocation2 + $0x54] sm:$0x1]
        %v438 = vsel %vm415, 0, %v437
        %439 = vst [vmem:[#allocation2 + $0x54] sm:$0x1] %v438
        %v440 = vld [vmem:[#allocation2 + $0x60] sm:$0x1]
        %v441 = vsel %vm415, 0, %v440
        %442 = vst [vmem:[#allocation2 + $0x60] sm:$0x1] %v441
        %v443 = vld [vmem:[#allocation2 + $0x6c] sm:$0x1]
        %v444 = vsel %vm415, 0, %v443
        %445 = vst [vmem:[#allocation2 + $0x6c] sm:$0x1] %v444
        %vm446 = vsmask.f32 7938
        %vm447 = vmand %vm413, %vm446
        %v448 = vld [vmem:[#allocation2 + $0x8] sm:$0x1]
        %v449 = vsel %vm447, 0, %v448
        %450 = vst [vmem:[#allocation2 + $0x8] sm:$0x1] %v449
        %v451 = vld [vmem:[#allocation2 + $0x14] sm:$0x1]
        %v452 = vsel %vm447, 0, %v451
        %453 = vst [vmem:[#allocation2 + $0x14] sm:$0x1] %v452
        %v454 = vld [vmem:[#allocation2 + $0x20] sm:$0x1]
        %v455 = vsel %vm447, 0, %v454
        %456 = vst [vmem:[#allocation2 + $0x20] sm:$0x1] %v455
        %v457 = vld [vmem:[#allocation2 + $0x2c] sm:$0x1]
        %v458 = vsel %vm447, 0, %v457
        %459 = vst [vmem:[#allocation2 + $0x2c] sm:$0x1] %v458
        %v460 = vld [vmem:[#allocation2 + $0x38] sm:$0x1]
        %v461 = vsel %vm447, 0, %v460
        %462 = vst [vmem:[#allocation2 + $0x38] sm:$0x1] %v461
        %v463 = vld [vmem:[#allocation2 + $0x44] sm:$0x1]
        %v464 = vsel %vm447, 0, %v463
        %465 = vst [vmem:[#allocation2 + $0x44] sm:$0x1] %v464
        %v466 = vld [vmem:[#allocation2 + $0x50] sm:$0x1]
        %v467 = vsel %vm447, 0, %v466
        %468 = vst [vmem:[#allocation2 + $0x50] sm:$0x1] %v467
        %v469 = vld [vmem:[#allocation2 + $0x5c] sm:$0x1]
        %v470 = vsel %vm447, 0, %v469
        %471 = vst [vmem:[#allocation2 + $0x5c] sm:$0x1] %v470
        %v472 = vld [vmem:[#allocation2 + $0x68] sm:$0x1]
        %v473 = vsel %vm447, 0, %v472
        %474 = vst [vmem:[#allocation2 + $0x68] sm:$0x1] %v473
        %v475 = vld [vmem:[#allocation2 + $0x74] sm:$0x1]
        %v476 = vsel %vm447, 0, %v475
        %477 = vst [vmem:[#allocation2 + $0x74] sm:$0x1] %v476
        %v478 = vld [vmem:[%s327] sm:$0xf]
        %v479 = vld [vmem:[%s327 + $0x4] sm:$0xf]
        %v480 = vld [vmem:[%s327 + $0x8] sm:$0xf]
        %v481 = vld [vmem:[%s327 + $0xc] sm:$0xf]
        %v482 = vld [vmem:[%s327 + $0x10] sm:$0xf]
        %v483 = vld [vmem:[%s327 + $0x14] sm:$0xf]
        %v484 = vld [vmem:[%s327 + $0x18] sm:$0xf]
        %v485 = vld [vmem:[%s327 + $0x1c] sm:$0xf]
        %v486 = vld [vmem:[%s327 + $0x20] sm:$0xf]
        %v487 = vld [vmem:[%s327 + $0x24] sm:$0xf]
        %v488 = vld [vmem:[%s327 + $0x28] sm:$0xf]
        %v489 = vld [vmem:[%s327 + $0x2c] sm:$0xf]
        %v490 = vld [vmem:[%s327 + $0x30] sm:$0xf]
        %v491 = vld [vmem:[%s327 + $0x34] sm:$0xf]
        %v492 = vld [vmem:[%s327 + $0x38] sm:$0xf]
        %v493 = vld [vmem:[%s327 + $0x3c] sm:$0xf]
        %vm494 = vsmask.f32 4368
        %vm495 = vmor %vm414, %vm494
        %v497 = vshrl.u32 %v478, 16
        %v499 = vrot.slane %v497, 7
        %v500 = vshll.u32 %v478, 16
        %v502 = vor.u32 %v499, %v500
        %v503 = vrot.slane %v499, 4
        %v505 = vshrl.u32 %v479, 16
        %v507 = vrot.slane %v505, 7
        %v508 = vshll.u32 %v479, 16
        %v510 = vor.u32 %v507, %v508
        %v511 = vsel %vm495, %v503, %v510
        %v512 = vrot.slane %v507, 4
        %v514 = vshrl.u32 %v480, 16
        %v516 = vrot.slane %v514, 7
        %v517 = vshll.u32 %v480, 16
        %v519 = vor.u32 %v516, %v517
        %v520 = vrot.slane %v516, 4
        %v522 = vshrl.u32 %v481, 16
        %v524 = vrot.slane %v522, 7
        %v525 = vshll.u32 %v481, 16
        %v527 = vor.u32 %v524, %v525
        %v528 = vsel %vm495, %v520, %v527
        %v529 = vrot.slane %v524, 4
        %v531 = vshrl.u32 %v482, 16
        %v533 = vrot.slane %v531, 7
        %v534 = vshll.u32 %v482, 16
        %v536 = vor.u32 %v533, %v534
        %v537 = vrot.slane %v533, 4
        %v539 = vshrl.u32 %v483, 16
        %v541 = vrot.slane %v539, 7
        %v542 = vshll.u32 %v483, 16
        %v544 = vor.u32 %v541, %v542
        %v545 = vsel %vm495, %v537, %v544
        %v546 = vrot.slane %v541, 4
        %v548 = vshrl.u32 %v484, 16
        %v550 = vrot.slane %v548, 7
        %v551 = vshll.u32 %v484, 16
        %v553 = vor.u32 %v550, %v551
        %v554 = vrot.slane %v550, 4
        %v556 = vshrl.u32 %v485, 16
        %v558 = vrot.slane %v556, 7
        %v559 = vshll.u32 %v485, 16
        %v561 = vor.u32 %v558, %v559
        %v562 = vsel %vm495, %v554, %v561
        %v563 = vrot.slane %v558, 4
        %v565 = vshrl.u32 %v486, 16
        %v567 = vrot.slane %v565, 7
        %v568 = vshll.u32 %v486, 16
        %v570 = vor.u32 %v567, %v568
        %v571 = vrot.slane %v567, 4
        %v573 = vshrl.u32 %v487, 16
        %v575 = vrot.slane %v573, 7
        %v576 = vshll.u32 %v487, 16
        %v578 = vor.u32 %v575, %v576
        %v579 = vsel %vm495, %v571, %v578
        %v580 = vrot.slane %v575, 4
        %v582 = vshrl.u32 %v488, 16
        %v584 = vrot.slane %v582, 7
        %v585 = vshll.u32 %v488, 16
        %v587 = vor.u32 %v584, %v585
        %v588 = vrot.slane %v584, 4
        %v590 = vshrl.u32 %v489, 16
        %v592 = vrot.slane %v590, 7
        %v593 = vshll.u32 %v489, 16
        %v595 = vor.u32 %v592, %v593
        %v596 = vsel %vm495, %v588, %v595
        %v597 = vrot.slane %v592, 4
        %v599 = vshrl.u32 %v490, 16
        %v601 = vrot.slane %v599, 7
        %v602 = vshll.u32 %v490, 16
        %v604 = vor.u32 %v601, %v602
        %v605 = vrot.slane %v601, 4
        %v607 = vshrl.u32 %v491, 16
        %v609 = vrot.slane %v607, 7
        %v610 = vshll.u32 %v491, 16
        %v612 = vor.u32 %v609, %v610
        %v613 = vsel %vm495, %v605, %v612
        %v614 = vrot.slane %v609, 4
        %v616 = vshrl.u32 %v492, 16
        %v618 = vrot.slane %v616, 7
        %v619 = vshll.u32 %v492, 16
        %v621 = vor.u32 %v618, %v619
        %v622 = vrot.slane %v618, 4
        %v624 = vshrl.u32 %v493, 16
        %v626 = vrot.slane %v624, 7
        %v627 = vshll.u32 %v493, 16
        %v629 = vor.u32 %v626, %v627
        %v630 = vsel %vm495, %v622, %v629
        %v631 = vrot.slane %v626, 4
        %s656 = scalar_lea.vmem [#allocation2], 12
        %vm657 = vcmask 191488
        %vm658 = vmand %vm657, %vm446
        %v659 = vld [vmem:[%s656] sm:$0xf]
        %v660 = vsel %vm658, %v502, %v659
        %661 = vst [vmem:[%s656] sm:$0xf] %v660
        %vm662 = vcmask 191488
        %663 = vst.msk [vmem:[%s656 + $0x4] sm:$0xf] %vm662, %v511
        %v664 = vld [vmem:[%s656 + $0x8] sm:$0x1]
        %v665 = vsel %vm415, %v512, %v664
        %666 = vst [vmem:[%s656 + $0x8] sm:$0x1] %v665
        %v667 = vld [vmem:[%s656 + $0xc] sm:$0xf]
        %v668 = vsel %vm658, %v519, %v667
        %669 = vst [vmem:[%s656 + $0xc] sm:$0xf] %v668
        %670 = vst.msk [vmem:[%s656 + $0x10] sm:$0xf] %vm662, %v528
        %v671 = vld [vmem:[%s656 + $0x14] sm:$0x1]
        %v672 = vsel %vm415, %v529, %v671
        %673 = vst [vmem:[%s656 + $0x14] sm:$0x1] %v672
        %v674 = vld [vmem:[%s656 + $0x18] sm:$0xf]
        %v675 = vsel %vm658, %v536, %v674
        %676 = vst [vmem:[%s656 + $0x18] sm:$0xf] %v675
        %677 = vst.msk [vmem:[%s656 + $0x1c] sm:$0xf] %vm662, %v545
        %v678 = vld [vmem:[%s656 + $0x20] sm:$0x1]
        %v679 = vsel %vm415, %v546, %v678
        %680 = vst [vmem:[%s656 + $0x20] sm:$0x1] %v679
        %v681 = vld [vmem:[%s656 + $0x24] sm:$0xf]
        %v682 = vsel %vm658, %v553, %v681
        %683 = vst [vmem:[%s656 + $0x24] sm:$0xf] %v682
        %684 = vst.msk [vmem:[%s656 + $0x28] sm:$0xf] %vm662, %v562
        %v685 = vld [vmem:[%s656 + $0x2c] sm:$0x1]
        %v686 = vsel %vm415, %v563, %v685
        %687 = vst [vmem:[%s656 + $0x2c] sm:$0x1] %v686
        %v688 = vld [vmem:[%s656 + $0x30] sm:$0xf]
        %v689 = vsel %vm658, %v570, %v688
        %690 = vst [vmem:[%s656 + $0x30] sm:$0xf] %v689
        %691 = vst.msk [vmem:[%s656 + $0x34] sm:$0xf] %vm662, %v579
        %v692 = vld [vmem:[%s656 + $0x38] sm:$0x1]
        %v693 = vsel %vm415, %v580, %v692
        %694 = vst [vmem:[%s656 + $0x38] sm:$0x1] %v693
        %v695 = vld [vmem:[%s656 + $0x3c] sm:$0xf]
        %v696 = vsel %vm658, %v587, %v695
        %697 = vst [vmem:[%s656 + $0x3c] sm:$0xf] %v696
        %698 = vst.msk [vmem:[%s656 + $0x40] sm:$0xf] %vm662, %v596
        %v699 = vld [vmem:[%s656 + $0x44] sm:$0x1]
        %v700 = vsel %vm415, %v597, %v699
        %701 = vst [vmem:[%s656 + $0x44] sm:$0x1] %v700
        %v702 = vld [vmem:[%s656 + $0x48] sm:$0xf]
        %v703 = vsel %vm658, %v604, %v702
        %704 = vst [vmem:[%s656 + $0x48] sm:$0xf] %v703
        %705 = vst.msk [vmem:[%s656 + $0x4c] sm:$0xf] %vm662, %v613
        %v706 = vld [vmem:[%s656 + $0x50] sm:$0x1]
        %v707 = vsel %vm415, %v614, %v706
        %708 = vst [vmem:[%s656 + $0x50] sm:$0x1] %v707
        %v709 = vld [vmem:[%s656 + $0x54] sm:$0xf]
        %v710 = vsel %vm658, %v621, %v709
        %711 = vst [vmem:[%s656 + $0x54] sm:$0xf] %v710
        %712 = vst.msk [vmem:[%s656 + $0x58] sm:$0xf] %vm662, %v630
        %v713 = vld [vmem:[%s656 + $0x5c] sm:$0x1]
        %v714 = vsel %vm415, %v631, %v713
        %715 = vst [vmem:[%s656 + $0x5c] sm:$0x1] %v714
        %p716 = scmp.gt.s32.totalorder %s31, 0
        // Predicated region
        $region57: #{tpu_custom_call.1} parent=39 // pred_check
          %p717 = pneg %p716
        $region58: #{tpu_custom_call.1} parent=39 // pred_check_branch
          %719 = sbr.rel (%p717) target = $region60
        $region59: #{tpu_custom_call.1} parent=39 // pred_region
          %v720 = vld [vmem:[%s336] sm:$0xf]
          %v721 = vld [vmem:[%s336 + $0x4] sm:$0xf]
          %v723 = vshrl.u32 %v720, 16
          %v725 = vrot.slane %v723, 7
          %v726 = vshll.u32 %v720, 16
          %v728 = vor.u32 %v725, %v726
          %v729 = vrot.slane %v725, 4
          %v731 = vshrl.u32 %v721, 16
          %v733 = vrot.slane %v731, 7
          %v734 = vshll.u32 %v721, 16
          %v736 = vor.u32 %v733, %v734
          %v737 = vsel %vm495, %v729, %v736
          %v738 = vrot.slane %v733, 4
          %v742 = vld [vmem:[#allocation2] sm:$0xf]
          %v743 = vsel %vm658, %v728, %v742
          %744 = vst [vmem:[#allocation2] sm:$0xf] %v743
          %745 = vst.msk [vmem:[#allocation2 + $0x4] sm:$0xf] %vm662, %v737
          %v746 = vld [vmem:[#allocation2 + $0x8] sm:$0x1]
          %v747 = vsel %vm415, %v738, %v746
          %748 = vst [vmem:[#allocation2 + $0x8] sm:$0x1] %v747
        $region60: #{tpu_custom_call.1} parent=39 // pred_fallthru
          _
        %p749 = scmp.eq.s32.totalorder %s31, 0
        // Predicated region
        $region61: #{tpu_custom_call.1} parent=39 // pred_check
          %p750 = pneg %p749
        $region62: #{tpu_custom_call.1} parent=39 // pred_check_branch
          %752 = sbr.rel (%p750) target = $region64
        $region63: #{tpu_custom_call.1} parent=39 // pred_region
          %v753 = vld [vmem:[#allocation2] sm:$0xf]
          %v754 = vsel %vm658, 0, %v753
          %755 = vst [vmem:[#allocation2] sm:$0xf] %v754
          %756 = vst.msk [vmem:[#allocation2 + $0x4] sm:$0xf] %vm662, 0
          %v757 = vld [vmem:[#allocation2 + $0x8] sm:$0x1]
          %v758 = vsel %vm415, 0, %v757
          %759 = vst [vmem:[#allocation2 + $0x8] sm:$0x1] %v758
        $region64: #{tpu_custom_call.1} parent=39 // pred_fallthru
          _
        %p760 = scmp.lt.s32.totalorder %s31, 0
        // Predicated region
        $region65: #{tpu_custom_call.1} parent=39 // pred_check
          %p761 = pneg %p760
        $region66: #{tpu_custom_call.1} parent=39 // pred_check_branch
          %763 = sbr.rel (%p761) target = $region68
        $region67: #{tpu_custom_call.1} parent=39 // pred_region
          %v764 = vld [vmem:[%s345] sm:$0xf]
          %v765 = vld [vmem:[%s345 + $0x4] sm:$0xf]
          %v767 = vshrl.u32 %v764, 16
          %v769 = vrot.slane %v767, 7
          %v770 = vshll.u32 %v764, 16
          %v772 = vor.u32 %v769, %v770
          %v773 = vrot.slane %v769, 4
          %v775 = vshrl.u32 %v765, 16
          %v777 = vrot.slane %v775, 7
          %v778 = vshll.u32 %v765, 16
          %v780 = vor.u32 %v777, %v778
          %v781 = vsel %vm495, %v773, %v780
          %v782 = vrot.slane %v777, 4
          %s786 = scalar_lea.vmem [#allocation2], 108
          %v787 = vld [vmem:[%s786] sm:$0xf]
          %v788 = vsel %vm658, %v772, %v787
          %789 = vst [vmem:[%s786] sm:$0xf] %v788
          %790 = vst.msk [vmem:[%s786 + $0x4] sm:$0xf] %vm662, %v781
          %v791 = vld [vmem:[%s786 + $0x8] sm:$0x1]
          %v792 = vsel %vm415, %v782, %v791
          %793 = vst [vmem:[%s786 + $0x8] sm:$0x1] %v792
        $region68: #{tpu_custom_call.1} parent=39 // pred_fallthru
          _
        // Predicated region
        $region69: #{tpu_custom_call.1} parent=39 // pred_check
          %p794 = pneg %p749
        $region70: #{tpu_custom_call.1} parent=39 // pred_check_branch
          %796 = sbr.rel (%p794) target = $region72
        $region71: #{tpu_custom_call.1} parent=39 // pred_region
          %s797 = scalar_lea.vmem [#allocation2], 108
          %v798 = vld [vmem:[%s797] sm:$0xf]
          %v799 = vsel %vm658, 0, %v798
          %800 = vst [vmem:[%s797] sm:$0xf] %v799
          %801 = vst.msk [vmem:[%s797 + $0x4] sm:$0xf] %vm662, 0
          %v802 = vld [vmem:[%s797 + $0x8] sm:$0x1]
          %v803 = vsel %vm415, 0, %v802
          %804 = vst [vmem:[%s797 + $0x8] sm:$0x1] %v803
        $region72: #{tpu_custom_call.1} parent=39 // pred_fallthru
          _
        %v805 = vld [vmem:[#allocation2] sm:$0xf]
        %v806 = vld [vmem:[#allocation2 + $0x4] sm:$0xf]
        %v807 = vld [vmem:[#allocation2 + $0xc] sm:$0xf]
        %v808 = vld [vmem:[#allocation2 + $0x10] sm:$0xf]
        %v809 = vld [vmem:[#allocation2 + $0x18] sm:$0xf]
        %v810 = vld [vmem:[#allocation2 + $0x1c] sm:$0xf]
        %v811 = vld [vmem:[#allocation2 + $0x24] sm:$0xf]
        %v812 = vld [vmem:[#allocation2 + $0x28] sm:$0xf]
        %v813 = vld [vmem:[#allocation2 + $0x30] sm:$0xf]
        %v814 = vld [vmem:[#allocation2 + $0x34] sm:$0xf]
        %v815 = vld [vmem:[#allocation2 + $0x3c] sm:$0xf]
        %v816 = vld [vmem:[#allocation2 + $0x40] sm:$0xf]
        %v817 = vld [vmem:[#allocation2 + $0x48] sm:$0xf]
        %v818 = vld [vmem:[#allocation2 + $0x4c] sm:$0xf]
        %v819 = vld [vmem:[#allocation2 + $0x54] sm:$0xf]
        %v820 = vld [vmem:[#allocation2 + $0x58] sm:$0xf]
        %v821 = vld [vmem:[#allocation10] sm:$0xf]
        %v822 = vld [vmem:[#allocation10 + $0x4] sm:$0xf]
        %v823 = vld [vmem:[#allocation10 + $0x8] sm:$0xf]
        %v824 = vld [vmem:[#allocation3] sm:$0xff]
        %v825 = vld [vmem:[#allocation3 + $0x8] sm:$0xff]
        %v826 = vld [vmem:[#allocation3 + $0x10] sm:$0xff]
        %v827 = vld [vmem:[#allocation3 + $0x18] sm:$0xff]
        %v828 = vld [vmem:[#allocation3 + $0x20] sm:$0xff]
        %v829 = vld [vmem:[#allocation3 + $0x28] sm:$0xff]
        %v830 = vld [vmem:[#allocation3 + $0x30] sm:$0xff]
        %v831 = vld [vmem:[#allocation3 + $0x38] sm:$0xff]
        %v832 = vld [vmem:[#allocation3 + $0x40] sm:$0xff]
        %v833 = vld [vmem:[#allocation3 + $0x48] sm:$0xff]
        %v834 = vld [vmem:[#allocation3 + $0x50] sm:$0xff]
        %v835 = vld [vmem:[#allocation3 + $0x58] sm:$0xff]
        %v836 = vld [vmem:[#allocation3 + $0x60] sm:$0xff]
        %v837 = vld [vmem:[#allocation3 + $0x68] sm:$0xff]
        %v838 = vld [vmem:[#allocation3 + $0x70] sm:$0xff]
        %v839 = vld [vmem:[#allocation3 + $0x78] sm:$0xff]
        %v856 = vunpack.c.l.b16 %v805
        %v857 = vunpack.c.l.b16 %v806
        %v858 = vunpack.c.l.b16 %v807
        %v859 = vunpack.c.l.b16 %v808
        %v860 = vunpack.c.l.b16 %v809
        %v861 = vunpack.c.l.b16 %v810
        %v862 = vunpack.c.l.b16 %v811
        %v863 = vunpack.c.l.b16 %v812
        %v864 = vunpack.c.l.b16 %v813
        %v865 = vunpack.c.l.b16 %v814
        %v866 = vunpack.c.l.b16 %v815
        %v867 = vunpack.c.l.b16 %v816
        %v868 = vunpack.c.l.b16 %v817
        %v869 = vunpack.c.l.b16 %v818
        %v870 = vunpack.c.l.b16 %v819
        %v871 = vunpack.c.l.b16 %v820
        %v872 = vpack.c.b16 %v857, %v856
        %v873 = vpack.c.b16 %v859, %v858
        %v874 = vpack.c.b16 %v861, %v860
        %v875 = vpack.c.b16 %v863, %v862
        %v876 = vpack.c.b16 %v865, %v864
        %v877 = vpack.c.b16 %v867, %v866
        %v878 = vpack.c.b16 %v869, %v868
        %v879 = vpack.c.b16 %v871, %v870
        %v883 = vunpack.c.l.b16 %v821
        %v884 = vunpack.c.l.b16 %v822
        %v885 = vunpack.c.l.b16 %v823
        %v886 = vpack.c.b16 %v884, %v883
        %v887 = vpack.c.b16 %v885, %v885
        %vm889 = vcmask 195584
        %v891 = vsel %vm889, %v872, 0
        %v894 = vsel %vm889, %v873, 0
        %v897 = vsel %vm889, %v874, 0
        %v900 = vsel %vm889, %v875, 0
        %v903 = vsel %vm889, %v876, 0
        %v906 = vsel %vm889, %v877, 0
        %v909 = vsel %vm889, %v878, 0
        %v912 = vsel %vm889, %v879, 0
        %vm914 = vcmask 1043456
        %v916 = vsel %vm914, %v887, 0
        %918 = vmatprep.subr.bf16.mxu0 0
        %919 = vmatpush1.bf16.msra.mxu0 %v886
        %920 = vmatprep.subr.bf16.mxu0 0
        %921 = vmatpush1.bf16.msra.mxu0 %v916
        %922 = vmatprep.subr.bf16.mxu0 0
        %923 = vmatpush1.bf16.msra.mxu0 0
        %924 = vmatprep.subr.bf16.mxu0 0
        %925 = vmatpush1.bf16.msra.mxu0 0
        %926 = vmatprep.subr.bf16.mxu0 0
        %927 = vmatpush1.bf16.msra.mxu0 0
        %928 = vmatprep.subr.bf16.mxu0 0
        %929 = vmatpush1.bf16.msra.mxu0 0
        %930 = vmatprep.subr.bf16.mxu0 0
        %931 = vmatpush1.bf16.msra.mxu0 0
        %932 = vmatprep.subr.bf16.mxu0 0
        %933 = vmatpush1.bf16.msra.mxu0 0
        %934 = vmatprep.subr.bf16.mxu0 0
        %935 = vmatpush1.bf16.msra.mxu0 0
        %936 = vmatprep.subr.bf16.mxu0 0
        %937 = vmatpush1.bf16.msra.mxu0 0
        %938 = vmatprep.subr.bf16.mxu0 0
        %939 = vmatpush1.bf16.msra.mxu0 0
        %940 = vmatprep.subr.bf16.mxu0 0
        %941 = vmatpush1.bf16.msra.mxu0 0
        %942 = vmatprep.subr.bf16.mxu0 0
        %943 = vmatpush1.bf16.msra.mxu0 0
        %944 = vmatprep.subr.bf16.mxu0 0
        %945 = vmatpush1.bf16.msra.mxu0 0
        %946 = vmatprep.subr.bf16.mxu0 0
        %947 = vmatpush1.bf16.msra.mxu0 0
        %948 = vmatprep.subr.bf16.mxu0 0
        %949 = vmatpush1.bf16.msra.mxu0 0
        %950 = vmatprep.mubr.bf16.mxu0 0
        %951 = vmatmul.mubr.bf16.gmra.mrb[0].mxu0 %v891
        %v952 = vpop.f32.mrb[0].mxu0
        %v953 = vadd.f32 0.0, %v952
        %v954 = vpop.f32.mrb[0].mxu0
        %v955 = vpop.f32.mrb[0].mxu0
        %v956 = vadd.f32 0.0, %v955
        %v957 = vpop.f32.mrb[0].mxu0
        %958 = vmatprep.mubr.bf16.mxu0 0
        %959 = vmatmul.mubr.bf16.gmra.mrb[0].mxu0 %v894
        %v960 = vpop.f32.mrb[0].mxu0
        %v961 = vadd.f32 0.0, %v960
        %v962 = vpop.f32.mrb[0].mxu0
        %v963 = vpop.f32.mrb[0].mxu0
        %v964 = vadd.f32 0.0, %v963
        %v965 = vpop.f32.mrb[0].mxu0
        %966 = vmatprep.mubr.bf16.mxu0 0
        %967 = vmatmul.mubr.bf16.gmra.mrb[0].mxu0 %v897
        %v968 = vpop.f32.mrb[0].mxu0
        %v969 = vadd.f32 0.0, %v968
        %v970 = vpop.f32.mrb[0].mxu0
        %v971 = vpop.f32.mrb[0].mxu0
        %v972 = vadd.f32 0.0, %v971
        %v973 = vpop.f32.mrb[0].mxu0
        %974 = vmatprep.mubr.bf16.mxu0 0
        %975 = vmatmul.mubr.bf16.gmra.mrb[0].mxu0 %v900
        %v976 = vpop.f32.mrb[0].mxu0
        %v977 = vadd.f32 0.0, %v976
        %v978 = vpop.f32.mrb[0].mxu0
        %v979 = vpop.f32.mrb[0].mxu0
        %v980 = vadd.f32 0.0, %v979
        %v981 = vpop.f32.mrb[0].mxu0
        %982 = vmatprep.mubr.bf16.mxu0 0
        %983 = vmatmul.mubr.bf16.gmra.mrb[0].mxu0 %v903
        %v984 = vpop.f32.mrb[0].mxu0
        %v985 = vadd.f32 0.0, %v984
        %v986 = vpop.f32.mrb[0].mxu0
        %v987 = vpop.f32.mrb[0].mxu0
        %v988 = vadd.f32 0.0, %v987
        %v989 = vpop.f32.mrb[0].mxu0
        %990 = vmatprep.mubr.bf16.mxu0 0
        %991 = vmatmul.mubr.bf16.gmra.mrb[0].mxu0 %v906
        %v992 = vpop.f32.mrb[0].mxu0
        %v993 = vadd.f32 0.0, %v992
        %v994 = vpop.f32.mrb[0].mxu0
        %v995 = vpop.f32.mrb[0].mxu0
        %v996 = vadd.f32 0.0, %v995
        %v997 = vpop.f32.mrb[0].mxu0
        %998 = vmatprep.mubr.bf16.mxu0 0
        %999 = vmatmul.mubr.bf16.gmra.mrb[0].mxu0 %v909
        %v1000 = vpop.f32.mrb[0].mxu0
        %v1001 = vadd.f32 0.0, %v1000
        %v1002 = vpop.f32.mrb[0].mxu0
        %v1003 = vpop.f32.mrb[0].mxu0
        %v1004 = vadd.f32 0.0, %v1003
        %v1005 = vpop.f32.mrb[0].mxu0
        %1006 = vmatprep.mubr.bf16.mxu0 0
        %1007 = vmatmul.mubr.bf16.gmra.mrb[0].mxu0 %v912
        %v1008 = vpop.f32.mrb[0].mxu0
        %v1009 = vadd.f32 0.0, %v1008
        %v1010 = vpop.f32.mrb[0].mxu0
        %v1011 = vpop.f32.mrb[0].mxu0
        %v1012 = vadd.f32 0.0, %v1011
        %v1013 = vpop.f32.mrb[0].mxu0
        %1014 = vdwg.mxu0
        %v1015 = vadd.f32 %v824, %v953
        %v1016 = vadd.f32 %v825, %v956
        %v1017 = vadd.f32 %v826, %v961
        %v1018 = vadd.f32 %v827, %v964
        %v1019 = vadd.f32 %v828, %v969
        %v1020 = vadd.f32 %v829, %v972
        %v1021 = vadd.f32 %v830, %v977
        %v1022 = vadd.f32 %v831, %v980
        %v1023 = vadd.f32 %v832, %v985
        %v1024 = vadd.f32 %v833, %v988
        %v1025 = vadd.f32 %v834, %v993
        %v1026 = vadd.f32 %v835, %v996
        %v1027 = vadd.f32 %v836, %v1001
        %v1028 = vadd.f32 %v837, %v1004
        %v1029 = vadd.f32 %v838, %v1009
        %v1030 = vadd.f32 %v839, %v1012
        %1031 = vst [vmem:[#allocation3] sm:$0xff] %v1015
        %1032 = vst [vmem:[#allocation3 + $0x8] sm:$0xff] %v1016
        %1033 = vst [vmem:[#allocation3 + $0x10] sm:$0xff] %v1017
        %1034 = vst [vmem:[#allocation3 + $0x18] sm:$0xff] %v1018
        %1035 = vst [vmem:[#allocation3 + $0x20] sm:$0xff] %v1019
        %1036 = vst [vmem:[#allocation3 + $0x28] sm:$0xff] %v1020
        %1037 = vst [vmem:[#allocation3 + $0x30] sm:$0xff] %v1021
        %1038 = vst [vmem:[#allocation3 + $0x38] sm:$0xff] %v1022
        %1039 = vst [vmem:[#allocation3 + $0x40] sm:$0xff] %v1023
        %1040 = vst [vmem:[#allocation3 + $0x48] sm:$0xff] %v1024
        %1041 = vst [vmem:[#allocation3 + $0x50] sm:$0xff] %v1025
        %1042 = vst [vmem:[#allocation3 + $0x58] sm:$0xff] %v1026
        %1043 = vst [vmem:[#allocation3 + $0x60] sm:$0xff] %v1027
        %1044 = vst [vmem:[#allocation3 + $0x68] sm:$0xff] %v1028
        %1045 = vst [vmem:[#allocation3 + $0x70] sm:$0xff] %v1029
        %1046 = vst [vmem:[#allocation3 + $0x78] sm:$0xff] %v1030
        %v1047 = vld [vmem:[#allocation2] sm:$0xf]
        %v1048 = vld [vmem:[#allocation2 + $0x4] sm:$0xf]
        %v1049 = vld [vmem:[#allocation2 + $0x8] sm:$0x1]
        %v1050 = vld [vmem:[#allocation2 + $0xc] sm:$0xf]
        %v1051 = vld [vmem:[#allocation2 + $0x10] sm:$0xf]
        %v1052 = vld [vmem:[#allocation2 + $0x14] sm:$0x1]
        %v1053 = vld [vmem:[#allocation2 + $0x18] sm:$0xf]
        %v1054 = vld [vmem:[#allocation2 + $0x1c] sm:$0xf]
        %v1055 = vld [vmem:[#allocation2 + $0x20] sm:$0x1]
        %v1056 = vld [vmem:[#allocation2 + $0x24] sm:$0xf]
        %v1057 = vld [vmem:[#allocation2 + $0x28] sm:$0xf]
        %v1058 = vld [vmem:[#allocation2 + $0x2c] sm:$0x1]
        %v1059 = vld [vmem:[#allocation2 + $0x30] sm:$0xf]
        %v1060 = vld [vmem:[#allocation2 + $0x34] sm:$0xf]
        %v1061 = vld [vmem:[#allocation2 + $0x38] sm:$0x1]
        %v1062 = vld [vmem:[#allocation2 + $0x3c] sm:$0xf]
        %v1063 = vld [vmem:[#allocation2 + $0x40] sm:$0xf]
        %v1064 = vld [vmem:[#allocation2 + $0x44] sm:$0x1]
        %v1065 = vld [vmem:[#allocation2 + $0x48] sm:$0xf]
        %v1066 = vld [vmem:[#allocation2 + $0x4c] sm:$0xf]
        %v1067 = vld [vmem:[#allocation2 + $0x50] sm:$0x1]
        %v1068 = vld [vmem:[#allocation2 + $0x54] sm:$0xf]
        %v1069 = vld [vmem:[#allocation2 + $0x58] sm:$0xf]
        %v1070 = vld [vmem:[#allocation2 + $0x5c] sm:$0x1]
        %vm1071 = vsmask.f32 3328
        %vm1072 = vsmask.f32 7440
        %vm1073 = vmor %vm1071, %vm1072
        %v1075 = vshrl.u32 %v1047, 16
        %v1077 = vrot.slane %v1075, 4
        %v1078 = vshll.u32 %v1047, 16
        %v1080 = vrot.slane %v1078, 5
        %v1081 = vor.u32 %v1077, %v1080
        %v1082 = vrot.slane %v1081, 4
        %v1084 = vshll.u32 %v1048, 16
        %v1086 = vrot.slane %v1084, 5
        %v1087 = vsel %vm1073, %v1082, %v1086
        %v1088 = vshrl.u32 %v1048, 16
        %v1090 = vrot.slane %v1088, 4
        %v1091 = vor.u32 %v1090, %v1086
        %v1092 = vrot.slane %v1091, 4
        %v1094 = vshll.u32 %v1049, 16
        %v1096 = vrot.slane %v1094, 5
        %v1097 = vsel %vm1073, %v1092, %v1096
        %v1099 = vshrl.u32 %v1050, 16
        %v1101 = vrot.slane %v1099, 4
        %v1102 = vshll.u32 %v1050, 16
        %v1104 = vrot.slane %v1102, 5
        %v1105 = vor.u32 %v1101, %v1104
        %v1106 = vrot.slane %v1105, 4
        %v1108 = vshll.u32 %v1051, 16
        %v1110 = vrot.slane %v1108, 5
        %v1111 = vsel %vm1073, %v1106, %v1110
        %v1112 = vshrl.u32 %v1051, 16
        %v1114 = vrot.slane %v1112, 4
        %v1115 = vor.u32 %v1114, %v1110
        %v1116 = vrot.slane %v1115, 4
        %v1118 = vshll.u32 %v1052, 16
        %v1120 = vrot.slane %v1118, 5
        %v1121 = vsel %vm1073, %v1116, %v1120
        %v1123 = vshrl.u32 %v1053, 16
        %v1125 = vrot.slane %v1123, 4
        %v1126 = vshll.u32 %v1053, 16
        %v1128 = vrot.slane %v1126, 5
        %v1129 = vor.u32 %v1125, %v1128
        %v1130 = vrot.slane %v1129, 4
        %v1132 = vshll.u32 %v1054, 16
        %v1134 = vrot.slane %v1132, 5
        %v1135 = vsel %vm1073, %v1130, %v1134
        %v1136 = vshrl.u32 %v1054, 16
        %v1138 = vrot.slane %v1136, 4
        %v1139 = vor.u32 %v1138, %v1134
        %v1140 = vrot.slane %v1139, 4
        %v1142 = vshll.u32 %v1055, 16
        %v1144 = vrot.slane %v1142, 5
        %v1145 = vsel %vm1073, %v1140, %v1144
        %v1147 = vshrl.u32 %v1056, 16
        %v1149 = vrot.slane %v1147, 4
        %v1150 = vshll.u32 %v1056, 16
        %v1152 = vrot.slane %v1150, 5
        %v1153 = vor.u32 %v1149, %v1152
        %v1154 = vrot.slane %v1153, 4
        %v1156 = vshll.u32 %v1057, 16
        %v1158 = vrot.slane %v1156, 5
        %v1159 = vsel %vm1073, %v1154, %v1158
        %v1160 = vshrl.u32 %v1057, 16
        %v1162 = vrot.slane %v1160, 4
        %v1163 = vor.u32 %v1162, %v1158
        %v1164 = vrot.slane %v1163, 4
        %v1166 = vshll.u32 %v1058, 16
        %v1168 = vrot.slane %v1166, 5
        %v1169 = vsel %vm1073, %v1164, %v1168
        %v1171 = vshrl.u32 %v1059, 16
        %v1173 = vrot.slane %v1171, 4
        %v1174 = vshll.u32 %v1059, 16
        %v1176 = vrot.slane %v1174, 5
        %v1177 = vor.u32 %v1173, %v1176
        %v1178 = vrot.slane %v1177, 4
        %v1180 = vshll.u32 %v1060, 16
        %v1182 = vrot.slane %v1180, 5
        %v1183 = vsel %vm1073, %v1178, %v1182
        %v1184 = vshrl.u32 %v1060, 16
        %v1186 = vrot.slane %v1184, 4
        %v1187 = vor.u32 %v1186, %v1182
        %v1188 = vrot.slane %v1187, 4
        %v1190 = vshll.u32 %v1061, 16
        %v1192 = vrot.slane %v1190, 5
        %v1193 = vsel %vm1073, %v1188, %v1192
        %v1195 = vshrl.u32 %v1062, 16
        %v1197 = vrot.slane %v1195, 4
        %v1198 = vshll.u32 %v1062, 16
        %v1200 = vrot.slane %v1198, 5
        %v1201 = vor.u32 %v1197, %v1200
        %v1202 = vrot.slane %v1201, 4
        %v1204 = vshll.u32 %v1063, 16
        %v1206 = vrot.slane %v1204, 5
        %v1207 = vsel %vm1073, %v1202, %v1206
        %v1208 = vshrl.u32 %v1063, 16
        %v1210 = vrot.slane %v1208, 4
        %v1211 = vor.u32 %v1210, %v1206
        %v1212 = vrot.slane %v1211, 4
        %v1214 = vshll.u32 %v1064, 16
        %v1216 = vrot.slane %v1214, 5
        %v1217 = vsel %vm1073, %v1212, %v1216
        %v1219 = vshrl.u32 %v1065, 16
        %v1221 = vrot.slane %v1219, 4
        %v1222 = vshll.u32 %v1065, 16
        %v1224 = vrot.slane %v1222, 5
        %v1225 = vor.u32 %v1221, %v1224
        %v1226 = vrot.slane %v1225, 4
        %v1228 = vshll.u32 %v1066, 16
        %v1230 = vrot.slane %v1228, 5
        %v1231 = vsel %vm1073, %v1226, %v1230
        %v1232 = vshrl.u32 %v1066, 16
        %v1234 = vrot.slane %v1232, 4
        %v1235 = vor.u32 %v1234, %v1230
        %v1236 = vrot.slane %v1235, 4
        %v1238 = vshll.u32 %v1067, 16
        %v1240 = vrot.slane %v1238, 5
        %v1241 = vsel %vm1073, %v1236, %v1240
        %v1243 = vshrl.u32 %v1068, 16
        %v1245 = vrot.slane %v1243, 4
        %v1246 = vshll.u32 %v1068, 16
        %v1248 = vrot.slane %v1246, 5
        %v1249 = vor.u32 %v1245, %v1248
        %v1250 = vrot.slane %v1249, 4
        %v1252 = vshll.u32 %v1069, 16
        %v1254 = vrot.slane %v1252, 5
        %v1255 = vsel %vm1073, %v1250, %v1254
        %v1256 = vshrl.u32 %v1069, 16
        %v1258 = vrot.slane %v1256, 4
        %v1259 = vor.u32 %v1258, %v1254
        %v1260 = vrot.slane %v1259, 4
        %v1262 = vshll.u32 %v1070, 16
        %v1264 = vrot.slane %v1262, 5
        %v1265 = vsel %vm1073, %v1260, %v1264
        %v1266 = vld [vmem:[#allocation10 + $0xc] sm:$0xf]
        %v1267 = vld [vmem:[#allocation10 + $0x10] sm:$0xf]
        %v1268 = vld [vmem:[#allocation10 + $0x14] sm:$0xf]
        %v1269 = vld [vmem:[#allocation3] sm:$0xff]
        %v1270 = vld [vmem:[#allocation3 + $0x8] sm:$0xff]
        %v1271 = vld [vmem:[#allocation3 + $0x10] sm:$0xff]
        %v1272 = vld [vmem:[#allocation3 + $0x18] sm:$0xff]
        %v1273 = vld [vmem:[#allocation3 + $0x20] sm:$0xff]
        %v1274 = vld [vmem:[#allocation3 + $0x28] sm:$0xff]
        %v1275 = vld [vmem:[#allocation3 + $0x30] sm:$0xff]
        %v1276 = vld [vmem:[#allocation3 + $0x38] sm:$0xff]
        %v1277 = vld [vmem:[#allocation3 + $0x40] sm:$0xff]
        %v1278 = vld [vmem:[#allocation3 + $0x48] sm:$0xff]
        %v1279 = vld [vmem:[#allocation3 + $0x50] sm:$0xff]
        %v1280 = vld [vmem:[#allocation3 + $0x58] sm:$0xff]
        %v1281 = vld [vmem:[#allocation3 + $0x60] sm:$0xff]
        %v1282 = vld [vmem:[#allocation3 + $0x68] sm:$0xff]
        %v1283 = vld [vmem:[#allocation3 + $0x70] sm:$0xff]
        %v1284 = vld [vmem:[#allocation3 + $0x78] sm:$0xff]
        %v1285 = vunpack.c.l.b16 %v1087
        %v1286 = vunpack.c.l.b16 %v1097
        %v1287 = vunpack.c.l.b16 %v1111
        %v1288 = vunpack.c.l.b16 %v1121
        %v1289 = vunpack.c.l.b16 %v1135
        %v1290 = vunpack.c.l.b16 %v1145
        %v1291 = vunpack.c.l.b16 %v1159
        %v1292 = vunpack.c.l.b16 %v1169
        %v1293 = vunpack.c.l.b16 %v1183
        %v1294 = vunpack.c.l.b16 %v1193
        %v1295 = vunpack.c.l.b16 %v1207
        %v1296 = vunpack.c.l.b16 %v1217
        %v1297 = vunpack.c.l.b16 %v1231
        %v1298 = vunpack.c.l.b16 %v1241
        %v1299 = vunpack.c.l.b16 %v1255
        %v1300 = vunpack.c.l.b16 %v1265
        %v1301 = vpack.c.b16 %v1286, %v1285
        %v1302 = vpack.c.b16 %v1288, %v1287
        %v1303 = vpack.c.b16 %v1290, %v1289
        %v1304 = vpack.c.b16 %v1292, %v1291
        %v1305 = vpack.c.b16 %v1294, %v1293
        %v1306 = vpack.c.b16 %v1296, %v1295
        %v1307 = vpack.c.b16 %v1298, %v1297
        %v1308 = vpack.c.b16 %v1300, %v1299
        %v1312 = vunpack.c.l.b16 %v1266
        %v1313 = vunpack.c.l.b16 %v1267
        %v1314 = vunpack.c.l.b16 %v1268
        %v1315 = vpack.c.b16 %v1313, %v1312
        %v1316 = vpack.c.b16 %v1314, %v1314
        %v1319 = vsel %vm889, %v1301, 0
        %v1322 = vsel %vm889, %v1302, 0
        %v1325 = vsel %vm889, %v1303, 0
        %v1328 = vsel %vm889, %v1304, 0
        %v1331 = vsel %vm889, %v1305, 0
        %v1334 = vsel %vm889, %v1306, 0
        %v1337 = vsel %vm889, %v1307, 0
        %v1340 = vsel %vm889, %v1308, 0
        %v1343 = vsel %vm914, %v1316, 0
        %1345 = vmatprep.subr.bf16.mxu0 0
        %1346 = vmatpush1.bf16.msra.mxu0 %v1315
        %1347 = vmatprep.subr.bf16.mxu0 0
        %1348 = vmatpush1.bf16.msra.mxu0 %v1343
        %1349 = vmatprep.subr.bf16.mxu0 0
        %1350 = vmatpush1.bf16.msra.mxu0 0
        %1351 = vmatprep.subr.bf16.mxu0 0
        %1352 = vmatpush1.bf16.msra.mxu0 0
        %1353 = vmatprep.subr.bf16.mxu0 0
        %1354 = vmatpush1.bf16.msra.mxu0 0
        %1355 = vmatprep.subr.bf16.mxu0 0
        %1356 = vmatpush1.bf16.msra.mxu0 0
        %1357 = vmatprep.subr.bf16.mxu0 0
        %1358 = vmatpush1.bf16.msra.mxu0 0
        %1359 = vmatprep.subr.bf16.mxu0 0
        %1360 = vmatpush1.bf16.msra.mxu0 0
        %1361 = vmatprep.subr.bf16.mxu0 0
        %1362 = vmatpush1.bf16.msra.mxu0 0
        %1363 = vmatprep.subr.bf16.mxu0 0
        %1364 = vmatpush1.bf16.msra.mxu0 0
        %1365 = vmatprep.subr.bf16.mxu0 0
        %1366 = vmatpush1.bf16.msra.mxu0 0
        %1367 = vmatprep.subr.bf16.mxu0 0
        %1368 = vmatpush1.bf16.msra.mxu0 0
        %1369 = vmatprep.subr.bf16.mxu0 0
        %1370 = vmatpush1.bf16.msra.mxu0 0
        %1371 = vmatprep.subr.bf16.mxu0 0
        %1372 = vmatpush1.bf16.msra.mxu0 0
        %1373 = vmatprep.subr.bf16.mxu0 0
        %1374 = vmatpush1.bf16.msra.mxu0 0
        %1375 = vmatprep.subr.bf16.mxu0 0
        %1376 = vmatpush1.bf16.msra.mxu0 0
        %1377 = vmatprep.mubr.bf16.mxu0 0
        %1378 = vmatmul.mubr.bf16.gmra.mrb[0].mxu0 %v1319
        %v1379 = vpop.f32.mrb[0].mxu0
        %v1380 = vadd.f32 0.0, %v1379
        %v1381 = vpop.f32.mrb[0].mxu0
        %v1382 = vpop.f32.mrb[0].mxu0
        %v1383 = vadd.f32 0.0, %v1382
        %v1384 = vpop.f32.mrb[0].mxu0
        %1385 = vmatprep.mubr.bf16.mxu0 0
        %1386 = vmatmul.mubr.bf16.gmra.mrb[0].mxu0 %v1322
        %v1387 = vpop.f32.mrb[0].mxu0
        %v1388 = vadd.f32 0.0, %v1387
        %v1389 = vpop.f32.mrb[0].mxu0
        %v1390 = vpop.f32.mrb[0].mxu0
        %v1391 = vadd.f32 0.0, %v1390
        %v1392 = vpop.f32.mrb[0].mxu0
        %1393 = vmatprep.mubr.bf16.mxu0 0
        %1394 = vmatmul.mubr.bf16.gmra.mrb[0].mxu0 %v1325
        %v1395 = vpop.f32.mrb[0].mxu0
        %v1396 = vadd.f32 0.0, %v1395
        %v1397 = vpop.f32.mrb[0].mxu0
        %v1398 = vpop.f32.mrb[0].mxu0
        %v1399 = vadd.f32 0.0, %v1398
        %v1400 = vpop.f32.mrb[0].mxu0
        %1401 = vmatprep.mubr.bf16.mxu0 0
        %1402 = vmatmul.mubr.bf16.gmra.mrb[0].mxu0 %v1328
        %v1403 = vpop.f32.mrb[0].mxu0
        %v1404 = vadd.f32 0.0, %v1403
        %v1405 = vpop.f32.mrb[0].mxu0
        %v1406 = vpop.f32.mrb[0].mxu0
        %v1407 = vadd.f32 0.0, %v1406
        %v1408 = vpop.f32.mrb[0].mxu0
        %1409 = vmatprep.mubr.bf16.mxu0 0
        %1410 = vmatmul.mubr.bf16.gmra.mrb[0].mxu0 %v1331
        %v1411 = vpop.f32.mrb[0].mxu0
        %v1412 = vadd.f32 0.0, %v1411
        %v1413 = vpop.f32.mrb[0].mxu0
        %v1414 = vpop.f32.mrb[0].mxu0
        %v1415 = vadd.f32 0.0, %v1414
        %v1416 = vpop.f32.mrb[0].mxu0
        %1417 = vmatprep.mubr.bf16.mxu0 0
        %1418 = vmatmul.mubr.bf16.gmra.mrb[0].mxu0 %v1334
        %v1419 = vpop.f32.mrb[0].mxu0
        %v1420 = vadd.f32 0.0, %v1419
        %v1421 = vpop.f32.mrb[0].mxu0
        %v1422 = vpop.f32.mrb[0].mxu0
        %v1423 = vadd.f32 0.0, %v1422
        %v1424 = vpop.f32.mrb[0].mxu0
        %1425 = vmatprep.mubr.bf16.mxu0 0
        %1426 = vmatmul.mubr.bf16.gmra.mrb[0].mxu0 %v1337
        %v1427 = vpop.f32.mrb[0].mxu0
        %v1428 = vadd.f32 0.0, %v1427
        %v1429 = vpop.f32.mrb[0].mxu0
        %v1430 = vpop.f32.mrb[0].mxu0
        %v1431 = vadd.f32 0.0, %v1430
        %v1432 = vpop.f32.mrb[0].mxu0
        %1433 = vmatprep.mubr.bf16.mxu0 0
        %1434 = vmatmul.mubr.bf16.gmra.mrb[0].mxu0 %v1340
        %v1435 = vpop.f32.mrb[0].mxu0
        %v1436 = vadd.f32 0.0, %v1435
        %v1437 = vpop.f32.mrb[0].mxu0
        %v1438 = vpop.f32.mrb[0].mxu0
        %v1439 = vadd.f32 0.0, %v1438
        %v1440 = vpop.f32.mrb[0].mxu0
        %1441 = vdwg.mxu0
        %v1442 = vadd.f32 %v1269, %v1380
        %v1443 = vadd.f32 %v1270, %v1383
        %v1444 = vadd.f32 %v1271, %v1388
        %v1445 = vadd.f32 %v1272, %v1391
        %v1446 = vadd.f32 %v1273, %v1396
        %v1447 = vadd.f32 %v1274, %v1399
        %v1448 = vadd.f32 %v1275, %v1404
        %v1449 = vadd.f32 %v1276, %v1407
        %v1450 = vadd.f32 %v1277, %v1412
        %v1451 = vadd.f32 %v1278, %v1415
        %v1452 = vadd.f32 %v1279, %v1420
        %v1453 = vadd.f32 %v1280, %v1423
        %v1454 = vadd.f32 %v1281, %v1428
        %v1455 = vadd.f32 %v1282, %v1431
        %v1456 = vadd.f32 %v1283, %v1436
        %v1457 = vadd.f32 %v1284, %v1439
        %1458 = vst [vmem:[#allocation3] sm:$0xff] %v1442
        %1459 = vst [vmem:[#allocation3 + $0x8] sm:$0xff] %v1443
        %1460 = vst [vmem:[#allocation3 + $0x10] sm:$0xff] %v1444
        %1461 = vst [vmem:[#allocation3 + $0x18] sm:$0xff] %v1445
        %1462 = vst [vmem:[#allocation3 + $0x20] sm:$0xff] %v1446
        %1463 = vst [vmem:[#allocation3 + $0x28] sm:$0xff] %v1447
        %1464 = vst [vmem:[#allocation3 + $0x30] sm:$0xff] %v1448
        %1465 = vst [vmem:[#allocation3 + $0x38] sm:$0xff] %v1449
        %1466 = vst [vmem:[#allocation3 + $0x40] sm:$0xff] %v1450
        %1467 = vst [vmem:[#allocation3 + $0x48] sm:$0xff] %v1451
        %1468 = vst [vmem:[#allocation3 + $0x50] sm:$0xff] %v1452
        %1469 = vst [vmem:[#allocation3 + $0x58] sm:$0xff] %v1453
        %1470 = vst [vmem:[#allocation3 + $0x60] sm:$0xff] %v1454
        %1471 = vst [vmem:[#allocation3 + $0x68] sm:$0xff] %v1455
        %1472 = vst [vmem:[#allocation3 + $0x70] sm:$0xff] %v1456
        %1473 = vst [vmem:[#allocation3 + $0x78] sm:$0xff] %v1457
        %v1474 = vld [vmem:[#allocation2] sm:$0xe]
        %v1475 = vld [vmem:[#allocation2 + $0x4] sm:$0xf]
        %v1476 = vld [vmem:[#allocation2 + $0x8] sm:$0x1]
        %v1477 = vld [vmem:[#allocation2 + $0xc] sm:$0xe]
        %v1478 = vld [vmem:[#allocation2 + $0x10] sm:$0xf]
        %v1479 = vld [vmem:[#allocation2 + $0x14] sm:$0x1]
        %v1480 = vld [vmem:[#allocation2 + $0x18] sm:$0xe]
        %v1481 = vld [vmem:[#allocation2 + $0x1c] sm:$0xf]
        %v1482 = vld [vmem:[#allocation2 + $0x20] sm:$0x1]
        %v1483 = vld [vmem:[#allocation2 + $0x24] sm:$0xe]
        %v1484 = vld [vmem:[#allocation2 + $0x28] sm:$0xf]
        %v1485 = vld [vmem:[#allocation2 + $0x2c] sm:$0x1]
        %v1486 = vld [vmem:[#allocation2 + $0x30] sm:$0xe]
        %v1487 = vld [vmem:[#allocation2 + $0x34] sm:$0xf]
        %v1488 = vld [vmem:[#allocation2 + $0x38] sm:$0x1]
        %v1489 = vld [vmem:[#allocation2 + $0x3c] sm:$0xe]
        %v1490 = vld [vmem:[#allocation2 + $0x40] sm:$0xf]
        %v1491 = vld [vmem:[#allocation2 + $0x44] sm:$0x1]
        %v1492 = vld [vmem:[#allocation2 + $0x48] sm:$0xe]
        %v1493 = vld [vmem:[#allocation2 + $0x4c] sm:$0xf]
        %v1494 = vld [vmem:[#allocation2 + $0x50] sm:$0x1]
        %v1495 = vld [vmem:[#allocation2 + $0x54] sm:$0xe]
        %v1496 = vld [vmem:[#allocation2 + $0x58] sm:$0xf]
        %v1497 = vld [vmem:[#allocation2 + $0x5c] sm:$0x1]
        %vm1522 = vcmask 1042432
        %vm1523 = vcmask 1046532
        %vm1524 = vmor %vm1522, %vm1523
        %v1525 = vrot.slane %v1474, 5
        %v1526 = vrot.slane %v1525, 4
        %v1527 = vrot.slane %v1475, 5
        %v1528 = vsel %vm1524, %v1526, %v1527
        %v1529 = vrot.slane %v1527, 4
        %v1530 = vrot.slane %v1476, 5
        %v1531 = vsel %vm1524, %v1529, %v1530
        %v1532 = vrot.slane %v1477, 5
        %v1533 = vrot.slane %v1532, 4
        %v1534 = vrot.slane %v1478, 5
        %v1535 = vsel %vm1524, %v1533, %v1534
        %v1536 = vrot.slane %v1534, 4
        %v1537 = vrot.slane %v1479, 5
        %v1538 = vsel %vm1524, %v1536, %v1537
        %v1539 = vrot.slane %v1480, 5
        %v1540 = vrot.slane %v1539, 4
        %v1541 = vrot.slane %v1481, 5
        %v1542 = vsel %vm1524, %v1540, %v1541
        %v1543 = vrot.slane %v1541, 4
        %v1544 = vrot.slane %v1482, 5
        %v1545 = vsel %vm1524, %v1543, %v1544
        %v1546 = vrot.slane %v1483, 5
        %v1547 = vrot.slane %v1546, 4
        %v1548 = vrot.slane %v1484, 5
        %v1549 = vsel %vm1524, %v1547, %v1548
        %v1550 = vrot.slane %v1548, 4
        %v1551 = vrot.slane %v1485, 5
        %v1552 = vsel %vm1524, %v1550, %v1551
        %v1553 = vrot.slane %v1486, 5
        %v1554 = vrot.slane %v1553, 4
        %v1555 = vrot.slane %v1487, 5
        %v1556 = vsel %vm1524, %v1554, %v1555
        %v1557 = vrot.slane %v1555, 4
        %v1558 = vrot.slane %v1488, 5
        %v1559 = vsel %vm1524, %v1557, %v1558
        %v1560 = vrot.slane %v1489, 5
        %v1561 = vrot.slane %v1560, 4
        %v1562 = vrot.slane %v1490, 5
        %v1563 = vsel %vm1524, %v1561, %v1562
        %v1564 = vrot.slane %v1562, 4
        %v1565 = vrot.slane %v1491, 5
        %v1566 = vsel %vm1524, %v1564, %v1565
        %v1567 = vrot.slane %v1492, 5
        %v1568 = vrot.slane %v1567, 4
        %v1569 = vrot.slane %v1493, 5
        %v1570 = vsel %vm1524, %v1568, %v1569
        %v1571 = vrot.slane %v1569, 4
        %v1572 = vrot.slane %v1494, 5
        %v1573 = vsel %vm1524, %v1571, %v1572
        %v1574 = vrot.slane %v1495, 5
        %v1575 = vrot.slane %v1574, 4
        %v1576 = vrot.slane %v1496, 5
        %v1577 = vsel %vm1524, %v1575, %v1576
        %v1578 = vrot.slane %v1576, 4
        %v1579 = vrot.slane %v1497, 5
        %v1580 = vsel %vm1524, %v1578, %v1579
        %v1581 = vld [vmem:[#allocation10 + $0x18] sm:$0xf]
        %v1582 = vld [vmem:[#allocation10 + $0x1c] sm:$0xf]
        %v1583 = vld [vmem:[#allocation10 + $0x20] sm:$0xf]
        %v1584 = vld [vmem:[#allocation3] sm:$0xff]
        %v1585 = vld [vmem:[#allocation3 + $0x8] sm:$0xff]
        %v1586 = vld [vmem:[#allocation3 + $0x10] sm:$0xff]
        %v1587 = vld [vmem:[#allocation3 + $0x18] sm:$0xff]
        %v1588 = vld [vmem:[#allocation3 + $0x20] sm:$0xff]
        %v1589 = vld [vmem:[#allocation3 + $0x28] sm:$0xff]
        %v1590 = vld [vmem:[#allocation3 + $0x30] sm:$0xff]
        %v1591 = vld [vmem:[#allocation3 + $0x38] sm:$0xff]
        %v1592 = vld [vmem:[#allocation3 + $0x40] sm:$0xff]
        %v1593 = vld [vmem:[#allocation3 + $0x48] sm:$0xff]
        %v1594 = vld [vmem:[#allocation3 + $0x50] sm:$0xff]
        %v1595 = vld [vmem:[#allocation3 + $0x58] sm:$0xff]
        %v1596 = vld [vmem:[#allocation3 + $0x60] sm:$0xff]
        %v1597 = vld [vmem:[#allocation3 + $0x68] sm:$0xff]
        %v1598 = vld [vmem:[#allocation3 + $0x70] sm:$0xff]
        %v1599 = vld [vmem:[#allocation3 + $0x78] sm:$0xff]
        %v1600 = vunpack.c.l.b16 %v1528
        %v1601 = vunpack.c.l.b16 %v1531
        %v1602 = vunpack.c.l.b16 %v1535
        %v1603 = vunpack.c.l.b16 %v1538
        %v1604 = vunpack.c.l.b16 %v1542
        %v1605 = vunpack.c.l.b16 %v1545
        %v1606 = vunpack.c.l.b16 %v1549
        %v1607 = vunpack.c.l.b16 %v1552
        %v1608 = vunpack.c.l.b16 %v1556
        %v1609 = vunpack.c.l.b16 %v1559
        %v1610 = vunpack.c.l.b16 %v1563
        %v1611 = vunpack.c.l.b16 %v1566
        %v1612 = vunpack.c.l.b16 %v1570
        %v1613 = vunpack.c.l.b16 %v1573
        %v1614 = vunpack.c.l.b16 %v1577
        %v1615 = vunpack.c.l.b16 %v1580
        %v1616 = vpack.c.b16 %v1601, %v1600
        %v1617 = vpack.c.b16 %v1603, %v1602
        %v1618 = vpack.c.b16 %v1605, %v1604
        %v1619 = vpack.c.b16 %v1607, %v1606
        %v1620 = vpack.c.b16 %v1609, %v1608
        %v1621 = vpack.c.b16 %v1611, %v1610
        %v1622 = vpack.c.b16 %v1613, %v1612
        %v1623 = vpack.c.b16 %v1615, %v1614
        %v1627 = vunpack.c.l.b16 %v1581
        %v1628 = vunpack.c.l.b16 %v1582
        %v1629 = vunpack.c.l.b16 %v1583
        %v1630 = vpack.c.b16 %v1628, %v1627
        %v1631 = vpack.c.b16 %v1629, %v1629
        %v1634 = vsel %vm889, %v1616, 0
        %v1637 = vsel %vm889, %v1617, 0
        %v1640 = vsel %vm889, %v1618, 0
        %v1643 = vsel %vm889, %v1619, 0
        %v1646 = vsel %vm889, %v1620, 0
        %v1649 = vsel %vm889, %v1621, 0
        %v1652 = vsel %vm889, %v1622, 0
        %v1655 = vsel %vm889, %v1623, 0
        %v1658 = vsel %vm914, %v1631, 0
        %1660 = vmatprep.subr.bf16.mxu0 0
        %1661 = vmatpush1.bf16.msra.mxu0 %v1630
        %1662 = vmatprep.subr.bf16.mxu0 0
        %1663 = vmatpush1.bf16.msra.mxu0 %v1658
        %1664 = vmatprep.subr.bf16.mxu0 0
        %1665 = vmatpush1.bf16.msra.mxu0 0
        %1666 = vmatprep.subr.bf16.mxu0 0
        %1667 = vmatpush1.bf16.msra.mxu0 0
        %1668 = vmatprep.subr.bf16.mxu0 0
        %1669 = vmatpush1.bf16.msra.mxu0 0
        %1670 = vmatprep.subr.bf16.mxu0 0
        %1671 = vmatpush1.bf16.msra.mxu0 0
        %1672 = vmatprep.subr.bf16.mxu0 0
        %1673 = vmatpush1.bf16.msra.mxu0 0
        %1674 = vmatprep.subr.bf16.mxu0 0
        %1675 = vmatpush1.bf16.msra.mxu0 0
        %1676 = vmatprep.subr.bf16.mxu0 0
        %1677 = vmatpush1.bf16.msra.mxu0 0
        %1678 = vmatprep.subr.bf16.mxu0 0
        %1679 = vmatpush1.bf16.msra.mxu0 0
        %1680 = vmatprep.subr.bf16.mxu0 0
        %1681 = vmatpush1.bf16.msra.mxu0 0
        %1682 = vmatprep.subr.bf16.mxu0 0
        %1683 = vmatpush1.bf16.msra.mxu0 0
        %1684 = vmatprep.subr.bf16.mxu0 0
        %1685 = vmatpush1.bf16.msra.mxu0 0
        %1686 = vmatprep.subr.bf16.mxu0 0
        %1687 = vmatpush1.bf16.msra.mxu0 0
        %1688 = vmatprep.subr.bf16.mxu0 0
        %1689 = vmatpush1.bf16.msra.mxu0 0
        %1690 = vmatprep.subr.bf16.mxu0 0
        %1691 = vmatpush1.bf16.msra.mxu0 0
        %1692 = vmatprep.mubr.bf16.mxu0 0
        %1693 = vmatmul.mubr.bf16.gmra.mrb[0].mxu0 %v1634
        %v1694 = vpop.f32.mrb[0].mxu0
        %v1695 = vadd.f32 0.0, %v1694
        %v1696 = vpop.f32.mrb[0].mxu0
        %v1697 = vpop.f32.mrb[0].mxu0
        %v1698 = vadd.f32 0.0, %v1697
        %v1699 = vpop.f32.mrb[0].mxu0
        %1700 = vmatprep.mubr.bf16.mxu0 0
        %1701 = vmatmul.mubr.bf16.gmra.mrb[0].mxu0 %v1637
        %v1702 = vpop.f32.mrb[0].mxu0
        %v1703 = vadd.f32 0.0, %v1702
        %v1704 = vpop.f32.mrb[0].mxu0
        %v1705 = vpop.f32.mrb[0].mxu0
        %v1706 = vadd.f32 0.0, %v1705
        %v1707 = vpop.f32.mrb[0].mxu0
        %1708 = vmatprep.mubr.bf16.mxu0 0
        %1709 = vmatmul.mubr.bf16.gmra.mrb[0].mxu0 %v1640
        %v1710 = vpop.f32.mrb[0].mxu0
        %v1711 = vadd.f32 0.0, %v1710
        %v1712 = vpop.f32.mrb[0].mxu0
        %v1713 = vpop.f32.mrb[0].mxu0
        %v1714 = vadd.f32 0.0, %v1713
        %v1715 = vpop.f32.mrb[0].mxu0
        %1716 = vmatprep.mubr.bf16.mxu0 0
        %1717 = vmatmul.mubr.bf16.gmra.mrb[0].mxu0 %v1643
        %v1718 = vpop.f32.mrb[0].mxu0
        %v1719 = vadd.f32 0.0, %v1718
        %v1720 = vpop.f32.mrb[0].mxu0
        %v1721 = vpop.f32.mrb[0].mxu0
        %v1722 = vadd.f32 0.0, %v1721
        %v1723 = vpop.f32.mrb[0].mxu0
        %1724 = vmatprep.mubr.bf16.mxu0 0
        %1725 = vmatmul.mubr.bf16.gmra.mrb[0].mxu0 %v1646
        %v1726 = vpop.f32.mrb[0].mxu0
        %v1727 = vadd.f32 0.0, %v1726
        %v1728 = vpop.f32.mrb[0].mxu0
        %v1729 = vpop.f32.mrb[0].mxu0
        %v1730 = vadd.f32 0.0, %v1729
        %v1731 = vpop.f32.mrb[0].mxu0
        %1732 = vmatprep.mubr.bf16.mxu0 0
        %1733 = vmatmul.mubr.bf16.gmra.mrb[0].mxu0 %v1649
        %v1734 = vpop.f32.mrb[0].mxu0
        %v1735 = vadd.f32 0.0, %v1734
        %v1736 = vpop.f32.mrb[0].mxu0
        %v1737 = vpop.f32.mrb[0].mxu0
        %v1738 = vadd.f32 0.0, %v1737
        %v1739 = vpop.f32.mrb[0].mxu0
        %1740 = vmatprep.mubr.bf16.mxu0 0
        %1741 = vmatmul.mubr.bf16.gmra.mrb[0].mxu0 %v1652
        %v1742 = vpop.f32.mrb[0].mxu0
        %v1743 = vadd.f32 0.0, %v1742
        %v1744 = vpop.f32.mrb[0].mxu0
        %v1745 = vpop.f32.mrb[0].mxu0
        %v1746 = vadd.f32 0.0, %v1745
        %v1747 = vpop.f32.mrb[0].mxu0
        %1748 = vmatprep.mubr.bf16.mxu0 0
        %1749 = vmatmul.mubr.bf16.gmra.mrb[0].mxu0 %v1655
        %v1750 = vpop.f32.mrb[0].mxu0
        %v1751 = vadd.f32 0.0, %v1750
        %v1752 = vpop.f32.mrb[0].mxu0
        %v1753 = vpop.f32.mrb[0].mxu0
        %v1754 = vadd.f32 0.0, %v1753
        %v1755 = vpop.f32.mrb[0].mxu0
        %1756 = vdwg.mxu0
        %v1757 = vadd.f32 %v1584, %v1695
        %v1758 = vadd.f32 %v1585, %v1698
        %v1759 = vadd.f32 %v1586, %v1703
        %v1760 = vadd.f32 %v1587, %v1706
        %v1761 = vadd.f32 %v1588, %v1711
        %v1762 = vadd.f32 %v1589, %v1714
        %v1763 = vadd.f32 %v1590, %v1719
        %v1764 = vadd.f32 %v1591, %v1722
        %v1765 = vadd.f32 %v1592, %v1727
        %v1766 = vadd.f32 %v1593, %v1730
        %v1767 = vadd.f32 %v1594, %v1735
        %v1768 = vadd.f32 %v1595, %v1738
        %v1769 = vadd.f32 %v1596, %v1743
        %v1770 = vadd.f32 %v1597, %v1746
        %v1771 = vadd.f32 %v1598, %v1751
        %v1772 = vadd.f32 %v1599, %v1754
        %1773 = vst [vmem:[#allocation3] sm:$0xff] %v1757
        %1774 = vst [vmem:[#allocation3 + $0x8] sm:$0xff] %v1758
        %1775 = vst [vmem:[#allocation3 + $0x10] sm:$0xff] %v1759
        %1776 = vst [vmem:[#allocation3 + $0x18] sm:$0xff] %v1760
        %1777 = vst [vmem:[#allocation3 + $0x20] sm:$0xff] %v1761
        %1778 = vst [vmem:[#allocation3 + $0x28] sm:$0xff] %v1762
        %1779 = vst [vmem:[#allocation3 + $0x30] sm:$0xff] %v1763
        %1780 = vst [vmem:[#allocation3 + $0x38] sm:$0xff] %v1764
        %1781 = vst [vmem:[#allocation3 + $0x40] sm:$0xff] %v1765
        %1782 = vst [vmem:[#allocation3 + $0x48] sm:$0xff] %v1766
        %1783 = vst [vmem:[#allocation3 + $0x50] sm:$0xff] %v1767
        %1784 = vst [vmem:[#allocation3 + $0x58] sm:$0xff] %v1768
        %1785 = vst [vmem:[#allocation3 + $0x60] sm:$0xff] %v1769
        %1786 = vst [vmem:[#allocation3 + $0x68] sm:$0xff] %v1770
        %1787 = vst [vmem:[#allocation3 + $0x70] sm:$0xff] %v1771
        %1788 = vst [vmem:[#allocation3 + $0x78] sm:$0xff] %v1772
        %v1789 = vld [vmem:[%s656] sm:$0xf]
        %v1790 = vld [vmem:[%s656 + $0x4] sm:$0xf]
        %v1791 = vld [vmem:[%s656 + $0xc] sm:$0xf]
        %v1792 = vld [vmem:[%s656 + $0x10] sm:$0xf]
        %v1793 = vld [vmem:[%s656 + $0x18] sm:$0xf]
        %v1794 = vld [vmem:[%s656 + $0x1c] sm:$0xf]
        %v1795 = vld [vmem:[%s656 + $0x24] sm:$0xf]
        %v1796 = vld [vmem:[%s656 + $0x28] sm:$0xf]
        %v1797 = vld [vmem:[%s656 + $0x30] sm:$0xf]
        %v1798 = vld [vmem:[%s656 + $0x34] sm:$0xf]
        %v1799 = vld [vmem:[%s656 + $0x3c] sm:$0xf]
        %v1800 = vld [vmem:[%s656 + $0x40] sm:$0xf]
        %v1801 = vld [vmem:[%s656 + $0x48] sm:$0xf]
        %v1802 = vld [vmem:[%s656 + $0x4c] sm:$0xf]
        %v1803 = vld [vmem:[%s656 + $0x54] sm:$0xf]
        %v1804 = vld [vmem:[%s656 + $0x58] sm:$0xf]
        %v1805 = vld [vmem:[#allocation10 + $0x24] sm:$0xf]
        %v1806 = vld [vmem:[#allocation10 + $0x28] sm:$0xf]
        %v1807 = vld [vmem:[#allocation10 + $0x2c] sm:$0xf]
        %v1808 = vld [vmem:[#allocation3] sm:$0xff]
        %v1809 = vld [vmem:[#allocation3 + $0x8] sm:$0xff]
        %v1810 = vld [vmem:[#allocation3 + $0x10] sm:$0xff]
        %v1811 = vld [vmem:[#allocation3 + $0x18] sm:$0xff]
        %v1812 = vld [vmem:[#allocation3 + $0x20] sm:$0xff]
        %v1813 = vld [vmem:[#allocation3 + $0x28] sm:$0xff]
        %v1814 = vld [vmem:[#allocation3 + $0x30] sm:$0xff]
        %v1815 = vld [vmem:[#allocation3 + $0x38] sm:$0xff]
        %v1816 = vld [vmem:[#allocation3 + $0x40] sm:$0xff]
        %v1817 = vld [vmem:[#allocation3 + $0x48] sm:$0xff]
        %v1818 = vld [vmem:[#allocation3 + $0x50] sm:$0xff]
        %v1819 = vld [vmem:[#allocation3 + $0x58] sm:$0xff]
        %v1820 = vld [vmem:[#allocation3 + $0x60] sm:$0xff]
        %v1821 = vld [vmem:[#allocation3 + $0x68] sm:$0xff]
        %v1822 = vld [vmem:[#allocation3 + $0x70] sm:$0xff]
        %v1823 = vld [vmem:[#allocation3 + $0x78] sm:$0xff]
        %v1840 = vunpack.c.l.b16 %v1789
        %v1841 = vunpack.c.l.b16 %v1790
        %v1842 = vunpack.c.l.b16 %v1791
        %v1843 = vunpack.c.l.b16 %v1792
        %v1844 = vunpack.c.l.b16 %v1793
        %v1845 = vunpack.c.l.b16 %v1794
        %v1846 = vunpack.c.l.b16 %v1795
        %v1847 = vunpack.c.l.b16 %v1796
        %v1848 = vunpack.c.l.b16 %v1797
        %v1849 = vunpack.c.l.b16 %v1798
        %v1850 = vunpack.c.l.b16 %v1799
        %v1851 = vunpack.c.l.b16 %v1800
        %v1852 = vunpack.c.l.b16 %v1801
        %v1853 = vunpack.c.l.b16 %v1802
        %v1854 = vunpack.c.l.b16 %v1803
        %v1855 = vunpack.c.l.b16 %v1804
        %v1856 = vpack.c.b16 %v1841, %v1840
        %v1857 = vpack.c.b16 %v1843, %v1842
        %v1858 = vpack.c.b16 %v1845, %v1844
        %v1859 = vpack.c.b16 %v1847, %v1846
        %v1860 = vpack.c.b16 %v1849, %v1848
        %v1861 = vpack.c.b16 %v1851, %v1850
        %v1862 = vpack.c.b16 %v1853, %v1852
        %v1863 = vpack.c.b16 %v1855, %v1854
        %v1867 = vunpack.c.l.b16 %v1805
        %v1868 = vunpack.c.l.b16 %v1806
        %v1869 = vunpack.c.l.b16 %v1807
        %v1870 = vpack.c.b16 %v1868, %v1867
        %v1871 = vpack.c.b16 %v1869, %v1869
        %v1874 = vsel %vm889, %v1856, 0
        %v1877 = vsel %vm889, %v1857, 0
        %v1880 = vsel %vm889, %v1858, 0
        %v1883 = vsel %vm889, %v1859, 0
        %v1886 = vsel %vm889, %v1860, 0
        %v1889 = vsel %vm889, %v1861, 0
        %v1892 = vsel %vm889, %v1862, 0
        %v1895 = vsel %vm889, %v1863, 0
        %v1898 = vsel %vm914, %v1871, 0
        %1900 = vmatprep.subr.bf16.mxu0 0
        %1901 = vmatpush1.bf16.msra.mxu0 %v1870
        %1902 = vmatprep.subr.bf16.mxu0 0
        %1903 = vmatpush1.bf16.msra.mxu0 %v1898
        %1904 = vmatprep.subr.bf16.mxu0 0
        %1905 = vmatpush1.bf16.msra.mxu0 0
        %1906 = vmatprep.subr.bf16.mxu0 0
        %1907 = vmatpush1.bf16.msra.mxu0 0
        %1908 = vmatprep.subr.bf16.mxu0 0
        %1909 = vmatpush1.bf16.msra.mxu0 0
        %1910 = vmatprep.subr.bf16.mxu0 0
        %1911 = vmatpush1.bf16.msra.mxu0 0
        %1912 = vmatprep.subr.bf16.mxu0 0
        %1913 = vmatpush1.bf16.msra.mxu0 0
        %1914 = vmatprep.subr.bf16.mxu0 0
        %1915 = vmatpush1.bf16.msra.mxu0 0
        %1916 = vmatprep.subr.bf16.mxu0 0
        %1917 = vmatpush1.bf16.msra.mxu0 0
        %1918 = vmatprep.subr.bf16.mxu0 0
        %1919 = vmatpush1.bf16.msra.mxu0 0
        %1920 = vmatprep.subr.bf16.mxu0 0
        %1921 = vmatpush1.bf16.msra.mxu0 0
        %1922 = vmatprep.subr.bf16.mxu0 0
        %1923 = vmatpush1.bf16.msra.mxu0 0
        %1924 = vmatprep.subr.bf16.mxu0 0
        %1925 = vmatpush1.bf16.msra.mxu0 0
        %1926 = vmatprep.subr.bf16.mxu0 0
        %1927 = vmatpush1.bf16.msra.mxu0 0
        %1928 = vmatprep.subr.bf16.mxu0 0
        %1929 = vmatpush1.bf16.msra.mxu0 0
        %1930 = vmatprep.subr.bf16.mxu0 0
        %1931 = vmatpush1.bf16.msra.mxu0 0
        %1932 = vmatprep.mubr.bf16.mxu0 0
        %1933 = vmatmul.mubr.bf16.gmra.mrb[0].mxu0 %v1874
        %v1934 = vpop.f32.mrb[0].mxu0
        %v1935 = vadd.f32 0.0, %v1934
        %v1936 = vpop.f32.mrb[0].mxu0
        %v1937 = vpop.f32.mrb[0].mxu0
        %v1938 = vadd.f32 0.0, %v1937
        %v1939 = vpop.f32.mrb[0].mxu0
        %1940 = vmatprep.mubr.bf16.mxu0 0
        %1941 = vmatmul.mubr.bf16.gmra.mrb[0].mxu0 %v1877
        %v1942 = vpop.f32.mrb[0].mxu0
        %v1943 = vadd.f32 0.0, %v1942
        %v1944 = vpop.f32.mrb[0].mxu0
        %v1945 = vpop.f32.mrb[0].mxu0
        %v1946 = vadd.f32 0.0, %v1945
        %v1947 = vpop.f32.mrb[0].mxu0
        %1948 = vmatprep.mubr.bf16.mxu0 0
        %1949 = vmatmul.mubr.bf16.gmra.mrb[0].mxu0 %v1880
        %v1950 = vpop.f32.mrb[0].mxu0
        %v1951 = vadd.f32 0.0, %v1950
        %v1952 = vpop.f32.mrb[0].mxu0
        %v1953 = vpop.f32.mrb[0].mxu0
        %v1954 = vadd.f32 0.0, %v1953
        %v1955 = vpop.f32.mrb[0].mxu0
        %1956 = vmatprep.mubr.bf16.mxu0 0
        %1957 = vmatmul.mubr.bf16.gmra.mrb[0].mxu0 %v1883
        %v1958 = vpop.f32.mrb[0].mxu0
        %v1959 = vadd.f32 0.0, %v1958
        %v1960 = vpop.f32.mrb[0].mxu0
        %v1961 = vpop.f32.mrb[0].mxu0
        %v1962 = vadd.f32 0.0, %v1961
        %v1963 = vpop.f32.mrb[0].mxu0
        %1964 = vmatprep.mubr.bf16.mxu0 0
        %1965 = vmatmul.mubr.bf16.gmra.mrb[0].mxu0 %v1886
        %v1966 = vpop.f32.mrb[0].mxu0
        %v1967 = vadd.f32 0.0, %v1966
        %v1968 = vpop.f32.mrb[0].mxu0
        %v1969 = vpop.f32.mrb[0].mxu0
        %v1970 = vadd.f32 0.0, %v1969
        %v1971 = vpop.f32.mrb[0].mxu0
        %1972 = vmatprep.mubr.bf16.mxu0 0
        %1973 = vmatmul.mubr.bf16.gmra.mrb[0].mxu0 %v1889
        %v1974 = vpop.f32.mrb[0].mxu0
        %v1975 = vadd.f32 0.0, %v1974
        %v1976 = vpop.f32.mrb[0].mxu0
        %v1977 = vpop.f32.mrb[0].mxu0
        %v1978 = vadd.f32 0.0, %v1977
        %v1979 = vpop.f32.mrb[0].mxu0
        %1980 = vmatprep.mubr.bf16.mxu0 0
        %1981 = vmatmul.mubr.bf16.gmra.mrb[0].mxu0 %v1892
        %v1982 = vpop.f32.mrb[0].mxu0
        %v1983 = vadd.f32 0.0, %v1982
        %v1984 = vpop.f32.mrb[0].mxu0
        %v1985 = vpop.f32.mrb[0].mxu0
        %v1986 = vadd.f32 0.0, %v1985
        %v1987 = vpop.f32.mrb[0].mxu0
        %1988 = vmatprep.mubr.bf16.mxu0 0
        %1989 = vmatmul.mubr.bf16.gmra.mrb[0].mxu0 %v1895
        %v1990 = vpop.f32.mrb[0].mxu0
        %v1991 = vadd.f32 0.0, %v1990
        %v1992 = vpop.f32.mrb[0].mxu0
        %v1993 = vpop.f32.mrb[0].mxu0
        %v1994 = vadd.f32 0.0, %v1993
        %v1995 = vpop.f32.mrb[0].mxu0
        %1996 = vdwg.mxu0
        %v1997 = vadd.f32 %v1808, %v1935
        %v1998 = vadd.f32 %v1809, %v1938
        %v1999 = vadd.f32 %v1810, %v1943
        %v2000 = vadd.f32 %v1811, %v1946
        %v2001 = vadd.f32 %v1812, %v1951
        %v2002 = vadd.f32 %v1813, %v1954
        %v2003 = vadd.f32 %v1814, %v1959
        %v2004 = vadd.f32 %v1815, %v1962
        %v2005 = vadd.f32 %v1816, %v1967
        %v2006 = vadd.f32 %v1817, %v1970
        %v2007 = vadd.f32 %v1818, %v1975
        %v2008 = vadd.f32 %v1819, %v1978
        %v2009 = vadd.f32 %v1820, %v1983
        %v2010 = vadd.f32 %v1821, %v1986
        %v2011 = vadd.f32 %v1822, %v1991
        %v2012 = vadd.f32 %v1823, %v1994
        %2013 = vst [vmem:[#allocation3] sm:$0xff] %v1997
        %2014 = vst [vmem:[#allocation3 + $0x8] sm:$0xff] %v1998
        %2015 = vst [vmem:[#allocation3 + $0x10] sm:$0xff] %v1999
        %2016 = vst [vmem:[#allocation3 + $0x18] sm:$0xff] %v2000
        %2017 = vst [vmem:[#allocation3 + $0x20] sm:$0xff] %v2001
        %2018 = vst [vmem:[#allocation3 + $0x28] sm:$0xff] %v2002
        %2019 = vst [vmem:[#allocation3 + $0x30] sm:$0xff] %v2003
        %2020 = vst [vmem:[#allocation3 + $0x38] sm:$0xff] %v2004
        %2021 = vst [vmem:[#allocation3 + $0x40] sm:$0xff] %v2005
        %2022 = vst [vmem:[#allocation3 + $0x48] sm:$0xff] %v2006
        %2023 = vst [vmem:[#allocation3 + $0x50] sm:$0xff] %v2007
        %2024 = vst [vmem:[#allocation3 + $0x58] sm:$0xff] %v2008
        %2025 = vst [vmem:[#allocation3 + $0x60] sm:$0xff] %v2009
        %2026 = vst [vmem:[#allocation3 + $0x68] sm:$0xff] %v2010
        %2027 = vst [vmem:[#allocation3 + $0x70] sm:$0xff] %v2011
        %2028 = vst [vmem:[#allocation3 + $0x78] sm:$0xff] %v2012
        %v2029 = vld [vmem:[%s656] sm:$0xf]
        %v2030 = vld [vmem:[%s656 + $0x4] sm:$0xf]
        %v2031 = vld [vmem:[%s656 + $0x8] sm:$0x1]
        %v2032 = vld [vmem:[%s656 + $0xc] sm:$0xf]
        %v2033 = vld [vmem:[%s656 + $0x10] sm:$0xf]
        %v2034 = vld [vmem:[%s656 + $0x14] sm:$0x1]
        %v2035 = vld [vmem:[%s656 + $0x18] sm:$0xf]
        %v2036 = vld [vmem:[%s656 + $0x1c] sm:$0xf]
        %v2037 = vld [vmem:[%s656 + $0x20] sm:$0x1]
        %v2038 = vld [vmem:[%s656 + $0x24] sm:$0xf]
        %v2039 = vld [vmem:[%s656 + $0x28] sm:$0xf]
        %v2040 = vld [vmem:[%s656 + $0x2c] sm:$0x1]
        %v2041 = vld [vmem:[%s656 + $0x30] sm:$0xf]
        %v2042 = vld [vmem:[%s656 + $0x34] sm:$0xf]
        %v2043 = vld [vmem:[%s656 + $0x38] sm:$0x1]
        %v2044 = vld [vmem:[%s656 + $0x3c] sm:$0xf]
        %v2045 = vld [vmem:[%s656 + $0x40] sm:$0xf]
        %v2046 = vld [vmem:[%s656 + $0x44] sm:$0x1]
        %v2047 = vld [vmem:[%s656 + $0x48] sm:$0xf]
        %v2048 = vld [vmem:[%s656 + $0x4c] sm:$0xf]
        %v2049 = vld [vmem:[%s656 + $0x50] sm:$0x1]
        %v2050 = vld [vmem:[%s656 + $0x54] sm:$0xf]
        %v2051 = vld [vmem:[%s656 + $0x58] sm:$0xf]
        %v2052 = vld [vmem:[%s656 + $0x5c] sm:$0x1]
        %v2054 = vshrl.u32 %v2029, 16
        %v2056 = vrot.slane %v2054, 4
        %v2057 = vshll.u32 %v2029, 16
        %v2059 = vrot.slane %v2057, 5
        %v2060 = vor.u32 %v2056, %v2059
        %v2061 = vrot.slane %v2060, 4
        %v2063 = vshll.u32 %v2030, 16
        %v2065 = vrot.slane %v2063, 5
        %v2066 = vsel %vm1073, %v2061, %v2065
        %v2067 = vshrl.u32 %v2030, 16
        %v2069 = vrot.slane %v2067, 4
        %v2070 = vor.u32 %v2069, %v2065
        %v2071 = vrot.slane %v2070, 4
        %v2073 = vshll.u32 %v2031, 16
        %v2075 = vrot.slane %v2073, 5
        %v2076 = vsel %vm1073, %v2071, %v2075
        %v2078 = vshrl.u32 %v2032, 16
        %v2080 = vrot.slane %v2078, 4
        %v2081 = vshll.u32 %v2032, 16
        %v2083 = vrot.slane %v2081, 5
        %v2084 = vor.u32 %v2080, %v2083
        %v2085 = vrot.slane %v2084, 4
        %v2087 = vshll.u32 %v2033, 16
        %v2089 = vrot.slane %v2087, 5
        %v2090 = vsel %vm1073, %v2085, %v2089
        %v2091 = vshrl.u32 %v2033, 16
        %v2093 = vrot.slane %v2091, 4
        %v2094 = vor.u32 %v2093, %v2089
        %v2095 = vrot.slane %v2094, 4
        %v2097 = vshll.u32 %v2034, 16
        %v2099 = vrot.slane %v2097, 5
        %v2100 = vsel %vm1073, %v2095, %v2099
        %v2102 = vshrl.u32 %v2035, 16
        %v2104 = vrot.slane %v2102, 4
        %v2105 = vshll.u32 %v2035, 16
        %v2107 = vrot.slane %v2105, 5
        %v2108 = vor.u32 %v2104, %v2107
        %v2109 = vrot.slane %v2108, 4
        %v2111 = vshll.u32 %v2036, 16
        %v2113 = vrot.slane %v2111, 5
        %v2114 = vsel %vm1073, %v2109, %v2113
        %v2115 = vshrl.u32 %v2036, 16
        %v2117 = vrot.slane %v2115, 4
        %v2118 = vor.u32 %v2117, %v2113
        %v2119 = vrot.slane %v2118, 4
        %v2121 = vshll.u32 %v2037, 16
        %v2123 = vrot.slane %v2121, 5
        %v2124 = vsel %vm1073, %v2119, %v2123
        %v2126 = vshrl.u32 %v2038, 16
        %v2128 = vrot.slane %v2126, 4
        %v2129 = vshll.u32 %v2038, 16
        %v2131 = vrot.slane %v2129, 5
        %v2132 = vor.u32 %v2128, %v2131
        %v2133 = vrot.slane %v2132, 4
        %v2135 = vshll.u32 %v2039, 16
        %v2137 = vrot.slane %v2135, 5
        %v2138 = vsel %vm1073, %v2133, %v2137
        %v2139 = vshrl.u32 %v2039, 16
        %v2141 = vrot.slane %v2139, 4
        %v2142 = vor.u32 %v2141, %v2137
        %v2143 = vrot.slane %v2142, 4
        %v2145 = vshll.u32 %v2040, 16
        %v2147 = vrot.slane %v2145, 5
        %v2148 = vsel %vm1073, %v2143, %v2147
        %v2150 = vshrl.u32 %v2041, 16
        %v2152 = vrot.slane %v2150, 4
        %v2153 = vshll.u32 %v2041, 16
        %v2155 = vrot.slane %v2153, 5
        %v2156 = vor.u32 %v2152, %v2155
        %v2157 = vrot.slane %v2156, 4
        %v2159 = vshll.u32 %v2042, 16
        %v2161 = vrot.slane %v2159, 5
        %v2162 = vsel %vm1073, %v2157, %v2161
        %v2163 = vshrl.u32 %v2042, 16
        %v2165 = vrot.slane %v2163, 4
        %v2166 = vor.u32 %v2165, %v2161
        %v2167 = vrot.slane %v2166, 4
        %v2169 = vshll.u32 %v2043, 16
        %v2171 = vrot.slane %v2169, 5
        %v2172 = vsel %vm1073, %v2167, %v2171
        %v2174 = vshrl.u32 %v2044, 16
        %v2176 = vrot.slane %v2174, 4
        %v2177 = vshll.u32 %v2044, 16
        %v2179 = vrot.slane %v2177, 5
        %v2180 = vor.u32 %v2176, %v2179
        %v2181 = vrot.slane %v2180, 4
        %v2183 = vshll.u32 %v2045, 16
        %v2185 = vrot.slane %v2183, 5
        %v2186 = vsel %vm1073, %v2181, %v2185
        %v2187 = vshrl.u32 %v2045, 16
        %v2189 = vrot.slane %v2187, 4
        %v2190 = vor.u32 %v2189, %v2185
        %v2191 = vrot.slane %v2190, 4
        %v2193 = vshll.u32 %v2046, 16
        %v2195 = vrot.slane %v2193, 5
        %v2196 = vsel %vm1073, %v2191, %v2195
        %v2198 = vshrl.u32 %v2047, 16
        %v2200 = vrot.slane %v2198, 4
        %v2201 = vshll.u32 %v2047, 16
        %v2203 = vrot.slane %v2201, 5
        %v2204 = vor.u32 %v2200, %v2203
        %v2205 = vrot.slane %v2204, 4
        %v2207 = vshll.u32 %v2048, 16
        %v2209 = vrot.slane %v2207, 5
        %v2210 = vsel %vm1073, %v2205, %v2209
        %v2211 = vshrl.u32 %v2048, 16
        %v2213 = vrot.slane %v2211, 4
        %v2214 = vor.u32 %v2213, %v2209
        %v2215 = vrot.slane %v2214, 4
        %v2217 = vshll.u32 %v2049, 16
        %v2219 = vrot.slane %v2217, 5
        %v2220 = vsel %vm1073, %v2215, %v2219
        %v2222 = vshrl.u32 %v2050, 16
        %v2224 = vrot.slane %v2222, 4
        %v2225 = vshll.u32 %v2050, 16
        %v2227 = vrot.slane %v2225, 5
        %v2228 = vor.u32 %v2224, %v2227
        %v2229 = vrot.slane %v2228, 4
        %v2231 = vshll.u32 %v2051, 16
        %v2233 = vrot.slane %v2231, 5
        %v2234 = vsel %vm1073, %v2229, %v2233
        %v2235 = vshrl.u32 %v2051, 16
        %v2237 = vrot.slane %v2235, 4
        %v2238 = vor.u32 %v2237, %v2233
        %v2239 = vrot.slane %v2238, 4
        %v2241 = vshll.u32 %v2052, 16
        %v2243 = vrot.slane %v2241, 5
        %v2244 = vsel %vm1073, %v2239, %v2243
        %v2245 = vld [vmem:[#allocation10 + $0x30] sm:$0xf]
        %v2246 = vld [vmem:[#allocation10 + $0x34] sm:$0xf]
        %v2247 = vld [vmem:[#allocation10 + $0x38] sm:$0xf]
        %v2248 = vld [vmem:[#allocation3] sm:$0xff]
        %v2249 = vld [vmem:[#allocation3 + $0x8] sm:$0xff]
        %v2250 = vld [vmem:[#allocation3 + $0x10] sm:$0xff]
        %v2251 = vld [vmem:[#allocation3 + $0x18] sm:$0xff]
        %v2252 = vld [vmem:[#allocation3 + $0x20] sm:$0xff]
        %v2253 = vld [vmem:[#allocation3 + $0x28] sm:$0xff]
        %v2254 = vld [vmem:[#allocation3 + $0x30] sm:$0xff]
        %v2255 = vld [vmem:[#allocation3 + $0x38] sm:$0xff]
        %v2256 = vld [vmem:[#allocation3 + $0x40] sm:$0xff]
        %v2257 = vld [vmem:[#allocation3 + $0x48] sm:$0xff]
        %v2258 = vld [vmem:[#allocation3 + $0x50] sm:$0xff]
        %v2259 = vld [vmem:[#allocation3 + $0x58] sm:$0xff]
        %v2260 = vld [vmem:[#allocation3 + $0x60] sm:$0xff]
        %v2261 = vld [vmem:[#allocation3 + $0x68] sm:$0xff]
        %v2262 = vld [vmem:[#allocation3 + $0x70] sm:$0xff]
        %v2263 = vld [vmem:[#allocation3 + $0x78] sm:$0xff]
        %v2264 = vunpack.c.l.b16 %v2066
        %v2265 = vunpack.c.l.b16 %v2076
        %v2266 = vunpack.c.l.b16 %v2090
        %v2267 = vunpack.c.l.b16 %v2100
        %v2268 = vunpack.c.l.b16 %v2114
        %v2269 = vunpack.c.l.b16 %v2124
        %v2270 = vunpack.c.l.b16 %v2138
        %v2271 = vunpack.c.l.b16 %v2148
        %v2272 = vunpack.c.l.b16 %v2162
        %v2273 = vunpack.c.l.b16 %v2172
        %v2274 = vunpack.c.l.b16 %v2186
        %v2275 = vunpack.c.l.b16 %v2196
        %v2276 = vunpack.c.l.b16 %v2210
        %v2277 = vunpack.c.l.b16 %v2220
        %v2278 = vunpack.c.l.b16 %v2234
        %v2279 = vunpack.c.l.b16 %v2244
        %v2280 = vpack.c.b16 %v2265, %v2264
        %v2281 = vpack.c.b16 %v2267, %v2266
        %v2282 = vpack.c.b16 %v2269, %v2268
        %v2283 = vpack.c.b16 %v2271, %v2270
        %v2284 = vpack.c.b16 %v2273, %v2272
        %v2285 = vpack.c.b16 %v2275, %v2274
        %v2286 = vpack.c.b16 %v2277, %v2276
        %v2287 = vpack.c.b16 %v2279, %v2278
        %v2291 = vunpack.c.l.b16 %v2245
        %v2292 = vunpack.c.l.b16 %v2246
        %v2293 = vunpack.c.l.b16 %v2247
        %v2294 = vpack.c.b16 %v2292, %v2291
        %v2295 = vpack.c.b16 %v2293, %v2293
        %v2298 = vsel %vm889, %v2280, 0
        %v2301 = vsel %vm889, %v2281, 0
        %v2304 = vsel %vm889, %v2282, 0
        %v2307 = vsel %vm889, %v2283, 0
        %v2310 = vsel %vm889, %v2284, 0
        %v2313 = vsel %vm889, %v2285, 0
        %v2316 = vsel %vm889, %v2286, 0
        %v2319 = vsel %vm889, %v2287, 0
        %v2322 = vsel %vm914, %v2295, 0
        %2324 = vmatprep.subr.bf16.mxu0 0
        %2325 = vmatpush1.bf16.msra.mxu0 %v2294
        %2326 = vmatprep.subr.bf16.mxu0 0
        %2327 = vmatpush1.bf16.msra.mxu0 %v2322
        %2328 = vmatprep.subr.bf16.mxu0 0
        %2329 = vmatpush1.bf16.msra.mxu0 0
        %2330 = vmatprep.subr.bf16.mxu0 0
        %2331 = vmatpush1.bf16.msra.mxu0 0
        %2332 = vmatprep.subr.bf16.mxu0 0
        %2333 = vmatpush1.bf16.msra.mxu0 0
        %2334 = vmatprep.subr.bf16.mxu0 0
        %2335 = vmatpush1.bf16.msra.mxu0 0
        %2336 = vmatprep.subr.bf16.mxu0 0
        %2337 = vmatpush1.bf16.msra.mxu0 0
        %2338 = vmatprep.subr.bf16.mxu0 0
        %2339 = vmatpush1.bf16.msra.mxu0 0
        %2340 = vmatprep.subr.bf16.mxu0 0
        %2341 = vmatpush1.bf16.msra.mxu0 0
        %2342 = vmatprep.subr.bf16.mxu0 0
        %2343 = vmatpush1.bf16.msra.mxu0 0
        %2344 = vmatprep.subr.bf16.mxu0 0
        %2345 = vmatpush1.bf16.msra.mxu0 0
        %2346 = vmatprep.subr.bf16.mxu0 0
        %2347 = vmatpush1.bf16.msra.mxu0 0
        %2348 = vmatprep.subr.bf16.mxu0 0
        %2349 = vmatpush1.bf16.msra.mxu0 0
        %2350 = vmatprep.subr.bf16.mxu0 0
        %2351 = vmatpush1.bf16.msra.mxu0 0
        %2352 = vmatprep.subr.bf16.mxu0 0
        %2353 = vmatpush1.bf16.msra.mxu0 0
        %2354 = vmatprep.subr.bf16.mxu0 0
        %2355 = vmatpush1.bf16.msra.mxu0 0
        %2356 = vmatprep.mubr.bf16.mxu0 0
        %2357 = vmatmul.mubr.bf16.gmra.mrb[0].mxu0 %v2298
        %v2358 = vpop.f32.mrb[0].mxu0
        %v2359 = vadd.f32 0.0, %v2358
        %v2360 = vpop.f32.mrb[0].mxu0
        %v2361 = vpop.f32.mrb[0].mxu0
        %v2362 = vadd.f32 0.0, %v2361
        %v2363 = vpop.f32.mrb[0].mxu0
        %2364 = vmatprep.mubr.bf16.mxu0 0
        %2365 = vmatmul.mubr.bf16.gmra.mrb[0].mxu0 %v2301
        %v2366 = vpop.f32.mrb[0].mxu0
        %v2367 = vadd.f32 0.0, %v2366
        %v2368 = vpop.f32.mrb[0].mxu0
        %v2369 = vpop.f32.mrb[0].mxu0
        %v2370 = vadd.f32 0.0, %v2369
        %v2371 = vpop.f32.mrb[0].mxu0
        %2372 = vmatprep.mubr.bf16.mxu0 0
        %2373 = vmatmul.mubr.bf16.gmra.mrb[0].mxu0 %v2304
        %v2374 = vpop.f32.mrb[0].mxu0
        %v2375 = vadd.f32 0.0, %v2374
        %v2376 = vpop.f32.mrb[0].mxu0
        %v2377 = vpop.f32.mrb[0].mxu0
        %v2378 = vadd.f32 0.0, %v2377
        %v2379 = vpop.f32.mrb[0].mxu0
        %2380 = vmatprep.mubr.bf16.mxu0 0
        %2381 = vmatmul.mubr.bf16.gmra.mrb[0].mxu0 %v2307
        %v2382 = vpop.f32.mrb[0].mxu0
        %v2383 = vadd.f32 0.0, %v2382
        %v2384 = vpop.f32.mrb[0].mxu0
        %v2385 = vpop.f32.mrb[0].mxu0
        %v2386 = vadd.f32 0.0, %v2385
        %v2387 = vpop.f32.mrb[0].mxu0
        %2388 = vmatprep.mubr.bf16.mxu0 0
        %2389 = vmatmul.mubr.bf16.gmra.mrb[0].mxu0 %v2310
        %v2390 = vpop.f32.mrb[0].mxu0
        %v2391 = vadd.f32 0.0, %v2390
        %v2392 = vpop.f32.mrb[0].mxu0
        %v2393 = vpop.f32.mrb[0].mxu0
        %v2394 = vadd.f32 0.0, %v2393
        %v2395 = vpop.f32.mrb[0].mxu0
        %2396 = vmatprep.mubr.bf16.mxu0 0
        %2397 = vmatmul.mubr.bf16.gmra.mrb[0].mxu0 %v2313
        %v2398 = vpop.f32.mrb[0].mxu0
        %v2399 = vadd.f32 0.0, %v2398
        %v2400 = vpop.f32.mrb[0].mxu0
        %v2401 = vpop.f32.mrb[0].mxu0
        %v2402 = vadd.f32 0.0, %v2401
        %v2403 = vpop.f32.mrb[0].mxu0
        %2404 = vmatprep.mubr.bf16.mxu0 0
        %2405 = vmatmul.mubr.bf16.gmra.mrb[0].mxu0 %v2316
        %v2406 = vpop.f32.mrb[0].mxu0
        %v2407 = vadd.f32 0.0, %v2406
        %v2408 = vpop.f32.mrb[0].mxu0
        %v2409 = vpop.f32.mrb[0].mxu0
        %v2410 = vadd.f32 0.0, %v2409
        %v2411 = vpop.f32.mrb[0].mxu0
        %2412 = vmatprep.mubr.bf16.mxu0 0
        %2413 = vmatmul.mubr.bf16.gmra.mrb[0].mxu0 %v2319
        %v2414 = vpop.f32.mrb[0].mxu0
        %v2415 = vadd.f32 0.0, %v2414
        %v2416 = vpop.f32.mrb[0].mxu0
        %v2417 = vpop.f32.mrb[0].mxu0
        %v2418 = vadd.f32 0.0, %v2417
        %v2419 = vpop.f32.mrb[0].mxu0
        %2420 = vdwg.mxu0
        %v2421 = vadd.f32 %v2248, %v2359
        %v2422 = vadd.f32 %v2249, %v2362
        %v2423 = vadd.f32 %v2250, %v2367
        %v2424 = vadd.f32 %v2251, %v2370
        %v2425 = vadd.f32 %v2252, %v2375
        %v2426 = vadd.f32 %v2253, %v2378
        %v2427 = vadd.f32 %v2254, %v2383
        %v2428 = vadd.f32 %v2255, %v2386
        %v2429 = vadd.f32 %v2256, %v2391
        %v2430 = vadd.f32 %v2257, %v2394
        %v2431 = vadd.f32 %v2258, %v2399
        %v2432 = vadd.f32 %v2259, %v2402
        %v2433 = vadd.f32 %v2260, %v2407
        %v2434 = vadd.f32 %v2261, %v2410
        %v2435 = vadd.f32 %v2262, %v2415
        %v2436 = vadd.f32 %v2263, %v2418
        %2437 = vst [vmem:[#allocation3] sm:$0xff] %v2421
        %2438 = vst [vmem:[#allocation3 + $0x8] sm:$0xff] %v2422
        %2439 = vst [vmem:[#allocation3 + $0x10] sm:$0xff] %v2423
        %2440 = vst [vmem:[#allocation3 + $0x18] sm:$0xff] %v2424
        %2441 = vst [vmem:[#allocation3 + $0x20] sm:$0xff] %v2425
        %2442 = vst [vmem:[#allocation3 + $0x28] sm:$0xff] %v2426
        %2443 = vst [vmem:[#allocation3 + $0x30] sm:$0xff] %v2427
        %2444 = vst [vmem:[#allocation3 + $0x38] sm:$0xff] %v2428
        %2445 = vst [vmem:[#allocation3 + $0x40] sm:$0xff] %v2429
        %2446 = vst [vmem:[#allocation3 + $0x48] sm:$0xff] %v2430
        %2447 = vst [vmem:[#allocation3 + $0x50] sm:$0xff] %v2431
        %2448 = vst [vmem:[#allocation3 + $0x58] sm:$0xff] %v2432
        %2449 = vst [vmem:[#allocation3 + $0x60] sm:$0xff] %v2433
        %2450 = vst [vmem:[#allocation3 + $0x68] sm:$0xff] %v2434
        %2451 = vst [vmem:[#allocation3 + $0x70] sm:$0xff] %v2435
        %2452 = vst [vmem:[#allocation3 + $0x78] sm:$0xff] %v2436
        %v2453 = vld [vmem:[%s656] sm:$0xe]
        %v2454 = vld [vmem:[%s656 + $0x4] sm:$0xf]
        %v2455 = vld [vmem:[%s656 + $0x8] sm:$0x1]
        %v2456 = vld [vmem:[%s656 + $0xc] sm:$0xe]
        %v2457 = vld [vmem:[%s656 + $0x10] sm:$0xf]
        %v2458 = vld [vmem:[%s656 + $0x14] sm:$0x1]
        %v2459 = vld [vmem:[%s656 + $0x18] sm:$0xe]
        %v2460 = vld [vmem:[%s656 + $0x1c] sm:$0xf]
        %v2461 = vld [vmem:[%s656 + $0x20] sm:$0x1]
        %v2462 = vld [vmem:[%s656 + $0x24] sm:$0xe]
        %v2463 = vld [vmem:[%s656 + $0x28] sm:$0xf]
        %v2464 = vld [vmem:[%s656 + $0x2c] sm:$0x1]
        %v2465 = vld [vmem:[%s656 + $0x30] sm:$0xe]
        %v2466 = vld [vmem:[%s656 + $0x34] sm:$0xf]
        %v2467 = vld [vmem:[%s656 + $0x38] sm:$0x1]
        %v2468 = vld [vmem:[%s656 + $0x3c] sm:$0xe]
        %v2469 = vld [vmem:[%s656 + $0x40] sm:$0xf]
        %v2470 = vld [vmem:[%s656 + $0x44] sm:$0x1]
        %v2471 = vld [vmem:[%s656 + $0x48] sm:$0xe]
        %v2472 = vld [vmem:[%s656 + $0x4c] sm:$0xf]
        %v2473 = vld [vmem:[%s656 + $0x50] sm:$0x1]
        %v2474 = vld [vmem:[%s656 + $0x54] sm:$0xe]
        %v2475 = vld [vmem:[%s656 + $0x58] sm:$0xf]
        %v2476 = vld [vmem:[%s656 + $0x5c] sm:$0x1]
        %v2501 = vrot.slane %v2453, 5
        %v2502 = vrot.slane %v2501, 4
        %v2503 = vrot.slane %v2454, 5
        %v2504 = vsel %vm1524, %v2502, %v2503
        %v2505 = vrot.slane %v2503, 4
        %v2506 = vrot.slane %v2455, 5
        %v2507 = vsel %vm1524, %v2505, %v2506
        %v2508 = vrot.slane %v2456, 5
        %v2509 = vrot.slane %v2508, 4
        %v2510 = vrot.slane %v2457, 5
        %v2511 = vsel %vm1524, %v2509, %v2510
        %v2512 = vrot.slane %v2510, 4
        %v2513 = vrot.slane %v2458, 5
        %v2514 = vsel %vm1524, %v2512, %v2513
        %v2515 = vrot.slane %v2459, 5
        %v2516 = vrot.slane %v2515, 4
        %v2517 = vrot.slane %v2460, 5
        %v2518 = vsel %vm1524, %v2516, %v2517
        %v2519 = vrot.slane %v2517, 4
        %v2520 = vrot.slane %v2461, 5
        %v2521 = vsel %vm1524, %v2519, %v2520
        %v2522 = vrot.slane %v2462, 5
        %v2523 = vrot.slane %v2522, 4
        %v2524 = vrot.slane %v2463, 5
        %v2525 = vsel %vm1524, %v2523, %v2524
        %v2526 = vrot.slane %v2524, 4
        %v2527 = vrot.slane %v2464, 5
        %v2528 = vsel %vm1524, %v2526, %v2527
        %v2529 = vrot.slane %v2465, 5
        %v2530 = vrot.slane %v2529, 4
        %v2531 = vrot.slane %v2466, 5
        %v2532 = vsel %vm1524, %v2530, %v2531
        %v2533 = vrot.slane %v2531, 4
        %v2534 = vrot.slane %v2467, 5
        %v2535 = vsel %vm1524, %v2533, %v2534
        %v2536 = vrot.slane %v2468, 5
        %v2537 = vrot.slane %v2536, 4
        %v2538 = vrot.slane %v2469, 5
        %v2539 = vsel %vm1524, %v2537, %v2538
        %v2540 = vrot.slane %v2538, 4
        %v2541 = vrot.slane %v2470, 5
        %v2542 = vsel %vm1524, %v2540, %v2541
        %v2543 = vrot.slane %v2471, 5
        %v2544 = vrot.slane %v2543, 4
        %v2545 = vrot.slane %v2472, 5
        %v2546 = vsel %vm1524, %v2544, %v2545
        %v2547 = vrot.slane %v2545, 4
        %v2548 = vrot.slane %v2473, 5
        %v2549 = vsel %vm1524, %v2547, %v2548
        %v2550 = vrot.slane %v2474, 5
        %v2551 = vrot.slane %v2550, 4
        %v2552 = vrot.slane %v2475, 5
        %v2553 = vsel %vm1524, %v2551, %v2552
        %v2554 = vrot.slane %v2552, 4
        %v2555 = vrot.slane %v2476, 5
        %v2556 = vsel %vm1524, %v2554, %v2555
        %v2557 = vld [vmem:[#allocation10 + $0x3c] sm:$0xf]
        %v2558 = vld [vmem:[#allocation10 + $0x40] sm:$0xf]
        %v2559 = vld [vmem:[#allocation10 + $0x44] sm:$0xf]
        %v2560 = vld [vmem:[#allocation3] sm:$0xff]
        %v2561 = vld [vmem:[#allocation3 + $0x8] sm:$0xff]
        %v2562 = vld [vmem:[#allocation3 + $0x10] sm:$0xff]
        %v2563 = vld [vmem:[#allocation3 + $0x18] sm:$0xff]
        %v2564 = vld [vmem:[#allocation3 + $0x20] sm:$0xff]
        %v2565 = vld [vmem:[#allocation3 + $0x28] sm:$0xff]
        %v2566 = vld [vmem:[#allocation3 + $0x30] sm:$0xff]
        %v2567 = vld [vmem:[#allocation3 + $0x38] sm:$0xff]
        %v2568 = vld [vmem:[#allocation3 + $0x40] sm:$0xff]
        %v2569 = vld [vmem:[#allocation3 + $0x48] sm:$0xff]
        %v2570 = vld [vmem:[#allocation3 + $0x50] sm:$0xff]
        %v2571 = vld [vmem:[#allocation3 + $0x58] sm:$0xff]
        %v2572 = vld [vmem:[#allocation3 + $0x60] sm:$0xff]
        %v2573 = vld [vmem:[#allocation3 + $0x68] sm:$0xff]
        %v2574 = vld [vmem:[#allocation3 + $0x70] sm:$0xff]
        %v2575 = vld [vmem:[#allocation3 + $0x78] sm:$0xff]
        %v2576 = vunpack.c.l.b16 %v2504
        %v2577 = vunpack.c.l.b16 %v2507
        %v2578 = vunpack.c.l.b16 %v2511
        %v2579 = vunpack.c.l.b16 %v2514
        %v2580 = vunpack.c.l.b16 %v2518
        %v2581 = vunpack.c.l.b16 %v2521
        %v2582 = vunpack.c.l.b16 %v2525
        %v2583 = vunpack.c.l.b16 %v2528
        %v2584 = vunpack.c.l.b16 %v2532
        %v2585 = vunpack.c.l.b16 %v2535
        %v2586 = vunpack.c.l.b16 %v2539
        %v2587 = vunpack.c.l.b16 %v2542
        %v2588 = vunpack.c.l.b16 %v2546
        %v2589 = vunpack.c.l.b16 %v2549
        %v2590 = vunpack.c.l.b16 %v2553
        %v2591 = vunpack.c.l.b16 %v2556
        %v2592 = vpack.c.b16 %v2577, %v2576
        %v2593 = vpack.c.b16 %v2579, %v2578
        %v2594 = vpack.c.b16 %v2581, %v2580
        %v2595 = vpack.c.b16 %v2583, %v2582
        %v2596 = vpack.c.b16 %v2585, %v2584
        %v2597 = vpack.c.b16 %v2587, %v2586
        %v2598 = vpack.c.b16 %v2589, %v2588
        %v2599 = vpack.c.b16 %v2591, %v2590
        %v2603 = vunpack.c.l.b16 %v2557
        %v2604 = vunpack.c.l.b16 %v2558
        %v2605 = vunpack.c.l.b16 %v2559
        %v2606 = vpack.c.b16 %v2604, %v2603
        %v2607 = vpack.c.b16 %v2605, %v2605
        %v2610 = vsel %vm889, %v2592, 0
        %v2613 = vsel %vm889, %v2593, 0
        %v2616 = vsel %vm889, %v2594, 0
        %v2619 = vsel %vm889, %v2595, 0
        %v2622 = vsel %vm889, %v2596, 0
        %v2625 = vsel %vm889, %v2597, 0
        %v2628 = vsel %vm889, %v2598, 0
        %v2631 = vsel %vm889, %v2599, 0
        %v2634 = vsel %vm914, %v2607, 0
        %2636 = vmatprep.subr.bf16.mxu0 0
        %2637 = vmatpush1.bf16.msra.mxu0 %v2606
        %2638 = vmatprep.subr.bf16.mxu0 0
        %2639 = vmatpush1.bf16.msra.mxu0 %v2634
        %2640 = vmatprep.subr.bf16.mxu0 0
        %2641 = vmatpush1.bf16.msra.mxu0 0
        %2642 = vmatprep.subr.bf16.mxu0 0
        %2643 = vmatpush1.bf16.msra.mxu0 0
        %2644 = vmatprep.subr.bf16.mxu0 0
        %2645 = vmatpush1.bf16.msra.mxu0 0
        %2646 = vmatprep.subr.bf16.mxu0 0
        %2647 = vmatpush1.bf16.msra.mxu0 0
        %2648 = vmatprep.subr.bf16.mxu0 0
        %2649 = vmatpush1.bf16.msra.mxu0 0
        %2650 = vmatprep.subr.bf16.mxu0 0
        %2651 = vmatpush1.bf16.msra.mxu0 0
        %2652 = vmatprep.subr.bf16.mxu0 0
        %2653 = vmatpush1.bf16.msra.mxu0 0
        %2654 = vmatprep.subr.bf16.mxu0 0
        %2655 = vmatpush1.bf16.msra.mxu0 0
        %2656 = vmatprep.subr.bf16.mxu0 0
        %2657 = vmatpush1.bf16.msra.mxu0 0
        %2658 = vmatprep.subr.bf16.mxu0 0
        %2659 = vmatpush1.bf16.msra.mxu0 0
        %2660 = vmatprep.subr.bf16.mxu0 0
        %2661 = vmatpush1.bf16.msra.mxu0 0
        %2662 = vmatprep.subr.bf16.mxu0 0
        %2663 = vmatpush1.bf16.msra.mxu0 0
        %2664 = vmatprep.subr.bf16.mxu0 0
        %2665 = vmatpush1.bf16.msra.mxu0 0
        %2666 = vmatprep.subr.bf16.mxu0 0
        %2667 = vmatpush1.bf16.msra.mxu0 0
        %2668 = vmatprep.mubr.bf16.mxu0 0
        %2669 = vmatmul.mubr.bf16.gmra.mrb[0].mxu0 %v2610
        %v2670 = vpop.f32.mrb[0].mxu0
        %v2671 = vadd.f32 0.0, %v2670
        %v2672 = vpop.f32.mrb[0].mxu0
        %v2673 = vpop.f32.mrb[0].mxu0
        %v2674 = vadd.f32 0.0, %v2673
        %v2675 = vpop.f32.mrb[0].mxu0
        %2676 = vmatprep.mubr.bf16.mxu0 0
        %2677 = vmatmul.mubr.bf16.gmra.mrb[0].mxu0 %v2613
        %v2678 = vpop.f32.mrb[0].mxu0
        %v2679 = vadd.f32 0.0, %v2678
        %v2680 = vpop.f32.mrb[0].mxu0
        %v2681 = vpop.f32.mrb[0].mxu0
        %v2682 = vadd.f32 0.0, %v2681
        %v2683 = vpop.f32.mrb[0].mxu0
        %2684 = vmatprep.mubr.bf16.mxu0 0
        %2685 = vmatmul.mubr.bf16.gmra.mrb[0].mxu0 %v2616
        %v2686 = vpop.f32.mrb[0].mxu0
        %v2687 = vadd.f32 0.0, %v2686
        %v2688 = vpop.f32.mrb[0].mxu0
        %v2689 = vpop.f32.mrb[0].mxu0
        %v2690 = vadd.f32 0.0, %v2689
        %v2691 = vpop.f32.mrb[0].mxu0
        %2692 = vmatprep.mubr.bf16.mxu0 0
        %2693 = vmatmul.mubr.bf16.gmra.mrb[0].mxu0 %v2619
        %v2694 = vpop.f32.mrb[0].mxu0
        %v2695 = vadd.f32 0.0, %v2694
        %v2696 = vpop.f32.mrb[0].mxu0
        %v2697 = vpop.f32.mrb[0].mxu0
        %v2698 = vadd.f32 0.0, %v2697
        %v2699 = vpop.f32.mrb[0].mxu0
        %2700 = vmatprep.mubr.bf16.mxu0 0
        %2701 = vmatmul.mubr.bf16.gmra.mrb[0].mxu0 %v2622
        %v2702 = vpop.f32.mrb[0].mxu0
        %v2703 = vadd.f32 0.0, %v2702
        %v2704 = vpop.f32.mrb[0].mxu0
        %v2705 = vpop.f32.mrb[0].mxu0
        %v2706 = vadd.f32 0.0, %v2705
        %v2707 = vpop.f32.mrb[0].mxu0
        %2708 = vmatprep.mubr.bf16.mxu0 0
        %2709 = vmatmul.mubr.bf16.gmra.mrb[0].mxu0 %v2625
        %v2710 = vpop.f32.mrb[0].mxu0
        %v2711 = vadd.f32 0.0, %v2710
        %v2712 = vpop.f32.mrb[0].mxu0
        %v2713 = vpop.f32.mrb[0].mxu0
        %v2714 = vadd.f32 0.0, %v2713
        %v2715 = vpop.f32.mrb[0].mxu0
        %2716 = vmatprep.mubr.bf16.mxu0 0
        %2717 = vmatmul.mubr.bf16.gmra.mrb[0].mxu0 %v2628
        %v2718 = vpop.f32.mrb[0].mxu0
        %v2719 = vadd.f32 0.0, %v2718
        %v2720 = vpop.f32.mrb[0].mxu0
        %v2721 = vpop.f32.mrb[0].mxu0
        %v2722 = vadd.f32 0.0, %v2721
        %v2723 = vpop.f32.mrb[0].mxu0
        %2724 = vmatprep.mubr.bf16.mxu0 0
        %2725 = vmatmul.mubr.bf16.gmra.mrb[0].mxu0 %v2631
        %v2726 = vpop.f32.mrb[0].mxu0
        %v2727 = vadd.f32 0.0, %v2726
        %v2728 = vpop.f32.mrb[0].mxu0
        %v2729 = vpop.f32.mrb[0].mxu0
        %v2730 = vadd.f32 0.0, %v2729
        %v2731 = vpop.f32.mrb[0].mxu0
        %2732 = vdwg.mxu0
        %v2733 = vadd.f32 %v2560, %v2671
        %v2734 = vadd.f32 %v2561, %v2674
        %v2735 = vadd.f32 %v2562, %v2679
        %v2736 = vadd.f32 %v2563, %v2682
        %v2737 = vadd.f32 %v2564, %v2687
        %v2738 = vadd.f32 %v2565, %v2690
        %v2739 = vadd.f32 %v2566, %v2695
        %v2740 = vadd.f32 %v2567, %v2698
        %v2741 = vadd.f32 %v2568, %v2703
        %v2742 = vadd.f32 %v2569, %v2706
        %v2743 = vadd.f32 %v2570, %v2711
        %v2744 = vadd.f32 %v2571, %v2714
        %v2745 = vadd.f32 %v2572, %v2719
        %v2746 = vadd.f32 %v2573, %v2722
        %v2747 = vadd.f32 %v2574, %v2727
        %v2748 = vadd.f32 %v2575, %v2730
        %2749 = vst [vmem:[#allocation3] sm:$0xff] %v2733
        %2750 = vst [vmem:[#allocation3 + $0x8] sm:$0xff] %v2734
        %2751 = vst [vmem:[#allocation3 + $0x10] sm:$0xff] %v2735
        %2752 = vst [vmem:[#allocation3 + $0x18] sm:$0xff] %v2736
        %2753 = vst [vmem:[#allocation3 + $0x20] sm:$0xff] %v2737
        %2754 = vst [vmem:[#allocation3 + $0x28] sm:$0xff] %v2738
        %2755 = vst [vmem:[#allocation3 + $0x30] sm:$0xff] %v2739
        %2756 = vst [vmem:[#allocation3 + $0x38] sm:$0xff] %v2740
        %2757 = vst [vmem:[#allocation3 + $0x40] sm:$0xff] %v2741
        %2758 = vst [vmem:[#allocation3 + $0x48] sm:$0xff] %v2742
        %2759 = vst [vmem:[#allocation3 + $0x50] sm:$0xff] %v2743
        %2760 = vst [vmem:[#allocation3 + $0x58] sm:$0xff] %v2744
        %2761 = vst [vmem:[#allocation3 + $0x60] sm:$0xff] %v2745
        %2762 = vst [vmem:[#allocation3 + $0x68] sm:$0xff] %v2746
        %2763 = vst [vmem:[#allocation3 + $0x70] sm:$0xff] %v2747
        %2764 = vst [vmem:[#allocation3 + $0x78] sm:$0xff] %v2748
        %s2765 = scalar_lea.vmem [#allocation2], 24
        %v2766 = vld [vmem:[%s2765] sm:$0xf]
        %v2767 = vld [vmem:[%s2765 + $0x4] sm:$0xf]
        %v2768 = vld [vmem:[%s2765 + $0xc] sm:$0xf]
        %v2769 = vld [vmem:[%s2765 + $0x10] sm:$0xf]
        %v2770 = vld [vmem:[%s2765 + $0x18] sm:$0xf]
        %v2771 = vld [vmem:[%s2765 + $0x1c] sm:$0xf]
        %v2772 = vld [vmem:[%s2765 + $0x24] sm:$0xf]
        %v2773 = vld [vmem:[%s2765 + $0x28] sm:$0xf]
        %v2774 = vld [vmem:[%s2765 + $0x30] sm:$0xf]
        %v2775 = vld [vmem:[%s2765 + $0x34] sm:$0xf]
        %v2776 = vld [vmem:[%s2765 + $0x3c] sm:$0xf]
        %v2777 = vld [vmem:[%s2765 + $0x40] sm:$0xf]
        %v2778 = vld [vmem:[%s2765 + $0x48] sm:$0xf]
        %v2779 = vld [vmem:[%s2765 + $0x4c] sm:$0xf]
        %v2780 = vld [vmem:[%s2765 + $0x54] sm:$0xf]
        %v2781 = vld [vmem:[%s2765 + $0x58] sm:$0xf]
        %v2782 = vld [vmem:[#allocation10 + $0x48] sm:$0xf]
        %v2783 = vld [vmem:[#allocation10 + $0x4c] sm:$0xf]
        %v2784 = vld [vmem:[#allocation10 + $0x50] sm:$0xf]
        %v2785 = vld [vmem:[#allocation3] sm:$0xff]
        %v2786 = vld [vmem:[#allocation3 + $0x8] sm:$0xff]
        %v2787 = vld [vmem:[#allocation3 + $0x10] sm:$0xff]
        %v2788 = vld [vmem:[#allocation3 + $0x18] sm:$0xff]
        %v2789 = vld [vmem:[#allocation3 + $0x20] sm:$0xff]
        %v2790 = vld [vmem:[#allocation3 + $0x28] sm:$0xff]
        %v2791 = vld [vmem:[#allocation3 + $0x30] sm:$0xff]
        %v2792 = vld [vmem:[#allocation3 + $0x38] sm:$0xff]
        %v2793 = vld [vmem:[#allocation3 + $0x40] sm:$0xff]
        %v2794 = vld [vmem:[#allocation3 + $0x48] sm:$0xff]
        %v2795 = vld [vmem:[#allocation3 + $0x50] sm:$0xff]
        %v2796 = vld [vmem:[#allocation3 + $0x58] sm:$0xff]
        %v2797 = vld [vmem:[#allocation3 + $0x60] sm:$0xff]
        %v2798 = vld [vmem:[#allocation3 + $0x68] sm:$0xff]
        %v2799 = vld [vmem:[#allocation3 + $0x70] sm:$0xff]
        %v2800 = vld [vmem:[#allocation3 + $0x78] sm:$0xff]
        %v2817 = vunpack.c.l.b16 %v2766
        %v2818 = vunpack.c.l.b16 %v2767
        %v2819 = vunpack.c.l.b16 %v2768
        %v2820 = vunpack.c.l.b16 %v2769
        %v2821 = vunpack.c.l.b16 %v2770
        %v2822 = vunpack.c.l.b16 %v2771
        %v2823 = vunpack.c.l.b16 %v2772
        %v2824 = vunpack.c.l.b16 %v2773
        %v2825 = vunpack.c.l.b16 %v2774
        %v2826 = vunpack.c.l.b16 %v2775
        %v2827 = vunpack.c.l.b16 %v2776
        %v2828 = vunpack.c.l.b16 %v2777
        %v2829 = vunpack.c.l.b16 %v2778
        %v2830 = vunpack.c.l.b16 %v2779
        %v2831 = vunpack.c.l.b16 %v2780
        %v2832 = vunpack.c.l.b16 %v2781
        %v2833 = vpack.c.b16 %v2818, %v2817
        %v2834 = vpack.c.b16 %v2820, %v2819
        %v2835 = vpack.c.b16 %v2822, %v2821
        %v2836 = vpack.c.b16 %v2824, %v2823
        %v2837 = vpack.c.b16 %v2826, %v2825
        %v2838 = vpack.c.b16 %v2828, %v2827
        %v2839 = vpack.c.b16 %v2830, %v2829
        %v2840 = vpack.c.b16 %v2832, %v2831
        %v2844 = vunpack.c.l.b16 %v2782
        %v2845 = vunpack.c.l.b16 %v2783
        %v2846 = vunpack.c.l.b16 %v2784
        %v2847 = vpack.c.b16 %v2845, %v2844
        %v2848 = vpack.c.b16 %v2846, %v2846
        %v2851 = vsel %vm889, %v2833, 0
        %v2854 = vsel %vm889, %v2834, 0
        %v2857 = vsel %vm889, %v2835, 0
        %v2860 = vsel %vm889, %v2836, 0
        %v2863 = vsel %vm889, %v2837, 0
        %v2866 = vsel %vm889, %v2838, 0
        %v2869 = vsel %vm889, %v2839, 0
        %v2872 = vsel %vm889, %v2840, 0
        %v2875 = vsel %vm914, %v2848, 0
        %2877 = vmatprep.subr.bf16.mxu0 0
        %2878 = vmatpush1.bf16.msra.mxu0 %v2847
        %2879 = vmatprep.subr.bf16.mxu0 0
        %2880 = vmatpush1.bf16.msra.mxu0 %v2875
        %2881 = vmatprep.subr.bf16.mxu0 0
        %2882 = vmatpush1.bf16.msra.mxu0 0
        %2883 = vmatprep.subr.bf16.mxu0 0
        %2884 = vmatpush1.bf16.msra.mxu0 0
        %2885 = vmatprep.subr.bf16.mxu0 0
        %2886 = vmatpush1.bf16.msra.mxu0 0
        %2887 = vmatprep.subr.bf16.mxu0 0
        %2888 = vmatpush1.bf16.msra.mxu0 0
        %2889 = vmatprep.subr.bf16.mxu0 0
        %2890 = vmatpush1.bf16.msra.mxu0 0
        %2891 = vmatprep.subr.bf16.mxu0 0
        %2892 = vmatpush1.bf16.msra.mxu0 0
        %2893 = vmatprep.subr.bf16.mxu0 0
        %2894 = vmatpush1.bf16.msra.mxu0 0
        %2895 = vmatprep.subr.bf16.mxu0 0
        %2896 = vmatpush1.bf16.msra.mxu0 0
        %2897 = vmatprep.subr.bf16.mxu0 0
        %2898 = vmatpush1.bf16.msra.mxu0 0
        %2899 = vmatprep.subr.bf16.mxu0 0
        %2900 = vmatpush1.bf16.msra.mxu0 0
        %2901 = vmatprep.subr.bf16.mxu0 0
        %2902 = vmatpush1.bf16.msra.mxu0 0
        %2903 = vmatprep.subr.bf16.mxu0 0
        %2904 = vmatpush1.bf16.msra.mxu0 0
        %2905 = vmatprep.subr.bf16.mxu0 0
        %2906 = vmatpush1.bf16.msra.mxu0 0
        %2907 = vmatprep.subr.bf16.mxu0 0
        %2908 = vmatpush1.bf16.msra.mxu0 0
        %2909 = vmatprep.mubr.bf16.mxu0 0
        %2910 = vmatmul.mubr.bf16.gmra.mrb[0].mxu0 %v2851
        %v2911 = vpop.f32.mrb[0].mxu0
        %v2912 = vadd.f32 0.0, %v2911
        %v2913 = vpop.f32.mrb[0].mxu0
        %v2914 = vpop.f32.mrb[0].mxu0
        %v2915 = vadd.f32 0.0, %v2914
        %v2916 = vpop.f32.mrb[0].mxu0
        %2917 = vmatprep.mubr.bf16.mxu0 0
        %2918 = vmatmul.mubr.bf16.gmra.mrb[0].mxu0 %v2854
        %v2919 = vpop.f32.mrb[0].mxu0
        %v2920 = vadd.f32 0.0, %v2919
        %v2921 = vpop.f32.mrb[0].mxu0
        %v2922 = vpop.f32.mrb[0].mxu0
        %v2923 = vadd.f32 0.0, %v2922
        %v2924 = vpop.f32.mrb[0].mxu0
        %2925 = vmatprep.mubr.bf16.mxu0 0
        %2926 = vmatmul.mubr.bf16.gmra.mrb[0].mxu0 %v2857
        %v2927 = vpop.f32.mrb[0].mxu0
        %v2928 = vadd.f32 0.0, %v2927
        %v2929 = vpop.f32.mrb[0].mxu0
        %v2930 = vpop.f32.mrb[0].mxu0
        %v2931 = vadd.f32 0.0, %v2930
        %v2932 = vpop.f32.mrb[0].mxu0
        %2933 = vmatprep.mubr.bf16.mxu0 0
        %2934 = vmatmul.mubr.bf16.gmra.mrb[0].mxu0 %v2860
        %v2935 = vpop.f32.mrb[0].mxu0
        %v2936 = vadd.f32 0.0, %v2935
        %v2937 = vpop.f32.mrb[0].mxu0
        %v2938 = vpop.f32.mrb[0].mxu0
        %v2939 = vadd.f32 0.0, %v2938
        %v2940 = vpop.f32.mrb[0].mxu0
        %2941 = vmatprep.mubr.bf16.mxu0 0
        %2942 = vmatmul.mubr.bf16.gmra.mrb[0].mxu0 %v2863
        %v2943 = vpop.f32.mrb[0].mxu0
        %v2944 = vadd.f32 0.0, %v2943
        %v2945 = vpop.f32.mrb[0].mxu0
        %v2946 = vpop.f32.mrb[0].mxu0
        %v2947 = vadd.f32 0.0, %v2946
        %v2948 = vpop.f32.mrb[0].mxu0
        %2949 = vmatprep.mubr.bf16.mxu0 0
        %2950 = vmatmul.mubr.bf16.gmra.mrb[0].mxu0 %v2866
        %v2951 = vpop.f32.mrb[0].mxu0
        %v2952 = vadd.f32 0.0, %v2951
        %v2953 = vpop.f32.mrb[0].mxu0
        %v2954 = vpop.f32.mrb[0].mxu0
        %v2955 = vadd.f32 0.0, %v2954
        %v2956 = vpop.f32.mrb[0].mxu0
        %2957 = vmatprep.mubr.bf16.mxu0 0
        %2958 = vmatmul.mubr.bf16.gmra.mrb[0].mxu0 %v2869
        %v2959 = vpop.f32.mrb[0].mxu0
        %v2960 = vadd.f32 0.0, %v2959
        %v2961 = vpop.f32.mrb[0].mxu0
        %v2962 = vpop.f32.mrb[0].mxu0
        %v2963 = vadd.f32 0.0, %v2962
        %v2964 = vpop.f32.mrb[0].mxu0
        %2965 = vmatprep.mubr.bf16.mxu0 0
        %2966 = vmatmul.mubr.bf16.gmra.mrb[0].mxu0 %v2872
        %v2967 = vpop.f32.mrb[0].mxu0
        %v2968 = vadd.f32 0.0, %v2967
        %v2969 = vpop.f32.mrb[0].mxu0
        %v2970 = vpop.f32.mrb[0].mxu0
        %v2971 = vadd.f32 0.0, %v2970
        %v2972 = vpop.f32.mrb[0].mxu0
        %2973 = vdwg.mxu0
        %v2974 = vadd.f32 %v2785, %v2912
        %v2975 = vadd.f32 %v2786, %v2915
        %v2976 = vadd.f32 %v2787, %v2920
        %v2977 = vadd.f32 %v2788, %v2923
        %v2978 = vadd.f32 %v2789, %v2928
        %v2979 = vadd.f32 %v2790, %v2931
        %v2980 = vadd.f32 %v2791, %v2936
        %v2981 = vadd.f32 %v2792, %v2939
        %v2982 = vadd.f32 %v2793, %v2944
        %v2983 = vadd.f32 %v2794, %v2947
        %v2984 = vadd.f32 %v2795, %v2952
        %v2985 = vadd.f32 %v2796, %v2955
        %v2986 = vadd.f32 %v2797, %v2960
        %v2987 = vadd.f32 %v2798, %v2963
        %v2988 = vadd.f32 %v2799, %v2968
        %v2989 = vadd.f32 %v2800, %v2971
        %2990 = vst [vmem:[#allocation3] sm:$0xff] %v2974
        %2991 = vst [vmem:[#allocation3 + $0x8] sm:$0xff] %v2975
        %2992 = vst [vmem:[#allocation3 + $0x10] sm:$0xff] %v2976
        %2993 = vst [vmem:[#allocation3 + $0x18] sm:$0xff] %v2977
        %2994 = vst [vmem:[#allocation3 + $0x20] sm:$0xff] %v2978
        %2995 = vst [vmem:[#allocation3 + $0x28] sm:$0xff] %v2979
        %2996 = vst [vmem:[#allocation3 + $0x30] sm:$0xff] %v2980
        %2997 = vst [vmem:[#allocation3 + $0x38] sm:$0xff] %v2981
        %2998 = vst [vmem:[#allocation3 + $0x40] sm:$0xff] %v2982
        %2999 = vst [vmem:[#allocation3 + $0x48] sm:$0xff] %v2983
        %3000 = vst [vmem:[#allocation3 + $0x50] sm:$0xff] %v2984
        %3001 = vst [vmem:[#allocation3 + $0x58] sm:$0xff] %v2985
        %3002 = vst [vmem:[#allocation3 + $0x60] sm:$0xff] %v2986
        %3003 = vst [vmem:[#allocation3 + $0x68] sm:$0xff] %v2987
        %3004 = vst [vmem:[#allocation3 + $0x70] sm:$0xff] %v2988
        %3005 = vst [vmem:[#allocation3 + $0x78] sm:$0xff] %v2989
        %v3006 = vld [vmem:[%s2765] sm:$0xf]
        %v3007 = vld [vmem:[%s2765 + $0x4] sm:$0xf]
        %v3008 = vld [vmem:[%s2765 + $0x8] sm:$0x1]
        %v3009 = vld [vmem:[%s2765 + $0xc] sm:$0xf]
        %v3010 = vld [vmem:[%s2765 + $0x10] sm:$0xf]
        %v3011 = vld [vmem:[%s2765 + $0x14] sm:$0x1]
        %v3012 = vld [vmem:[%s2765 + $0x18] sm:$0xf]
        %v3013 = vld [vmem:[%s2765 + $0x1c] sm:$0xf]
        %v3014 = vld [vmem:[%s2765 + $0x20] sm:$0x1]
        %v3015 = vld [vmem:[%s2765 + $0x24] sm:$0xf]
        %v3016 = vld [vmem:[%s2765 + $0x28] sm:$0xf]
        %v3017 = vld [vmem:[%s2765 + $0x2c] sm:$0x1]
        %v3018 = vld [vmem:[%s2765 + $0x30] sm:$0xf]
        %v3019 = vld [vmem:[%s2765 + $0x34] sm:$0xf]
        %v3020 = vld [vmem:[%s2765 + $0x38] sm:$0x1]
        %v3021 = vld [vmem:[%s2765 + $0x3c] sm:$0xf]
        %v3022 = vld [vmem:[%s2765 + $0x40] sm:$0xf]
        %v3023 = vld [vmem:[%s2765 + $0x44] sm:$0x1]
        %v3024 = vld [vmem:[%s2765 + $0x48] sm:$0xf]
        %v3025 = vld [vmem:[%s2765 + $0x4c] sm:$0xf]
        %v3026 = vld [vmem:[%s2765 + $0x50] sm:$0x1]
        %v3027 = vld [vmem:[%s2765 + $0x54] sm:$0xf]
        %v3028 = vld [vmem:[%s2765 + $0x58] sm:$0xf]
        %v3029 = vld [vmem:[%s2765 + $0x5c] sm:$0x1]
        %v3031 = vshrl.u32 %v3006, 16
        %v3033 = vrot.slane %v3031, 4
        %v3034 = vshll.u32 %v3006, 16
        %v3036 = vrot.slane %v3034, 5
        %v3037 = vor.u32 %v3033, %v3036
        %v3038 = vrot.slane %v3037, 4
        %v3040 = vshll.u32 %v3007, 16
        %v3042 = vrot.slane %v3040, 5
        %v3043 = vsel %vm1073, %v3038, %v3042
        %v3044 = vshrl.u32 %v3007, 16
        %v3046 = vrot.slane %v3044, 4
        %v3047 = vor.u32 %v3046, %v3042
        %v3048 = vrot.slane %v3047, 4
        %v3050 = vshll.u32 %v3008, 16
        %v3052 = vrot.slane %v3050, 5
        %v3053 = vsel %vm1073, %v3048, %v3052
        %v3055 = vshrl.u32 %v3009, 16
        %v3057 = vrot.slane %v3055, 4
        %v3058 = vshll.u32 %v3009, 16
        %v3060 = vrot.slane %v3058, 5
        %v3061 = vor.u32 %v3057, %v3060
        %v3062 = vrot.slane %v3061, 4
        %v3064 = vshll.u32 %v3010, 16
        %v3066 = vrot.slane %v3064, 5
        %v3067 = vsel %vm1073, %v3062, %v3066
        %v3068 = vshrl.u32 %v3010, 16
        %v3070 = vrot.slane %v3068, 4
        %v3071 = vor.u32 %v3070, %v3066
        %v3072 = vrot.slane %v3071, 4
        %v3074 = vshll.u32 %v3011, 16
        %v3076 = vrot.slane %v3074, 5
        %v3077 = vsel %vm1073, %v3072, %v3076
        %v3079 = vshrl.u32 %v3012, 16
        %v3081 = vrot.slane %v3079, 4
        %v3082 = vshll.u32 %v3012, 16
        %v3084 = vrot.slane %v3082, 5
        %v3085 = vor.u32 %v3081, %v3084
        %v3086 = vrot.slane %v3085, 4
        %v3088 = vshll.u32 %v3013, 16
        %v3090 = vrot.slane %v3088, 5
        %v3091 = vsel %vm1073, %v3086, %v3090
        %v3092 = vshrl.u32 %v3013, 16
        %v3094 = vrot.slane %v3092, 4
        %v3095 = vor.u32 %v3094, %v3090
        %v3096 = vrot.slane %v3095, 4
        %v3098 = vshll.u32 %v3014, 16
        %v3100 = vrot.slane %v3098, 5
        %v3101 = vsel %vm1073, %v3096, %v3100
        %v3103 = vshrl.u32 %v3015, 16
        %v3105 = vrot.slane %v3103, 4
        %v3106 = vshll.u32 %v3015, 16
        %v3108 = vrot.slane %v3106, 5
        %v3109 = vor.u32 %v3105, %v3108
        %v3110 = vrot.slane %v3109, 4
        %v3112 = vshll.u32 %v3016, 16
        %v3114 = vrot.slane %v3112, 5
        %v3115 = vsel %vm1073, %v3110, %v3114
        %v3116 = vshrl.u32 %v3016, 16
        %v3118 = vrot.slane %v3116, 4
        %v3119 = vor.u32 %v3118, %v3114
        %v3120 = vrot.slane %v3119, 4
        %v3122 = vshll.u32 %v3017, 16
        %v3124 = vrot.slane %v3122, 5
        %v3125 = vsel %vm1073, %v3120, %v3124
        %v3127 = vshrl.u32 %v3018, 16
        %v3129 = vrot.slane %v3127, 4
        %v3130 = vshll.u32 %v3018, 16
        %v3132 = vrot.slane %v3130, 5
        %v3133 = vor.u32 %v3129, %v3132
        %v3134 = vrot.slane %v3133, 4
        %v3136 = vshll.u32 %v3019, 16
        %v3138 = vrot.slane %v3136, 5
        %v3139 = vsel %vm1073, %v3134, %v3138
        %v3140 = vshrl.u32 %v3019, 16
        %v3142 = vrot.slane %v3140, 4
        %v3143 = vor.u32 %v3142, %v3138
        %v3144 = vrot.slane %v3143, 4
        %v3146 = vshll.u32 %v3020, 16
        %v3148 = vrot.slane %v3146, 5
        %v3149 = vsel %vm1073, %v3144, %v3148
        %v3151 = vshrl.u32 %v3021, 16
        %v3153 = vrot.slane %v3151, 4
        %v3154 = vshll.u32 %v3021, 16
        %v3156 = vrot.slane %v3154, 5
        %v3157 = vor.u32 %v3153, %v3156
        %v3158 = vrot.slane %v3157, 4
        %v3160 = vshll.u32 %v3022, 16
        %v3162 = vrot.slane %v3160, 5
        %v3163 = vsel %vm1073, %v3158, %v3162
        %v3164 = vshrl.u32 %v3022, 16
        %v3166 = vrot.slane %v3164, 4
        %v3167 = vor.u32 %v3166, %v3162
        %v3168 = vrot.slane %v3167, 4
        %v3170 = vshll.u32 %v3023, 16
        %v3172 = vrot.slane %v3170, 5
        %v3173 = vsel %vm1073, %v3168, %v3172
        %v3175 = vshrl.u32 %v3024, 16
        %v3177 = vrot.slane %v3175, 4
        %v3178 = vshll.u32 %v3024, 16
        %v3180 = vrot.slane %v3178, 5
        %v3181 = vor.u32 %v3177, %v3180
        %v3182 = vrot.slane %v3181, 4
        %v3184 = vshll.u32 %v3025, 16
        %v3186 = vrot.slane %v3184, 5
        %v3187 = vsel %vm1073, %v3182, %v3186
        %v3188 = vshrl.u32 %v3025, 16
        %v3190 = vrot.slane %v3188, 4
        %v3191 = vor.u32 %v3190, %v3186
        %v3192 = vrot.slane %v3191, 4
        %v3194 = vshll.u32 %v3026, 16
        %v3196 = vrot.slane %v3194, 5
        %v3197 = vsel %vm1073, %v3192, %v3196
        %v3199 = vshrl.u32 %v3027, 16
        %v3201 = vrot.slane %v3199, 4
        %v3202 = vshll.u32 %v3027, 16
        %v3204 = vrot.slane %v3202, 5
        %v3205 = vor.u32 %v3201, %v3204
        %v3206 = vrot.slane %v3205, 4
        %v3208 = vshll.u32 %v3028, 16
        %v3210 = vrot.slane %v3208, 5
        %v3211 = vsel %vm1073, %v3206, %v3210
        %v3212 = vshrl.u32 %v3028, 16
        %v3214 = vrot.slane %v3212, 4
        %v3215 = vor.u32 %v3214, %v3210
        %v3216 = vrot.slane %v3215, 4
        %v3218 = vshll.u32 %v3029, 16
        %v3220 = vrot.slane %v3218, 5
        %v3221 = vsel %vm1073, %v3216, %v3220
        %v3222 = vld [vmem:[#allocation10 + $0x54] sm:$0xf]
        %v3223 = vld [vmem:[#allocation10 + $0x58] sm:$0xf]
        %v3224 = vld [vmem:[#allocation10 + $0x5c] sm:$0xf]
        %v3225 = vld [vmem:[#allocation3] sm:$0xff]
        %v3226 = vld [vmem:[#allocation3 + $0x8] sm:$0xff]
        %v3227 = vld [vmem:[#allocation3 + $0x10] sm:$0xff]
        %v3228 = vld [vmem:[#allocation3 + $0x18] sm:$0xff]
        %v3229 = vld [vmem:[#allocation3 + $0x20] sm:$0xff]
        %v3230 = vld [vmem:[#allocation3 + $0x28] sm:$0xff]
        %v3231 = vld [vmem:[#allocation3 + $0x30] sm:$0xff]
        %v3232 = vld [vmem:[#allocation3 + $0x38] sm:$0xff]
        %v3233 = vld [vmem:[#allocation3 + $0x40] sm:$0xff]
        %v3234 = vld [vmem:[#allocation3 + $0x48] sm:$0xff]
        %v3235 = vld [vmem:[#allocation3 + $0x50] sm:$0xff]
        %v3236 = vld [vmem:[#allocation3 + $0x58] sm:$0xff]
        %v3237 = vld [vmem:[#allocation3 + $0x60] sm:$0xff]
        %v3238 = vld [vmem:[#allocation3 + $0x68] sm:$0xff]
        %v3239 = vld [vmem:[#allocation3 + $0x70] sm:$0xff]
        %v3240 = vld [vmem:[#allocation3 + $0x78] sm:$0xff]
        %v3241 = vunpack.c.l.b16 %v3043
        %v3242 = vunpack.c.l.b16 %v3053
        %v3243 = vunpack.c.l.b16 %v3067
        %v3244 = vunpack.c.l.b16 %v3077
        %v3245 = vunpack.c.l.b16 %v3091
        %v3246 = vunpack.c.l.b16 %v3101
        %v3247 = vunpack.c.l.b16 %v3115
        %v3248 = vunpack.c.l.b16 %v3125
        %v3249 = vunpack.c.l.b16 %v3139
        %v3250 = vunpack.c.l.b16 %v3149
        %v3251 = vunpack.c.l.b16 %v3163
        %v3252 = vunpack.c.l.b16 %v3173
        %v3253 = vunpack.c.l.b16 %v3187
        %v3254 = vunpack.c.l.b16 %v3197
        %v3255 = vunpack.c.l.b16 %v3211
        %v3256 = vunpack.c.l.b16 %v3221
        %v3257 = vpack.c.b16 %v3242, %v3241
        %v3258 = vpack.c.b16 %v3244, %v3243
        %v3259 = vpack.c.b16 %v3246, %v3245
        %v3260 = vpack.c.b16 %v3248, %v3247
        %v3261 = vpack.c.b16 %v3250, %v3249
        %v3262 = vpack.c.b16 %v3252, %v3251
        %v3263 = vpack.c.b16 %v3254, %v3253
        %v3264 = vpack.c.b16 %v3256, %v3255
        %v3268 = vunpack.c.l.b16 %v3222
        %v3269 = vunpack.c.l.b16 %v3223
        %v3270 = vunpack.c.l.b16 %v3224
        %v3271 = vpack.c.b16 %v3269, %v3268
        %v3272 = vpack.c.b16 %v3270, %v3270
        %v3275 = vsel %vm889, %v3257, 0
        %v3278 = vsel %vm889, %v3258, 0
        %v3281 = vsel %vm889, %v3259, 0
        %v3284 = vsel %vm889, %v3260, 0
        %v3287 = vsel %vm889, %v3261, 0
        %v3290 = vsel %vm889, %v3262, 0
        %v3293 = vsel %vm889, %v3263, 0
        %v3296 = vsel %vm889, %v3264, 0
        %v3299 = vsel %vm914, %v3272, 0
        %3301 = vmatprep.subr.bf16.mxu0 0
        %3302 = vmatpush1.bf16.msra.mxu0 %v3271
        %3303 = vmatprep.subr.bf16.mxu0 0
        %3304 = vmatpush1.bf16.msra.mxu0 %v3299
        %3305 = vmatprep.subr.bf16.mxu0 0
        %3306 = vmatpush1.bf16.msra.mxu0 0
        %3307 = vmatprep.subr.bf16.mxu0 0
        %3308 = vmatpush1.bf16.msra.mxu0 0
        %3309 = vmatprep.subr.bf16.mxu0 0
        %3310 = vmatpush1.bf16.msra.mxu0 0
        %3311 = vmatprep.subr.bf16.mxu0 0
        %3312 = vmatpush1.bf16.msra.mxu0 0
        %3313 = vmatprep.subr.bf16.mxu0 0
        %3314 = vmatpush1.bf16.msra.mxu0 0
        %3315 = vmatprep.subr.bf16.mxu0 0
        %3316 = vmatpush1.bf16.msra.mxu0 0
        %3317 = vmatprep.subr.bf16.mxu0 0
        %3318 = vmatpush1.bf16.msra.mxu0 0
        %3319 = vmatprep.subr.bf16.mxu0 0
        %3320 = vmatpush1.bf16.msra.mxu0 0
        %3321 = vmatprep.subr.bf16.mxu0 0
        %3322 = vmatpush1.bf16.msra.mxu0 0
        %3323 = vmatprep.subr.bf16.mxu0 0
        %3324 = vmatpush1.bf16.msra.mxu0 0
        %3325 = vmatprep.subr.bf16.mxu0 0
        %3326 = vmatpush1.bf16.msra.mxu0 0
        %3327 = vmatprep.subr.bf16.mxu0 0
        %3328 = vmatpush1.bf16.msra.mxu0 0
        %3329 = vmatprep.subr.bf16.mxu0 0
        %3330 = vmatpush1.bf16.msra.mxu0 0
        %3331 = vmatprep.subr.bf16.mxu0 0
        %3332 = vmatpush1.bf16.msra.mxu0 0
        %3333 = vmatprep.mubr.bf16.mxu0 0
        %3334 = vmatmul.mubr.bf16.gmra.mrb[0].mxu0 %v3275
        %v3335 = vpop.f32.mrb[0].mxu0
        %v3336 = vadd.f32 0.0, %v3335
        %v3337 = vpop.f32.mrb[0].mxu0
        %v3338 = vpop.f32.mrb[0].mxu0
        %v3339 = vadd.f32 0.0, %v3338
        %v3340 = vpop.f32.mrb[0].mxu0
        %3341 = vmatprep.mubr.bf16.mxu0 0
        %3342 = vmatmul.mubr.bf16.gmra.mrb[0].mxu0 %v3278
        %v3343 = vpop.f32.mrb[0].mxu0
        %v3344 = vadd.f32 0.0, %v3343
        %v3345 = vpop.f32.mrb[0].mxu0
        %v3346 = vpop.f32.mrb[0].mxu0
        %v3347 = vadd.f32 0.0, %v3346
        %v3348 = vpop.f32.mrb[0].mxu0
        %3349 = vmatprep.mubr.bf16.mxu0 0
        %3350 = vmatmul.mubr.bf16.gmra.mrb[0].mxu0 %v3281
        %v3351 = vpop.f32.mrb[0].mxu0
        %v3352 = vadd.f32 0.0, %v3351
        %v3353 = vpop.f32.mrb[0].mxu0
        %v3354 = vpop.f32.mrb[0].mxu0
        %v3355 = vadd.f32 0.0, %v3354
        %v3356 = vpop.f32.mrb[0].mxu0
        %3357 = vmatprep.mubr.bf16.mxu0 0
        %3358 = vmatmul.mubr.bf16.gmra.mrb[0].mxu0 %v3284
        %v3359 = vpop.f32.mrb[0].mxu0
        %v3360 = vadd.f32 0.0, %v3359
        %v3361 = vpop.f32.mrb[0].mxu0
        %v3362 = vpop.f32.mrb[0].mxu0
        %v3363 = vadd.f32 0.0, %v3362
        %v3364 = vpop.f32.mrb[0].mxu0
        %3365 = vmatprep.mubr.bf16.mxu0 0
        %3366 = vmatmul.mubr.bf16.gmra.mrb[0].mxu0 %v3287
        %v3367 = vpop.f32.mrb[0].mxu0
        %v3368 = vadd.f32 0.0, %v3367
        %v3369 = vpop.f32.mrb[0].mxu0
        %v3370 = vpop.f32.mrb[0].mxu0
        %v3371 = vadd.f32 0.0, %v3370
        %v3372 = vpop.f32.mrb[0].mxu0
        %3373 = vmatprep.mubr.bf16.mxu0 0
        %3374 = vmatmul.mubr.bf16.gmra.mrb[0].mxu0 %v3290
        %v3375 = vpop.f32.mrb[0].mxu0
        %v3376 = vadd.f32 0.0, %v3375
        %v3377 = vpop.f32.mrb[0].mxu0
        %v3378 = vpop.f32.mrb[0].mxu0
        %v3379 = vadd.f32 0.0, %v3378
        %v3380 = vpop.f32.mrb[0].mxu0
        %3381 = vmatprep.mubr.bf16.mxu0 0
        %3382 = vmatmul.mubr.bf16.gmra.mrb[0].mxu0 %v3293
        %v3383 = vpop.f32.mrb[0].mxu0
        %v3384 = vadd.f32 0.0, %v3383
        %v3385 = vpop.f32.mrb[0].mxu0
        %v3386 = vpop.f32.mrb[0].mxu0
        %v3387 = vadd.f32 0.0, %v3386
        %v3388 = vpop.f32.mrb[0].mxu0
        %3389 = vmatprep.mubr.bf16.mxu0 0
        %3390 = vmatmul.mubr.bf16.gmra.mrb[0].mxu0 %v3296
        %v3391 = vpop.f32.mrb[0].mxu0
        %v3392 = vadd.f32 0.0, %v3391
        %v3393 = vpop.f32.mrb[0].mxu0
        %v3394 = vpop.f32.mrb[0].mxu0
        %v3395 = vadd.f32 0.0, %v3394
        %v3396 = vpop.f32.mrb[0].mxu0
        %3397 = vdwg.mxu0
        %v3398 = vadd.f32 %v3225, %v3336
        %v3399 = vadd.f32 %v3226, %v3339
        %v3400 = vadd.f32 %v3227, %v3344
        %v3401 = vadd.f32 %v3228, %v3347
        %v3402 = vadd.f32 %v3229, %v3352
        %v3403 = vadd.f32 %v3230, %v3355
        %v3404 = vadd.f32 %v3231, %v3360
        %v3405 = vadd.f32 %v3232, %v3363
        %v3406 = vadd.f32 %v3233, %v3368
        %v3407 = vadd.f32 %v3234, %v3371
        %v3408 = vadd.f32 %v3235, %v3376
        %v3409 = vadd.f32 %v3236, %v3379
        %v3410 = vadd.f32 %v3237, %v3384
        %v3411 = vadd.f32 %v3238, %v3387
        %v3412 = vadd.f32 %v3239, %v3392
        %v3413 = vadd.f32 %v3240, %v3395
        %3414 = vst [vmem:[#allocation3] sm:$0xff] %v3398
        %3415 = vst [vmem:[#allocation3 + $0x8] sm:$0xff] %v3399
        %3416 = vst [vmem:[#allocation3 + $0x10] sm:$0xff] %v3400
        %3417 = vst [vmem:[#allocation3 + $0x18] sm:$0xff] %v3401
        %3418 = vst [vmem:[#allocation3 + $0x20] sm:$0xff] %v3402
        %3419 = vst [vmem:[#allocation3 + $0x28] sm:$0xff] %v3403
        %3420 = vst [vmem:[#allocation3 + $0x30] sm:$0xff] %v3404
        %3421 = vst [vmem:[#allocation3 + $0x38] sm:$0xff] %v3405
        %3422 = vst [vmem:[#allocation3 + $0x40] sm:$0xff] %v3406
        %3423 = vst [vmem:[#allocation3 + $0x48] sm:$0xff] %v3407
        %3424 = vst [vmem:[#allocation3 + $0x50] sm:$0xff] %v3408
        %3425 = vst [vmem:[#allocation3 + $0x58] sm:$0xff] %v3409
        %3426 = vst [vmem:[#allocation3 + $0x60] sm:$0xff] %v3410
        %3427 = vst [vmem:[#allocation3 + $0x68] sm:$0xff] %v3411
        %3428 = vst [vmem:[#allocation3 + $0x70] sm:$0xff] %v3412
        %3429 = vst [vmem:[#allocation3 + $0x78] sm:$0xff] %v3413
        %v3430 = vld [vmem:[%s2765] sm:$0xe]
        %v3431 = vld [vmem:[%s2765 + $0x4] sm:$0xf]
        %v3432 = vld [vmem:[%s2765 + $0x8] sm:$0x1]
        %v3433 = vld [vmem:[%s2765 + $0xc] sm:$0xe]
        %v3434 = vld [vmem:[%s2765 + $0x10] sm:$0xf]
        %v3435 = vld [vmem:[%s2765 + $0x14] sm:$0x1]
        %v3436 = vld [vmem:[%s2765 + $0x18] sm:$0xe]
        %v3437 = vld [vmem:[%s2765 + $0x1c] sm:$0xf]
        %v3438 = vld [vmem:[%s2765 + $0x20] sm:$0x1]
        %v3439 = vld [vmem:[%s2765 + $0x24] sm:$0xe]
        %v3440 = vld [vmem:[%s2765 + $0x28] sm:$0xf]
        %v3441 = vld [vmem:[%s2765 + $0x2c] sm:$0x1]
        %v3442 = vld [vmem:[%s2765 + $0x30] sm:$0xe]
        %v3443 = vld [vmem:[%s2765 + $0x34] sm:$0xf]
        %v3444 = vld [vmem:[%s2765 + $0x38] sm:$0x1]
        %v3445 = vld [vmem:[%s2765 + $0x3c] sm:$0xe]
        %v3446 = vld [vmem:[%s2765 + $0x40] sm:$0xf]
        %v3447 = vld [vmem:[%s2765 + $0x44] sm:$0x1]
        %v3448 = vld [vmem:[%s2765 + $0x48] sm:$0xe]
        %v3449 = vld [vmem:[%s2765 + $0x4c] sm:$0xf]
        %v3450 = vld [vmem:[%s2765 + $0x50] sm:$0x1]
        %v3451 = vld [vmem:[%s2765 + $0x54] sm:$0xe]
        %v3452 = vld [vmem:[%s2765 + $0x58] sm:$0xf]
        %v3453 = vld [vmem:[%s2765 + $0x5c] sm:$0x1]
        %v3478 = vrot.slane %v3430, 5
        %v3479 = vrot.slane %v3478, 4
        %v3480 = vrot.slane %v3431, 5
        %v3481 = vsel %vm1524, %v3479, %v3480
        %v3482 = vrot.slane %v3480, 4
        %v3483 = vrot.slane %v3432, 5
        %v3484 = vsel %vm1524, %v3482, %v3483
        %v3485 = vrot.slane %v3433, 5
        %v3486 = vrot.slane %v3485, 4
        %v3487 = vrot.slane %v3434, 5
        %v3488 = vsel %vm1524, %v3486, %v3487
        %v3489 = vrot.slane %v3487, 4
        %v3490 = vrot.slane %v3435, 5
        %v3491 = vsel %vm1524, %v3489, %v3490
        %v3492 = vrot.slane %v3436, 5
        %v3493 = vrot.slane %v3492, 4
        %v3494 = vrot.slane %v3437, 5
        %v3495 = vsel %vm1524, %v3493, %v3494
        %v3496 = vrot.slane %v3494, 4
        %v3497 = vrot.slane %v3438, 5
        %v3498 = vsel %vm1524, %v3496, %v3497
        %v3499 = vrot.slane %v3439, 5
        %v3500 = vrot.slane %v3499, 4
        %v3501 = vrot.slane %v3440, 5
        %v3502 = vsel %vm1524, %v3500, %v3501
        %v3503 = vrot.slane %v3501, 4
        %v3504 = vrot.slane %v3441, 5
        %v3505 = vsel %vm1524, %v3503, %v3504
        %v3506 = vrot.slane %v3442, 5
        %v3507 = vrot.slane %v3506, 4
        %v3508 = vrot.slane %v3443, 5
        %v3509 = vsel %vm1524, %v3507, %v3508
        %v3510 = vrot.slane %v3508, 4
        %v3511 = vrot.slane %v3444, 5
        %v3512 = vsel %vm1524, %v3510, %v3511
        %v3513 = vrot.slane %v3445, 5
        %v3514 = vrot.slane %v3513, 4
        %v3515 = vrot.slane %v3446, 5
        %v3516 = vsel %vm1524, %v3514, %v3515
        %v3517 = vrot.slane %v3515, 4
        %v3518 = vrot.slane %v3447, 5
        %v3519 = vsel %vm1524, %v3517, %v3518
        %v3520 = vrot.slane %v3448, 5
        %v3521 = vrot.slane %v3520, 4
        %v3522 = vrot.slane %v3449, 5
        %v3523 = vsel %vm1524, %v3521, %v3522
        %v3524 = vrot.slane %v3522, 4
        %v3525 = vrot.slane %v3450, 5
        %v3526 = vsel %vm1524, %v3524, %v3525
        %v3527 = vrot.slane %v3451, 5
        %v3528 = vrot.slane %v3527, 4
        %v3529 = vrot.slane %v3452, 5
        %v3530 = vsel %vm1524, %v3528, %v3529
        %v3531 = vrot.slane %v3529, 4
        %v3532 = vrot.slane %v3453, 5
        %v3533 = vsel %vm1524, %v3531, %v3532
        %v3534 = vld [vmem:[#allocation10 + $0x60] sm:$0xf]
        %v3535 = vld [vmem:[#allocation10 + $0x64] sm:$0xf]
        %v3536 = vld [vmem:[#allocation10 + $0x68] sm:$0xf]
        %v3537 = vld [vmem:[#allocation3] sm:$0xff]
        %v3538 = vld [vmem:[#allocation3 + $0x8] sm:$0xff]
        %v3539 = vld [vmem:[#allocation3 + $0x10] sm:$0xff]
        %v3540 = vld [vmem:[#allocation3 + $0x18] sm:$0xff]
        %v3541 = vld [vmem:[#allocation3 + $0x20] sm:$0xff]
        %v3542 = vld [vmem:[#allocation3 + $0x28] sm:$0xff]
        %v3543 = vld [vmem:[#allocation3 + $0x30] sm:$0xff]
        %v3544 = vld [vmem:[#allocation3 + $0x38] sm:$0xff]
        %v3545 = vld [vmem:[#allocation3 + $0x40] sm:$0xff]
        %v3546 = vld [vmem:[#allocation3 + $0x48] sm:$0xff]
        %v3547 = vld [vmem:[#allocation3 + $0x50] sm:$0xff]
        %v3548 = vld [vmem:[#allocation3 + $0x58] sm:$0xff]
        %v3549 = vld [vmem:[#allocation3 + $0x60] sm:$0xff]
        %v3550 = vld [vmem:[#allocation3 + $0x68] sm:$0xff]
        %v3551 = vld [vmem:[#allocation3 + $0x70] sm:$0xff]
        %v3552 = vld [vmem:[#allocation3 + $0x78] sm:$0xff]
        %v3553 = vunpack.c.l.b16 %v3481
        %v3554 = vunpack.c.l.b16 %v3484
        %v3555 = vunpack.c.l.b16 %v3488
        %v3556 = vunpack.c.l.b16 %v3491
        %v3557 = vunpack.c.l.b16 %v3495
        %v3558 = vunpack.c.l.b16 %v3498
        %v3559 = vunpack.c.l.b16 %v3502
        %v3560 = vunpack.c.l.b16 %v3505
        %v3561 = vunpack.c.l.b16 %v3509
        %v3562 = vunpack.c.l.b16 %v3512
        %v3563 = vunpack.c.l.b16 %v3516
        %v3564 = vunpack.c.l.b16 %v3519
        %v3565 = vunpack.c.l.b16 %v3523
        %v3566 = vunpack.c.l.b16 %v3526
        %v3567 = vunpack.c.l.b16 %v3530
        %v3568 = vunpack.c.l.b16 %v3533
        %v3569 = vpack.c.b16 %v3554, %v3553
        %v3570 = vpack.c.b16 %v3556, %v3555
        %v3571 = vpack.c.b16 %v3558, %v3557
        %v3572 = vpack.c.b16 %v3560, %v3559
        %v3573 = vpack.c.b16 %v3562, %v3561
        %v3574 = vpack.c.b16 %v3564, %v3563
        %v3575 = vpack.c.b16 %v3566, %v3565
        %v3576 = vpack.c.b16 %v3568, %v3567
        %v3580 = vunpack.c.l.b16 %v3534
        %v3581 = vunpack.c.l.b16 %v3535
        %v3582 = vunpack.c.l.b16 %v3536
        %v3583 = vpack.c.b16 %v3581, %v3580
        %v3584 = vpack.c.b16 %v3582, %v3582
        %v3587 = vsel %vm889, %v3569, 0
        %v3590 = vsel %vm889, %v3570, 0
        %v3593 = vsel %vm889, %v3571, 0
        %v3596 = vsel %vm889, %v3572, 0
        %v3599 = vsel %vm889, %v3573, 0
        %v3602 = vsel %vm889, %v3574, 0
        %v3605 = vsel %vm889, %v3575, 0
        %v3608 = vsel %vm889, %v3576, 0
        %v3611 = vsel %vm914, %v3584, 0
        %3613 = vmatprep.subr.bf16.mxu0 0
        %3614 = vmatpush1.bf16.msra.mxu0 %v3583
        %3615 = vmatprep.subr.bf16.mxu0 0
        %3616 = vmatpush1.bf16.msra.mxu0 %v3611
        %3617 = vmatprep.subr.bf16.mxu0 0
        %3618 = vmatpush1.bf16.msra.mxu0 0
        %3619 = vmatprep.subr.bf16.mxu0 0
        %3620 = vmatpush1.bf16.msra.mxu0 0
        %3621 = vmatprep.subr.bf16.mxu0 0
        %3622 = vmatpush1.bf16.msra.mxu0 0
        %3623 = vmatprep.subr.bf16.mxu0 0
        %3624 = vmatpush1.bf16.msra.mxu0 0
        %3625 = vmatprep.subr.bf16.mxu0 0
        %3626 = vmatpush1.bf16.msra.mxu0 0
        %3627 = vmatprep.subr.bf16.mxu0 0
        %3628 = vmatpush1.bf16.msra.mxu0 0
        %3629 = vmatprep.subr.bf16.mxu0 0
        %3630 = vmatpush1.bf16.msra.mxu0 0
        %3631 = vmatprep.subr.bf16.mxu0 0
        %3632 = vmatpush1.bf16.msra.mxu0 0
        %3633 = vmatprep.subr.bf16.mxu0 0
        %3634 = vmatpush1.bf16.msra.mxu0 0
        %3635 = vmatprep.subr.bf16.mxu0 0
        %3636 = vmatpush1.bf16.msra.mxu0 0
        %3637 = vmatprep.subr.bf16.mxu0 0
        %3638 = vmatpush1.bf16.msra.mxu0 0
        %3639 = vmatprep.subr.bf16.mxu0 0
        %3640 = vmatpush1.bf16.msra.mxu0 0
        %3641 = vmatprep.subr.bf16.mxu0 0
        %3642 = vmatpush1.bf16.msra.mxu0 0
        %3643 = vmatprep.subr.bf16.mxu0 0
        %3644 = vmatpush1.bf16.msra.mxu0 0
        %3645 = vmatprep.mubr.bf16.mxu0 0
        %3646 = vmatmul.mubr.bf16.gmra.mrb[0].mxu0 %v3587
        %v3647 = vpop.f32.mrb[0].mxu0
        %v3648 = vadd.f32 0.0, %v3647
        %v3649 = vpop.f32.mrb[0].mxu0
        %v3650 = vpop.f32.mrb[0].mxu0
        %v3651 = vadd.f32 0.0, %v3650
        %v3652 = vpop.f32.mrb[0].mxu0
        %3653 = vmatprep.mubr.bf16.mxu0 0
        %3654 = vmatmul.mubr.bf16.gmra.mrb[0].mxu0 %v3590
        %v3655 = vpop.f32.mrb[0].mxu0
        %v3656 = vadd.f32 0.0, %v3655
        %v3657 = vpop.f32.mrb[0].mxu0
        %v3658 = vpop.f32.mrb[0].mxu0
        %v3659 = vadd.f32 0.0, %v3658
        %v3660 = vpop.f32.mrb[0].mxu0
        %3661 = vmatprep.mubr.bf16.mxu0 0
        %3662 = vmatmul.mubr.bf16.gmra.mrb[0].mxu0 %v3593
        %v3663 = vpop.f32.mrb[0].mxu0
        %v3664 = vadd.f32 0.0, %v3663
        %v3665 = vpop.f32.mrb[0].mxu0
        %v3666 = vpop.f32.mrb[0].mxu0
        %v3667 = vadd.f32 0.0, %v3666
        %v3668 = vpop.f32.mrb[0].mxu0
        %3669 = vmatprep.mubr.bf16.mxu0 0
        %3670 = vmatmul.mubr.bf16.gmra.mrb[0].mxu0 %v3596
        %v3671 = vpop.f32.mrb[0].mxu0
        %v3672 = vadd.f32 0.0, %v3671
        %v3673 = vpop.f32.mrb[0].mxu0
        %v3674 = vpop.f32.mrb[0].mxu0
        %v3675 = vadd.f32 0.0, %v3674
        %v3676 = vpop.f32.mrb[0].mxu0
        %3677 = vmatprep.mubr.bf16.mxu0 0
        %3678 = vmatmul.mubr.bf16.gmra.mrb[0].mxu0 %v3599
        %v3679 = vpop.f32.mrb[0].mxu0
        %v3680 = vadd.f32 0.0, %v3679
        %v3681 = vpop.f32.mrb[0].mxu0
        %v3682 = vpop.f32.mrb[0].mxu0
        %v3683 = vadd.f32 0.0, %v3682
        %v3684 = vpop.f32.mrb[0].mxu0
        %3685 = vmatprep.mubr.bf16.mxu0 0
        %3686 = vmatmul.mubr.bf16.gmra.mrb[0].mxu0 %v3602
        %v3687 = vpop.f32.mrb[0].mxu0
        %v3688 = vadd.f32 0.0, %v3687
        %v3689 = vpop.f32.mrb[0].mxu0
        %v3690 = vpop.f32.mrb[0].mxu0
        %v3691 = vadd.f32 0.0, %v3690
        %v3692 = vpop.f32.mrb[0].mxu0
        %3693 = vmatprep.mubr.bf16.mxu0 0
        %3694 = vmatmul.mubr.bf16.gmra.mrb[0].mxu0 %v3605
        %v3695 = vpop.f32.mrb[0].mxu0
        %v3696 = vadd.f32 0.0, %v3695
        %v3697 = vpop.f32.mrb[0].mxu0
        %v3698 = vpop.f32.mrb[0].mxu0
        %v3699 = vadd.f32 0.0, %v3698
        %v3700 = vpop.f32.mrb[0].mxu0
        %3701 = vmatprep.mubr.bf16.mxu0 0
        %3702 = vmatmul.mubr.bf16.gmra.mrb[0].mxu0 %v3608
        %v3703 = vpop.f32.mrb[0].mxu0
        %v3704 = vadd.f32 0.0, %v3703
        %v3705 = vpop.f32.mrb[0].mxu0
        %v3706 = vpop.f32.mrb[0].mxu0
        %v3707 = vadd.f32 0.0, %v3706
        %v3708 = vpop.f32.mrb[0].mxu0
        %3709 = vdwg.mxu0
        %v3710 = vadd.f32 %v3537, %v3648
        %v3711 = vadd.f32 %v3538, %v3651
        %v3712 = vadd.f32 %v3539, %v3656
        %v3713 = vadd.f32 %v3540, %v3659
        %v3714 = vadd.f32 %v3541, %v3664
        %v3715 = vadd.f32 %v3542, %v3667
        %v3716 = vadd.f32 %v3543, %v3672
        %v3717 = vadd.f32 %v3544, %v3675
        %v3718 = vadd.f32 %v3545, %v3680
        %v3719 = vadd.f32 %v3546, %v3683
        %v3720 = vadd.f32 %v3547, %v3688
        %v3721 = vadd.f32 %v3548, %v3691
        %v3722 = vadd.f32 %v3549, %v3696
        %v3723 = vadd.f32 %v3550, %v3699
        %v3724 = vadd.f32 %v3551, %v3704
        %v3725 = vadd.f32 %v3552, %v3707
        %3726 = vst [vmem:[#allocation3] sm:$0xff] %v3710
        %3727 = vst [vmem:[#allocation3 + $0x8] sm:$0xff] %v3711
        %3728 = vst [vmem:[#allocation3 + $0x10] sm:$0xff] %v3712
        %3729 = vst [vmem:[#allocation3 + $0x18] sm:$0xff] %v3713
        %3730 = vst [vmem:[#allocation3 + $0x20] sm:$0xff] %v3714
        %3731 = vst [vmem:[#allocation3 + $0x28] sm:$0xff] %v3715
        %3732 = vst [vmem:[#allocation3 + $0x30] sm:$0xff] %v3716
        %3733 = vst [vmem:[#allocation3 + $0x38] sm:$0xff] %v3717
        %3734 = vst [vmem:[#allocation3 + $0x40] sm:$0xff] %v3718
        %3735 = vst [vmem:[#allocation3 + $0x48] sm:$0xff] %v3719
        %3736 = vst [vmem:[#allocation3 + $0x50] sm:$0xff] %v3720
        %3737 = vst [vmem:[#allocation3 + $0x58] sm:$0xff] %v3721
        %3738 = vst [vmem:[#allocation3 + $0x60] sm:$0xff] %v3722
        %3739 = vst [vmem:[#allocation3 + $0x68] sm:$0xff] %v3723
        %3740 = vst [vmem:[#allocation3 + $0x70] sm:$0xff] %v3724
        %3741 = vst [vmem:[#allocation3 + $0x78] sm:$0xff] %v3725
        %v3742 = vld [vmem:[#allocation3] sm:$0xff]
        %v3743 = vld [vmem:[#allocation3 + $0x8] sm:$0xff]
        %v3744 = vld [vmem:[#allocation3 + $0x10] sm:$0xff]
        %v3745 = vld [vmem:[#allocation3 + $0x18] sm:$0xff]
        %v3746 = vld [vmem:[#allocation3 + $0x20] sm:$0xff]
        %v3747 = vld [vmem:[#allocation3 + $0x28] sm:$0xff]
        %v3748 = vld [vmem:[#allocation3 + $0x30] sm:$0xff]
        %v3749 = vld [vmem:[#allocation3 + $0x38] sm:$0xff]
        %v3750 = vld [vmem:[#allocation3 + $0x40] sm:$0xff]
        %v3751 = vld [vmem:[#allocation3 + $0x48] sm:$0xff]
        %v3752 = vld [vmem:[#allocation3 + $0x50] sm:$0xff]
        %v3753 = vld [vmem:[#allocation3 + $0x58] sm:$0xff]
        %v3754 = vld [vmem:[#allocation3 + $0x60] sm:$0xff]
        %v3755 = vld [vmem:[#allocation3 + $0x68] sm:$0xff]
        %v3756 = vld [vmem:[#allocation3 + $0x70] sm:$0xff]
        %v3757 = vld [vmem:[#allocation3 + $0x78] sm:$0xff]
        %v3758 = vld [vmem:[%s4] sm:$0x1]
        %v3760 = vlaneseq
        %v3761 = vshrl.u32 %v3760, 7
        %v3762 = vsub.s32 0, %v3761
        %v3763 = vrot.slane %v3758, %v3762
        %v3765 = vadd.f32 %v3742, %v3763
        %v3766 = vadd.f32 %v3743, %v3763
        %v3767 = vadd.f32 %v3744, %v3763
        %v3768 = vadd.f32 %v3745, %v3763
        %v3769 = vadd.f32 %v3746, %v3763
        %v3770 = vadd.f32 %v3747, %v3763
        %v3771 = vadd.f32 %v3748, %v3763
        %v3772 = vadd.f32 %v3749, %v3763
        %v3773 = vadd.f32 %v3750, %v3763
        %v3774 = vadd.f32 %v3751, %v3763
        %v3775 = vadd.f32 %v3752, %v3763
        %v3776 = vadd.f32 %v3753, %v3763
        %v3777 = vadd.f32 %v3754, %v3763
        %v3778 = vadd.f32 %v3755, %v3763
        %v3779 = vadd.f32 %v3756, %v3763
        %v3780 = vadd.f32 %v3757, %v3763
        %v3781 = vmax.f32 %v3765, 0.0
        %v3782 = vmax.f32 %v3766, 0.0
        %v3783 = vmax.f32 %v3767, 0.0
        %v3784 = vmax.f32 %v3768, 0.0
        %v3785 = vmax.f32 %v3769, 0.0
        %v3786 = vmax.f32 %v3770, 0.0
        %v3787 = vmax.f32 %v3771, 0.0
        %v3788 = vmax.f32 %v3772, 0.0
        %v3789 = vmax.f32 %v3773, 0.0
        %v3790 = vmax.f32 %v3774, 0.0
        %v3791 = vmax.f32 %v3775, 0.0
        %v3792 = vmax.f32 %v3776, 0.0
        %v3793 = vmax.f32 %v3777, 0.0
        %v3794 = vmax.f32 %v3778, 0.0
        %v3795 = vmax.f32 %v3779, 0.0
        %v3796 = vmax.f32 %v3780, 0.0
        %vm3797 = vcmask 326656
        %3798 = vst.msk [vmem:[%s385] sm:$0xff] %vm3797, %v3781
        %3799 = vst.msk [vmem:[%s385 + $0x8] sm:$0xff] %vm3797, %v3782
        %3800 = vst.msk [vmem:[%s385 + $0x10] sm:$0xff] %vm3797, %v3783
        %3801 = vst.msk [vmem:[%s385 + $0x18] sm:$0xff] %vm3797, %v3784
        %3802 = vst.msk [vmem:[%s385 + $0x20] sm:$0xff] %vm3797, %v3785
        %3803 = vst.msk [vmem:[%s385 + $0x28] sm:$0xff] %vm3797, %v3786
        %3804 = vst.msk [vmem:[%s385 + $0x30] sm:$0xff] %vm3797, %v3787
        %3805 = vst.msk [vmem:[%s385 + $0x38] sm:$0xff] %vm3797, %v3788
        %3806 = vst.msk [vmem:[%s385 + $0x40] sm:$0xff] %vm3797, %v3789
        %3807 = vst.msk [vmem:[%s385 + $0x48] sm:$0xff] %vm3797, %v3790
        %3808 = vst.msk [vmem:[%s385 + $0x50] sm:$0xff] %vm3797, %v3791
        %3809 = vst.msk [vmem:[%s385 + $0x58] sm:$0xff] %vm3797, %v3792
        %3810 = vst.msk [vmem:[%s385 + $0x60] sm:$0xff] %vm3797, %v3793
        %3811 = vst.msk [vmem:[%s385 + $0x68] sm:$0xff] %vm3797, %v3794
        %3812 = vst.msk [vmem:[%s385 + $0x70] sm:$0xff] %vm3797, %v3795
        %3813 = vst.msk [vmem:[%s385 + $0x78] sm:$0xff] %vm3797, %v3796
        %s3814 = sand.u32 %s190, 1
        %s3815 = scalar_lea.sflag [#allocation6], %s3814
        %s3816 = sand.u32 %s190, 1
        %s3817 = smul.addr %s3816, 128
        %s3818 = scalar_lea.vmem [#allocation12], %s3817
        // Predicated region
        $region73: #{tpu_custom_call.1} parent=39 // pred_check
          %p3819 = pneg %p200
        $region74: #{tpu_custom_call.1} parent=39 // pred_check_branch
          %3821 = sbr.rel (%p3819) target = $region76
        $region75: #{tpu_custom_call.1} parent=39 // pred_region
          %s3822 = smul.u32 8, %s31
          %s3824 = ssub.s32 2048, 2048
          %3825 = vsyncadd %s3815, %s3824
          %s3826 = smul.addr %s3822, 2
          %s3827 = smul.addr %s30, 16
          %s3828 = sadd.s32 %s3826, %s3827
          %s3829 = smul.addr %s3828, 128
          %s3830 = scalar_lea.hbm %s5, %s3829
          %s3831 = sshll.u32 %s3818, 4
          %s3832 = int_to_ptr.vmem [resolvable:$true] %s3831
          %3837 = dma.vmem_to_hbm [thread:$0]  %s3832, 2048, %s3830, %s3815, 128, 128, 8
        $region76: #{tpu_custom_call.1} parent=39 // pred_fallthru
          _
      $region40: #{tpu_custom_call.1} parent=5 // pred_fallthru
        _
      %p3838 = scmp.le.s32.totalorder 2, %s21
      // Predicated region
      $region77: #{tpu_custom_call.1} parent=5 // pred_check
        %p3839 = pneg %p3838
      $region78: #{tpu_custom_call.1} parent=5 // pred_check_branch
        %3841 = sbr.rel (%p3839) target = $region80
      $region79: #{tpu_custom_call.1} parent=5 // pred_region
        %s3842 = ssub.s32 %s21, 2
        // Predicated region
        $region81: #{tpu_custom_call.1} parent=79 // pred_check
          %p3843 = pneg %p206
        $region82: #{tpu_custom_call.1} parent=79 // pred_check_branch
          %3845 = sbr.rel (%p3843) target = $region84
        $region83: #{tpu_custom_call.1} parent=79 // pred_region
          %s3846 = sand.u32 %s191, 1
          %s3847 = scalar_lea.sflag [#allocation6], %s3846
          %s3848 = sand.u32 %s191, 1
          %s3849 = smul.addr %s3848, 128
          %s3850 = scalar_lea.vmem [#allocation12], %s3849
          %3851 = dma.done %s3847, 2048
        $region84: #{tpu_custom_call.1} parent=79 // pred_fallthru
          _
      $region80: #{tpu_custom_call.1} parent=5 // pred_fallthru
        _
    $region6: #{tpu_custom_call.1} parent=1 // loop_footer
      %s25 = sadd.s32 1, %s21
    $region7: #{tpu_custom_call.1} parent=1 // loop_footer_branch
      %20 = sbr.rel target = $region3
    $region8: #{tpu_custom_call.1} parent=1 // loop_exit
      _
    %3852 = vsyncpa [#allocation5], 1
    %s3853 = scalar_lea.sflag [#allocation5], 1
    %3854 = vsyncpa %s3853, 1
    %3855 = vsyncpa [#allocation8], 1
    %s3856 = scalar_lea.sflag [#allocation8], 1
    %3857 = vsyncpa %s3856, 1
    %3858 = vsyncpa [#allocation11], 1
    %3859 = vsyncpa [#allocation6], 1
    %s3860 = scalar_lea.sflag [#allocation6], 1
    %3861 = vsyncpa %s3860, 1

</llo_original>
